<compile_context>
chip_gen: v6e
topology: v6e:2x2x1
jax: 0.10.0
libtpu: 0.0.40
codegen_flags: <defaults>
</compile_context>

<pallas_src>
import jax
import jax.numpy as jnp
from jax.experimental import pallas as pl
from jax.experimental.pallas import tpu as pltpu


# ----------------------------------------------------------------------------
# In-kernel building blocks (operate on VMEM-resident traced values)
# ----------------------------------------------------------------------------

def _conv_bn_act(x, w, b, *, stride, padding, relu):
    """Conv1d (channels-last, no bias) with folded eval-mode BN (+ optional ReLU).

    x: [B, L, C_in]  float32 value
    w: [K, C_in, C_out] bfloat16 value (BN scale already folded in)
    b: [1, C_out]    float32 value (folded BN shift)
    returns [B, L_out, C_out] float32
    """
    B, L, Cin = x.shape
    K, _, Cout = w.shape
    if padding:
        z = jnp.zeros((B, padding, Cin), x.dtype)
        x = jnp.concatenate([z, x, z], axis=1)
    Lp = L + 2 * padding
    Ld = Lp - K + 1                                   # dense (stride-1) output length
    # Batch folded into the MXU M dimension; one matmul per tap, f32 accumulator.
    acc = None
    for k in range(K):                                # static unroll over taps
        xs = x[:, k:k + Ld, :].reshape(B * Ld, Cin).astype(w.dtype)
        d = jnp.dot(xs, w[k], preferred_element_type=jnp.float32)
        acc = d if acc is None else acc + d
    y = acc + b                                       # folded BN shift (zero with init stats)
    if relu:
        y = jnp.maximum(y, 0.0)
    y = y.reshape(B, Ld, Cout)
    if stride > 1:                                    # subsample dense rows (no strided loads)
        L_out = (Lp - K) // stride + 1
        need = L_out * stride
        if need > Ld:
            y = jnp.concatenate(
                [y, jnp.zeros((B, need - Ld, Cout), y.dtype)], axis=1)
        y = y.reshape(B, L_out, stride, Cout)[:, :, 0, :]
    return y


def _maxpool(x, *, kernel, stride, padding):
    """MaxPool1d (channels-last) on a VMEM-resident value."""
    B, L, C = x.shape
    neg = jnp.asarray(-1e30, x.dtype)                 # -inf-like pad (input is post-ReLU)
    if padding:
        z = jnp.full((B, padding, C), neg, x.dtype)
        x = jnp.concatenate([z, x, z], axis=1)
    Lp = L + 2 * padding
    Ld = Lp - kernel + 1
    r = x[:, 0:Ld, :]
    for k in range(1, kernel):
        r = jnp.maximum(r, x[:, k:k + Ld, :])
    if stride > 1:
        L_out = (Lp - kernel) // stride + 1
        need = L_out * stride
        if need > Ld:
            r = jnp.concatenate([r, jnp.full((B, need - Ld, C), neg, r.dtype)], axis=1)
        r = r.reshape(B, L_out, stride, C)[:, :, 0, :]
    return r


# ----------------------------------------------------------------------------
# Fused whole-network kernel
# ----------------------------------------------------------------------------

def _make_fused_kernel(block_strides):
    n_blocks = len(block_strides)

    def kernel(*refs):
        x_ref = refs[0]
        head_w = refs[1][...]
        head_b = refs[2][...]
        blk = [r[...] for r in refs[3:3 + 8 * n_blocks]]
        fc_w = refs[3 + 8 * n_blocks][...]
        fc_b = refs[4 + 8 * n_blocks][...]
        o_ref = refs[5 + 8 * n_blocks]

        h = x_ref[...]                                                  # [TB, L, C0] f32
        # --- head: conv k7 s2 p3 -> BN -> ReLU -> maxpool k3 s2 p1 ---
        h = _conv_bn_act(h, head_w, head_b, stride=2, padding=3, relu=True)
        h = _maxpool(h, kernel=3, stride=2, padding=1)
        # --- bottleneck blocks (intermediates never leave VMEM) ---
        for i, s in enumerate(block_strides):
            wd, bd, w1, b1, w2, b2, w3, b3 = blk[8 * i: 8 * i + 8]
            identity = _conv_bn_act(h, wd, bd, stride=s, padding=0, relu=False)
            out = _conv_bn_act(h, w1, b1, stride=1, padding=0, relu=True)
            out = _conv_bn_act(out, w2, b2, stride=s, padding=1, relu=True)
            out = _conv_bn_act(out, w3, b3, stride=1, padding=0, relu=False)
            h = jnp.maximum(out + identity, 0.0)
        # --- avgpool (AdaptiveAvgPool1d((1,)) == mean over L) -> flatten -> fc ---
        pooled = jnp.mean(h, axis=1)                                    # [TB, C_last]
        o_ref[...] = (jnp.dot(pooled, fc_w, preferred_element_type=jnp.float32)
                      + fc_b)

    return kernel


def _const_index_map(ndim):
    zeros = (0,) * ndim
    return lambda i: zeros


def fused_forward(h, params):
    """h: [B, L, C0] float32 (tokens ++ projected numericals, channels-last)."""
    B, L, C0 = h.shape
    out_dim = params['fc_w'].shape[1]
    block_strides = tuple(blk['stride'] for blk in params['blocks'])

    args = [h, params['head_w'], params['head_b']]
    for blk in params['blocks']:
        args += [blk['wd'], blk['bd'], blk['w1'], blk['b1'],
                 blk['w2'], blk['b2'], blk['w3'], blk['b3']]
    args += [params['fc_w'], params['fc_b']]

    # Grid only over batch tiles; weights use constant index maps (loaded once).
    TB = min(B, 8)                            # fold up to 8 batch rows into matmul M
    grid = (pl.cdiv(B, TB),)

    in_specs = [pl.BlockSpec((TB, L, C0), lambda i: (i, 0, 0))]
    for a in args[1:]:
        in_specs.append(pl.BlockSpec(a.shape, _const_index_map(a.ndim)))
    out_specs = pl.BlockSpec((TB, out_dim), lambda i: (i, 0))

    return pl.pallas_call(
        _make_fused_kernel(block_strides),
        out_shape=jax.ShapeDtypeStruct((B, out_dim), jnp.float32),
        grid=grid,
        in_specs=in_specs,
        out_specs=out_specs,
        compiler_params=pltpu.CompilerParams(dimension_semantics=("parallel",)),
    )(*args)


# ----------------------------------------------------------------------------
# Parameter construction (mirrors the module's __init__; BN folded, bf16 weights)
# ----------------------------------------------------------------------------

def init_params(key, *, n_tf, n_nf, nD, dict_leng, out_dim, layer_settings):
    keys = iter(jax.random.split(key, 128))
    nxt = lambda: next(keys)
    bn_eps = 1e-5
    bn_scale = 1.0 / (1.0 + bn_eps) ** 0.5    # eval BN: weight=1, bias=0, mean=0, var=1

    def conv_bn(c_in, c_out, K):
        # kaiming_normal_(mode='fan_out', nonlinearity='relu'); torch layout [C_out, C_in, K]
        std = (2.0 / (c_out * K)) ** 0.5
        w = std * jax.random.normal(nxt(), (c_out, c_in, K), jnp.float32)
        w = jnp.transpose(w, (2, 1, 0))                       # -> [K, C_in, C_out]
        w = (w * bn_scale).astype(jnp.bfloat16)               # fold BN scale; bf16 MXU operands
        b = jnp.zeros((1, c_out), jnp.float32)                # folded BN shift (exactly 0 here)
        return w, b

    def linear(d_in, d_out):
        bound = 1.0 / (d_in ** 0.5)
        w = jax.random.uniform(nxt(), (d_out, d_in), jnp.float32, -bound, bound)
        b = jax.random.uniform(nxt(), (d_out,), jnp.float32, -bound, bound)
        return jnp.transpose(w), b.reshape(1, d_out)

    p = {}
    p['emb'] = jax.random.normal(nxt(), (dict_leng, nD), jnp.float32)       # nn.Embedding
    p['fc_head_w'], p['fc_head_b'] = linear(n_nf, n_nf * n_tf)              # fc_head

    inplanes = 64
    p['head_w'], p['head_b'] = conv_bn(n_nf + nD, inplanes, 7)              # head conv1 k7 s2 p3 + bn1

    expansion = 4
    blocks = []
    for (planes, n_blocks, stride) in layer_settings:
        for _ in range(n_blocks):                  # every block in a layer gets the layer stride
            width = planes
            blk = {'stride': stride}
            blk['w1'], blk['b1'] = conv_bn(inplanes, width, 1)
            blk['w2'], blk['b2'] = conv_bn(width, width, 3)
            blk['w3'], blk['b3'] = conv_bn(width, planes * expansion, 1)
            blk['wd'], blk['bd'] = conv_bn(inplanes, planes * expansion, 1)  # downsample (always built)
            blocks.append(blk)
            inplanes = planes * expansion
    p['blocks'] = blocks
    p['fc_w'], p['fc_b'] = linear(inplanes, out_dim)                        # out_modules['fc']
    return p


# ----------------------------------------------------------------------------
# Forward pass (tiny glue in plain JAX + one fused Pallas kernel)
# ----------------------------------------------------------------------------

def forward(params, x, *, n_tf, n_nf):
    # x: [B, n_tf + n_nf]
    B = x.shape[0]
    xt = jnp.round(x[:, :n_tf]).astype(jnp.int32)          # torch.round(...).to(long)
    xt = jnp.clip(xt, 0, params['emb'].shape[0] - 1)       # guard (torch would error OOB)
    xn = x[:, n_tf:].astype(jnp.float32)

    # TODO(synk): nn.Embedding gather + fc_head stay in plain JAX (data-dependent
    # gather / tiny GEMM; XLA fuses them and a Pallas kernel would only add launch cost).
    tokens = jnp.take(params['emb'], xt, axis=0)            # [B, n_tf, nD]
    xn_p = (xn @ params['fc_head_w'] + params['fc_head_b']).reshape(B, n_tf, n_nf)

    # cat(..., axis=2).transpose(1,2) in NCL == channels-last [B, L, C] here.
    h = jnp.concatenate([tokens, xn_p], axis=2)             # [B, L=n_tf, C=nD+n_nf]
    return fused_forward(h, params)


# ----------------------------------------------------------------------------

if __name__ == "__main__":
    # Small configuration consistent with the module:
    n_tf, n_nf, nD = 16, 8, 8          # token features, numerical features, emb dim
    dict_leng, out_dim = 32, 5
    # (planes, n_blocks, stride) per intermediate layer
    layer_settings = [(16, 2, 1), (32, 1, 2)]
    B = 2

    key = jax.random.PRNGKey(0)
    kp, kx1, kx2 = jax.random.split(key, 3)
    params = init_params(kp, n_tf=n_tf, n_nf=n_nf, nD=nD, dict_leng=dict_leng,
                         out_dim=out_dim, layer_settings=layer_settings)

    # Input: first n_tf columns are (float-encoded) token ids, rest numerical.
    tok = jax.random.uniform(kx1, (B, n_tf), jnp.float32, 0.0, float(dict_leng - 1))
    num = jax.random.normal(kx2, (B, n_nf), jnp.float32)
    x = jnp.concatenate([tok, num], axis=1)                 # [B, n_tf + n_nf] = [2, 24]

    y = forward(params, x, n_tf=n_tf, n_nf=n_nf)
    jax.block_until_ready(y)
    assert y.shape == (B, out_dim), y.shape
    print("KERNEL_OK")
</pallas_src>

<mosaic_0001>
module attributes {stable_mosaic.version = 11 : i64} {
  func.func @kernel(%arg0: i32, %arg1: memref<2x16x16xf32, #tpu.memory_space<vmem>>, %arg2: memref<7x16x64xbf16, #tpu.memory_space<vmem>>, %arg3: memref<1x64xf32, #tpu.memory_space<vmem>>, %arg4: memref<1x64x64xbf16, #tpu.memory_space<vmem>>, %arg5: memref<1x64xf32, #tpu.memory_space<vmem>>, %arg6: memref<1x64x16xbf16, #tpu.memory_space<vmem>>, %arg7: memref<1x16xf32, #tpu.memory_space<vmem>>, %arg8: memref<3x16x16xbf16, #tpu.memory_space<vmem>>, %arg9: memref<1x16xf32, #tpu.memory_space<vmem>>, %arg10: memref<1x16x64xbf16, #tpu.memory_space<vmem>>, %arg11: memref<1x64xf32, #tpu.memory_space<vmem>>, %arg12: memref<1x64x64xbf16, #tpu.memory_space<vmem>>, %arg13: memref<1x64xf32, #tpu.memory_space<vmem>>, %arg14: memref<1x64x16xbf16, #tpu.memory_space<vmem>>, %arg15: memref<1x16xf32, #tpu.memory_space<vmem>>, %arg16: memref<3x16x16xbf16, #tpu.memory_space<vmem>>, %arg17: memref<1x16xf32, #tpu.memory_space<vmem>>, %arg18: memref<1x16x64xbf16, #tpu.memory_space<vmem>>, %arg19: memref<1x64xf32, #tpu.memory_space<vmem>>, %arg20: memref<1x64x128xbf16, #tpu.memory_space<vmem>>, %arg21: memref<1x128xf32, #tpu.memory_space<vmem>>, %arg22: memref<1x64x32xbf16, #tpu.memory_space<vmem>>, %arg23: memref<1x32xf32, #tpu.memory_space<vmem>>, %arg24: memref<3x32x32xbf16, #tpu.memory_space<vmem>>, %arg25: memref<1x32xf32, #tpu.memory_space<vmem>>, %arg26: memref<1x32x128xbf16, #tpu.memory_space<vmem>>, %arg27: memref<1x128xf32, #tpu.memory_space<vmem>>, %arg28: memref<128x5xf32, #tpu.memory_space<vmem>>, %arg29: memref<1x5xf32, #tpu.memory_space<vmem>>, %arg30: memref<2x5xf32, #tpu.memory_space<vmem>>) attributes {dimension_semantics = [#tpu.dimension_semantics<parallel>], iteration_bounds = array<i64: 1>, scalar_prefetch = 0 : i64, scratch_operands = 0 : i64, tpu.core_type = #tpu.core_type<tc>, window_params = [{transform_indices = @transform_0, window_bounds = array<i64: 2, 16, 16>}, {pipeline_mode = #tpu.pipeline_mode<synchronous>, transform_indices = @transform_1, window_bounds = array<i64: 7, 16, 64>}, {pipeline_mode = #tpu.pipeline_mode<synchronous>, transform_indices = @transform_2, window_bounds = array<i64: 1, 64>}, {pipeline_mode = #tpu.pipeline_mode<synchronous>, transform_indices = @transform_3, window_bounds = array<i64: 1, 64, 64>}, {pipeline_mode = #tpu.pipeline_mode<synchronous>, transform_indices = @transform_4, window_bounds = array<i64: 1, 64>}, {pipeline_mode = #tpu.pipeline_mode<synchronous>, transform_indices = @transform_5, window_bounds = array<i64: 1, 64, 16>}, {pipeline_mode = #tpu.pipeline_mode<synchronous>, transform_indices = @transform_6, window_bounds = array<i64: 1, 16>}, {pipeline_mode = #tpu.pipeline_mode<synchronous>, transform_indices = @transform_7, window_bounds = array<i64: 3, 16, 16>}, {pipeline_mode = #tpu.pipeline_mode<synchronous>, transform_indices = @transform_8, window_bounds = array<i64: 1, 16>}, {pipeline_mode = #tpu.pipeline_mode<synchronous>, transform_indices = @transform_9, window_bounds = array<i64: 1, 16, 64>}, {pipeline_mode = #tpu.pipeline_mode<synchronous>, transform_indices = @transform_10, window_bounds = array<i64: 1, 64>}, {pipeline_mode = #tpu.pipeline_mode<synchronous>, transform_indices = @transform_11, window_bounds = array<i64: 1, 64, 64>}, {pipeline_mode = #tpu.pipeline_mode<synchronous>, transform_indices = @transform_12, window_bounds = array<i64: 1, 64>}, {pipeline_mode = #tpu.pipeline_mode<synchronous>, transform_indices = @transform_13, window_bounds = array<i64: 1, 64, 16>}, {pipeline_mode = #tpu.pipeline_mode<synchronous>, transform_indices = @transform_14, window_bounds = array<i64: 1, 16>}, {pipeline_mode = #tpu.pipeline_mode<synchronous>, transform_indices = @transform_15, window_bounds = array<i64: 3, 16, 16>}, {pipeline_mode = #tpu.pipeline_mode<synchronous>, transform_indices = @transform_16, window_bounds = array<i64: 1, 16>}, {pipeline_mode = #tpu.pipeline_mode<synchronous>, transform_indices = @transform_17, window_bounds = array<i64: 1, 16, 64>}, {pipeline_mode = #tpu.pipeline_mode<synchronous>, transform_indices = @transform_18, window_bounds = array<i64: 1, 64>}, {pipeline_mode = #tpu.pipeline_mode<synchronous>, transform_indices = @transform_19, window_bounds = array<i64: 1, 64, 128>}, {pipeline_mode = #tpu.pipeline_mode<synchronous>, transform_indices = @transform_20, window_bounds = array<i64: 1, 128>}, {pipeline_mode = #tpu.pipeline_mode<synchronous>, transform_indices = @transform_21, window_bounds = array<i64: 1, 64, 32>}, {pipeline_mode = #tpu.pipeline_mode<synchronous>, transform_indices = @transform_22, window_bounds = array<i64: 1, 32>}, {pipeline_mode = #tpu.pipeline_mode<synchronous>, transform_indices = @transform_23, window_bounds = array<i64: 3, 32, 32>}, {pipeline_mode = #tpu.pipeline_mode<synchronous>, transform_indices = @transform_24, window_bounds = array<i64: 1, 32>}, {pipeline_mode = #tpu.pipeline_mode<synchronous>, transform_indices = @transform_25, window_bounds = array<i64: 1, 32, 128>}, {pipeline_mode = #tpu.pipeline_mode<synchronous>, transform_indices = @transform_26, window_bounds = array<i64: 1, 128>}, {pipeline_mode = #tpu.pipeline_mode<synchronous>, transform_indices = @transform_27, window_bounds = array<i64: 128, 5>}, {pipeline_mode = #tpu.pipeline_mode<synchronous>, transform_indices = @transform_28, window_bounds = array<i64: 1, 5>}, {transform_indices = @transform_29, window_bounds = array<i64: 2, 5>}]} {
    %c0 = arith.constant 0 : index
    %c0_0 = arith.constant 0 : index
    %c0_1 = arith.constant 0 : index
    %0 = vector.load %arg2[%c0, %c0_0, %c0_1] : memref<7x16x64xbf16, #tpu.memory_space<vmem>>, vector<7x16x64xbf16>
    %c0_2 = arith.constant 0 : index
    %c0_3 = arith.constant 0 : index
    %1 = vector.load %arg3[%c0_2, %c0_3] : memref<1x64xf32, #tpu.memory_space<vmem>>, vector<1x64xf32>
    %c0_4 = arith.constant 0 : index
    %c0_5 = arith.constant 0 : index
    %c0_6 = arith.constant 0 : index
    %2 = vector.load %arg4[%c0_4, %c0_5, %c0_6] : memref<1x64x64xbf16, #tpu.memory_space<vmem>>, vector<1x64x64xbf16>
    %c0_7 = arith.constant 0 : index
    %c0_8 = arith.constant 0 : index
    %3 = vector.load %arg5[%c0_7, %c0_8] : memref<1x64xf32, #tpu.memory_space<vmem>>, vector<1x64xf32>
    %c0_9 = arith.constant 0 : index
    %c0_10 = arith.constant 0 : index
    %c0_11 = arith.constant 0 : index
    %4 = vector.load %arg6[%c0_9, %c0_10, %c0_11] : memref<1x64x16xbf16, #tpu.memory_space<vmem>>, vector<1x64x16xbf16>
    %c0_12 = arith.constant 0 : index
    %c0_13 = arith.constant 0 : index
    %5 = vector.load %arg7[%c0_12, %c0_13] : memref<1x16xf32, #tpu.memory_space<vmem>>, vector<1x16xf32>
    %c0_14 = arith.constant 0 : index
    %c0_15 = arith.constant 0 : index
    %c0_16 = arith.constant 0 : index
    %6 = vector.load %arg8[%c0_14, %c0_15, %c0_16] : memref<3x16x16xbf16, #tpu.memory_space<vmem>>, vector<3x16x16xbf16>
    %c0_17 = arith.constant 0 : index
    %c0_18 = arith.constant 0 : index
    %7 = vector.load %arg9[%c0_17, %c0_18] : memref<1x16xf32, #tpu.memory_space<vmem>>, vector<1x16xf32>
    %c0_19 = arith.constant 0 : index
    %c0_20 = arith.constant 0 : index
    %c0_21 = arith.constant 0 : index
    %8 = vector.load %arg10[%c0_19, %c0_20, %c0_21] : memref<1x16x64xbf16, #tpu.memory_space<vmem>>, vector<1x16x64xbf16>
    %c0_22 = arith.constant 0 : index
    %c0_23 = arith.constant 0 : index
    %9 = vector.load %arg11[%c0_22, %c0_23] : memref<1x64xf32, #tpu.memory_space<vmem>>, vector<1x64xf32>
    %c0_24 = arith.constant 0 : index
    %c0_25 = arith.constant 0 : index
    %c0_26 = arith.constant 0 : index
    %10 = vector.load %arg12[%c0_24, %c0_25, %c0_26] : memref<1x64x64xbf16, #tpu.memory_space<vmem>>, vector<1x64x64xbf16>
    %c0_27 = arith.constant 0 : index
    %c0_28 = arith.constant 0 : index
    %11 = vector.load %arg13[%c0_27, %c0_28] : memref<1x64xf32, #tpu.memory_space<vmem>>, vector<1x64xf32>
    %c0_29 = arith.constant 0 : index
    %c0_30 = arith.constant 0 : index
    %c0_31 = arith.constant 0 : index
    %12 = vector.load %arg14[%c0_29, %c0_30, %c0_31] : memref<1x64x16xbf16, #tpu.memory_space<vmem>>, vector<1x64x16xbf16>
    %c0_32 = arith.constant 0 : index
    %c0_33 = arith.constant 0 : index
    %13 = vector.load %arg15[%c0_32, %c0_33] : memref<1x16xf32, #tpu.memory_space<vmem>>, vector<1x16xf32>
    %c0_34 = arith.constant 0 : index
    %c0_35 = arith.constant 0 : index
    %c0_36 = arith.constant 0 : index
    %14 = vector.load %arg16[%c0_34, %c0_35, %c0_36] : memref<3x16x16xbf16, #tpu.memory_space<vmem>>, vector<3x16x16xbf16>
    %c0_37 = arith.constant 0 : index
    %c0_38 = arith.constant 0 : index
    %15 = vector.load %arg17[%c0_37, %c0_38] : memref<1x16xf32, #tpu.memory_space<vmem>>, vector<1x16xf32>
    %c0_39 = arith.constant 0 : index
    %c0_40 = arith.constant 0 : index
    %c0_41 = arith.constant 0 : index
    %16 = vector.load %arg18[%c0_39, %c0_40, %c0_41] : memref<1x16x64xbf16, #tpu.memory_space<vmem>>, vector<1x16x64xbf16>
    %c0_42 = arith.constant 0 : index
    %c0_43 = arith.constant 0 : index
    %17 = vector.load %arg19[%c0_42, %c0_43] : memref<1x64xf32, #tpu.memory_space<vmem>>, vector<1x64xf32>
    %c0_44 = arith.constant 0 : index
    %c0_45 = arith.constant 0 : index
    %c0_46 = arith.constant 0 : index
    %18 = vector.load %arg20[%c0_44, %c0_45, %c0_46] : memref<1x64x128xbf16, #tpu.memory_space<vmem>>, vector<1x64x128xbf16>
    %c0_47 = arith.constant 0 : index
    %c0_48 = arith.constant 0 : index
    %19 = vector.load %arg21[%c0_47, %c0_48] : memref<1x128xf32, #tpu.memory_space<vmem>>, vector<1x128xf32>
    %c0_49 = arith.constant 0 : index
    %c0_50 = arith.constant 0 : index
    %c0_51 = arith.constant 0 : index
    %20 = vector.load %arg22[%c0_49, %c0_50, %c0_51] : memref<1x64x32xbf16, #tpu.memory_space<vmem>>, vector<1x64x32xbf16>
    %c0_52 = arith.constant 0 : index
    %c0_53 = arith.constant 0 : index
    %21 = vector.load %arg23[%c0_52, %c0_53] : memref<1x32xf32, #tpu.memory_space<vmem>>, vector<1x32xf32>
    %c0_54 = arith.constant 0 : index
    %c0_55 = arith.constant 0 : index
    %c0_56 = arith.constant 0 : index
    %22 = vector.load %arg24[%c0_54, %c0_55, %c0_56] : memref<3x32x32xbf16, #tpu.memory_space<vmem>>, vector<3x32x32xbf16>
    %c0_57 = arith.constant 0 : index
    %c0_58 = arith.constant 0 : index
    %23 = vector.load %arg25[%c0_57, %c0_58] : memref<1x32xf32, #tpu.memory_space<vmem>>, vector<1x32xf32>
    %c0_59 = arith.constant 0 : index
    %c0_60 = arith.constant 0 : index
    %c0_61 = arith.constant 0 : index
    %24 = vector.load %arg26[%c0_59, %c0_60, %c0_61] : memref<1x32x128xbf16, #tpu.memory_space<vmem>>, vector<1x32x128xbf16>
    %c0_62 = arith.constant 0 : index
    %c0_63 = arith.constant 0 : index
    %25 = vector.load %arg27[%c0_62, %c0_63] : memref<1x128xf32, #tpu.memory_space<vmem>>, vector<1x128xf32>
    %c0_64 = arith.constant 0 : index
    %c0_65 = arith.constant 0 : index
    %26 = vector.load %arg28[%c0_64, %c0_65] : memref<128x5xf32, #tpu.memory_space<vmem>>, vector<128x5xf32>
    %c0_66 = arith.constant 0 : index
    %c0_67 = arith.constant 0 : index
    %27 = vector.load %arg29[%c0_66, %c0_67] : memref<1x5xf32, #tpu.memory_space<vmem>>, vector<1x5xf32>
    %c0_68 = arith.constant 0 : index
    %c0_69 = arith.constant 0 : index
    %c0_70 = arith.constant 0 : index
    %28 = vector.load %arg1[%c0_68, %c0_69, %c0_70] : memref<2x16x16xf32, #tpu.memory_space<vmem>>, vector<2x16x16xf32>
    %cst = arith.constant 0.000000e+00 : f32
    %29 = vector.broadcast %cst : f32 to vector<2x3x16xf32>
    %30 = tpu.concatenate %29, %28, %29 in 1 : vector<2x3x16xf32>, vector<2x16x16xf32>, vector<2x3x16xf32> -> vector<2x22x16xf32>
    %31 = vector.extract_strided_slice %30 {offsets = [0, 0, 0], sizes = [2, 16, 16], strides = [1, 1, 1]} : vector<2x22x16xf32> to vector<2x16x16xf32>
    %32 = vector.shape_cast %31 : vector<2x16x16xf32> to vector<32x16xf32>
    %33 = arith.truncf %32 : vector<32x16xf32> to vector<32x16xbf16>
    %34 = vector.extract_strided_slice %0 {offsets = [0, 0, 0], sizes = [1, 16, 64], strides = [1, 1, 1]} : vector<7x16x64xbf16> to vector<1x16x64xbf16>
    %35 = vector.shape_cast %34 : vector<1x16x64xbf16> to vector<16x64xbf16>
    %cst_71 = arith.constant dense<0.000000e+00> : vector<32x64xf32>
    %36 = tpu.matmul %33, %35, %cst_71 {dimension_numbers = #tpu.dot_dimension_numbers<[1], [0], [0], [1], [0, 0, 1, 1], [], []>} : vector<32x16xbf16>, vector<16x64xbf16>, vector<32x64xf32> -> vector<32x64xf32>
    %37 = vector.extract_strided_slice %30 {offsets = [0, 1, 0], sizes = [2, 16, 16], strides = [1, 1, 1]} : vector<2x22x16xf32> to vector<2x16x16xf32>
    %38 = vector.shape_cast %37 : vector<2x16x16xf32> to vector<32x16xf32>
    %39 = arith.truncf %38 : vector<32x16xf32> to vector<32x16xbf16>
    %40 = vector.extract_strided_slice %0 {offsets = [1, 0, 0], sizes = [1, 16, 64], strides = [1, 1, 1]} : vector<7x16x64xbf16> to vector<1x16x64xbf16>
    %41 = vector.shape_cast %40 : vector<1x16x64xbf16> to vector<16x64xbf16>
    %cst_72 = arith.constant dense<0.000000e+00> : vector<32x64xf32>
    %42 = tpu.matmul %39, %41, %cst_72 {dimension_numbers = #tpu.dot_dimension_numbers<[1], [0], [0], [1], [0, 0, 1, 1], [], []>} : vector<32x16xbf16>, vector<16x64xbf16>, vector<32x64xf32> -> vector<32x64xf32>
    %43 = arith.addf %36, %42 : vector<32x64xf32>
    %44 = vector.extract_strided_slice %30 {offsets = [0, 2, 0], sizes = [2, 16, 16], strides = [1, 1, 1]} : vector<2x22x16xf32> to vector<2x16x16xf32>
    %45 = vector.shape_cast %44 : vector<2x16x16xf32> to vector<32x16xf32>
    %46 = arith.truncf %45 : vector<32x16xf32> to vector<32x16xbf16>
    %47 = vector.extract_strided_slice %0 {offsets = [2, 0, 0], sizes = [1, 16, 64], strides = [1, 1, 1]} : vector<7x16x64xbf16> to vector<1x16x64xbf16>
    %48 = vector.shape_cast %47 : vector<1x16x64xbf16> to vector<16x64xbf16>
    %cst_73 = arith.constant dense<0.000000e+00> : vector<32x64xf32>
    %49 = tpu.matmul %46, %48, %cst_73 {dimension_numbers = #tpu.dot_dimension_numbers<[1], [0], [0], [1], [0, 0, 1, 1], [], []>} : vector<32x16xbf16>, vector<16x64xbf16>, vector<32x64xf32> -> vector<32x64xf32>
    %50 = arith.addf %43, %49 : vector<32x64xf32>
    %51 = vector.extract_strided_slice %30 {offsets = [0, 3, 0], sizes = [2, 16, 16], strides = [1, 1, 1]} : vector<2x22x16xf32> to vector<2x16x16xf32>
    %52 = vector.shape_cast %51 : vector<2x16x16xf32> to vector<32x16xf32>
    %53 = arith.truncf %52 : vector<32x16xf32> to vector<32x16xbf16>
    %54 = vector.extract_strided_slice %0 {offsets = [3, 0, 0], sizes = [1, 16, 64], strides = [1, 1, 1]} : vector<7x16x64xbf16> to vector<1x16x64xbf16>
    %55 = vector.shape_cast %54 : vector<1x16x64xbf16> to vector<16x64xbf16>
    %cst_74 = arith.constant dense<0.000000e+00> : vector<32x64xf32>
    %56 = tpu.matmul %53, %55, %cst_74 {dimension_numbers = #tpu.dot_dimension_numbers<[1], [0], [0], [1], [0, 0, 1, 1], [], []>} : vector<32x16xbf16>, vector<16x64xbf16>, vector<32x64xf32> -> vector<32x64xf32>
    %57 = arith.addf %50, %56 : vector<32x64xf32>
    %58 = vector.extract_strided_slice %30 {offsets = [0, 4, 0], sizes = [2, 16, 16], strides = [1, 1, 1]} : vector<2x22x16xf32> to vector<2x16x16xf32>
    %59 = vector.shape_cast %58 : vector<2x16x16xf32> to vector<32x16xf32>
    %60 = arith.truncf %59 : vector<32x16xf32> to vector<32x16xbf16>
    %61 = vector.extract_strided_slice %0 {offsets = [4, 0, 0], sizes = [1, 16, 64], strides = [1, 1, 1]} : vector<7x16x64xbf16> to vector<1x16x64xbf16>
    %62 = vector.shape_cast %61 : vector<1x16x64xbf16> to vector<16x64xbf16>
    %cst_75 = arith.constant dense<0.000000e+00> : vector<32x64xf32>
    %63 = tpu.matmul %60, %62, %cst_75 {dimension_numbers = #tpu.dot_dimension_numbers<[1], [0], [0], [1], [0, 0, 1, 1], [], []>} : vector<32x16xbf16>, vector<16x64xbf16>, vector<32x64xf32> -> vector<32x64xf32>
    %64 = arith.addf %57, %63 : vector<32x64xf32>
    %65 = vector.extract_strided_slice %30 {offsets = [0, 5, 0], sizes = [2, 16, 16], strides = [1, 1, 1]} : vector<2x22x16xf32> to vector<2x16x16xf32>
    %66 = vector.shape_cast %65 : vector<2x16x16xf32> to vector<32x16xf32>
    %67 = arith.truncf %66 : vector<32x16xf32> to vector<32x16xbf16>
    %68 = vector.extract_strided_slice %0 {offsets = [5, 0, 0], sizes = [1, 16, 64], strides = [1, 1, 1]} : vector<7x16x64xbf16> to vector<1x16x64xbf16>
    %69 = vector.shape_cast %68 : vector<1x16x64xbf16> to vector<16x64xbf16>
    %cst_76 = arith.constant dense<0.000000e+00> : vector<32x64xf32>
    %70 = tpu.matmul %67, %69, %cst_76 {dimension_numbers = #tpu.dot_dimension_numbers<[1], [0], [0], [1], [0, 0, 1, 1], [], []>} : vector<32x16xbf16>, vector<16x64xbf16>, vector<32x64xf32> -> vector<32x64xf32>
    %71 = arith.addf %64, %70 : vector<32x64xf32>
    %72 = vector.extract_strided_slice %30 {offsets = [0, 6, 0], sizes = [2, 16, 16], strides = [1, 1, 1]} : vector<2x22x16xf32> to vector<2x16x16xf32>
    %73 = vector.shape_cast %72 : vector<2x16x16xf32> to vector<32x16xf32>
    %74 = arith.truncf %73 : vector<32x16xf32> to vector<32x16xbf16>
    %75 = vector.extract_strided_slice %0 {offsets = [6, 0, 0], sizes = [1, 16, 64], strides = [1, 1, 1]} : vector<7x16x64xbf16> to vector<1x16x64xbf16>
    %76 = vector.shape_cast %75 : vector<1x16x64xbf16> to vector<16x64xbf16>
    %cst_77 = arith.constant dense<0.000000e+00> : vector<32x64xf32>
    %77 = tpu.matmul %74, %76, %cst_77 {dimension_numbers = #tpu.dot_dimension_numbers<[1], [0], [0], [1], [0, 0, 1, 1], [], []>} : vector<32x16xbf16>, vector<16x64xbf16>, vector<32x64xf32> -> vector<32x64xf32>
    %78 = arith.addf %71, %77 : vector<32x64xf32>
    %79 = vector.broadcast %1 : vector<1x64xf32> to vector<32x64xf32>
    %80 = arith.addf %78, %79 : vector<32x64xf32>
    %cst_78 = arith.constant 0.000000e+00 : f32
    %81 = vector.broadcast %cst_78 : f32 to vector<32x64xf32>
    %82 = arith.maximumf %80, %81 : vector<32x64xf32>
    %83 = vector.shape_cast %82 : vector<32x64xf32> to vector<2x16x64xf32>
    %84 = vector.shape_cast %83 : vector<2x16x64xf32> to vector<2x8x2x64xf32>
    %85 = vector.extract_strided_slice %84 {offsets = [0, 0, 0, 0], sizes = [2, 8, 1, 64], strides = [1, 1, 1, 1]} : vector<2x8x2x64xf32> to vector<2x8x1x64xf32>
    %86 = vector.shape_cast %85 : vector<2x8x1x64xf32> to vector<2x8x64xf32>
    %cst_79 = arith.constant -1.000000e+30 : f32
    %87 = vector.broadcast %cst_79 : f32 to vector<2x1x64xf32>
    %88 = tpu.concatenate %87, %86, %87 in 1 : vector<2x1x64xf32>, vector<2x8x64xf32>, vector<2x1x64xf32> -> vector<2x10x64xf32>
    %89 = vector.extract_strided_slice %88 {offsets = [0, 0, 0], sizes = [2, 8, 64], strides = [1, 1, 1]} : vector<2x10x64xf32> to vector<2x8x64xf32>
    %90 = vector.extract_strided_slice %88 {offsets = [0, 1, 0], sizes = [2, 8, 64], strides = [1, 1, 1]} : vector<2x10x64xf32> to vector<2x8x64xf32>
    %91 = arith.maximumf %89, %90 : vector<2x8x64xf32>
    %92 = vector.extract_strided_slice %88 {offsets = [0, 2, 0], sizes = [2, 8, 64], strides = [1, 1, 1]} : vector<2x10x64xf32> to vector<2x8x64xf32>
    %93 = arith.maximumf %91, %92 : vector<2x8x64xf32>
    %94 = vector.shape_cast %93 : vector<2x8x64xf32> to vector<2x4x2x64xf32>
    %95 = vector.extract_strided_slice %94 {offsets = [0, 0, 0, 0], sizes = [2, 4, 1, 64], strides = [1, 1, 1, 1]} : vector<2x4x2x64xf32> to vector<2x4x1x64xf32>
    %96 = vector.shape_cast %95 : vector<2x4x1x64xf32> to vector<2x4x64xf32>
    %97 = vector.shape_cast %96 : vector<2x4x64xf32> to vector<8x64xf32>
    %98 = arith.truncf %97 : vector<8x64xf32> to vector<8x64xbf16>
    %99 = vector.shape_cast %2 : vector<1x64x64xbf16> to vector<64x64xbf16>
    %cst_80 = arith.constant dense<0.000000e+00> : vector<8x64xf32>
    %100 = tpu.matmul %98, %99, %cst_80 {dimension_numbers = #tpu.dot_dimension_numbers<[1], [0], [0], [1], [0, 0, 1, 1], [], []>} : vector<8x64xbf16>, vector<64x64xbf16>, vector<8x64xf32> -> vector<8x64xf32>
    %101 = vector.broadcast %3 : vector<1x64xf32> to vector<8x64xf32>
    %102 = arith.addf %100, %101 : vector<8x64xf32>
    %103 = vector.shape_cast %102 : vector<8x64xf32> to vector<2x4x64xf32>
    %104 = vector.shape_cast %96 : vector<2x4x64xf32> to vector<8x64xf32>
    %105 = arith.truncf %104 : vector<8x64xf32> to vector<8x64xbf16>
    %106 = vector.shape_cast %4 : vector<1x64x16xbf16> to vector<64x16xbf16>
    %cst_81 = arith.constant dense<0.000000e+00> : vector<8x16xf32>
    %107 = tpu.matmul %105, %106, %cst_81 {dimension_numbers = #tpu.dot_dimension_numbers<[1], [0], [0], [1], [0, 0, 1, 1], [], []>} : vector<8x64xbf16>, vector<64x16xbf16>, vector<8x16xf32> -> vector<8x16xf32>
    %108 = vector.broadcast %5 : vector<1x16xf32> to vector<8x16xf32>
    %109 = arith.addf %107, %108 : vector<8x16xf32>
    %cst_82 = arith.constant 0.000000e+00 : f32
    %110 = vector.broadcast %cst_82 : f32 to vector<8x16xf32>
    %111 = arith.maximumf %109, %110 : vector<8x16xf32>
    %112 = vector.shape_cast %111 : vector<8x16xf32> to vector<2x4x16xf32>
    %cst_83 = arith.constant 0.000000e+00 : f32
    %113 = vector.broadcast %cst_83 : f32 to vector<2x1x16xf32>
    %114 = tpu.concatenate %113, %112, %113 in 1 : vector<2x1x16xf32>, vector<2x4x16xf32>, vector<2x1x16xf32> -> vector<2x6x16xf32>
    %115 = vector.extract_strided_slice %114 {offsets = [0, 0, 0], sizes = [2, 4, 16], strides = [1, 1, 1]} : vector<2x6x16xf32> to vector<2x4x16xf32>
    %116 = vector.shape_cast %115 : vector<2x4x16xf32> to vector<8x16xf32>
    %117 = arith.truncf %116 : vector<8x16xf32> to vector<8x16xbf16>
    %118 = vector.extract_strided_slice %6 {offsets = [0, 0, 0], sizes = [1, 16, 16], strides = [1, 1, 1]} : vector<3x16x16xbf16> to vector<1x16x16xbf16>
    %119 = vector.shape_cast %118 : vector<1x16x16xbf16> to vector<16x16xbf16>
    %cst_84 = arith.constant dense<0.000000e+00> : vector<8x16xf32>
    %120 = tpu.matmul %117, %119, %cst_84 {dimension_numbers = #tpu.dot_dimension_numbers<[1], [0], [0], [1], [0, 0, 1, 1], [], []>} : vector<8x16xbf16>, vector<16x16xbf16>, vector<8x16xf32> -> vector<8x16xf32>
    %121 = vector.extract_strided_slice %114 {offsets = [0, 1, 0], sizes = [2, 4, 16], strides = [1, 1, 1]} : vector<2x6x16xf32> to vector<2x4x16xf32>
    %122 = vector.shape_cast %121 : vector<2x4x16xf32> to vector<8x16xf32>
    %123 = arith.truncf %122 : vector<8x16xf32> to vector<8x16xbf16>
    %124 = vector.extract_strided_slice %6 {offsets = [1, 0, 0], sizes = [1, 16, 16], strides = [1, 1, 1]} : vector<3x16x16xbf16> to vector<1x16x16xbf16>
    %125 = vector.shape_cast %124 : vector<1x16x16xbf16> to vector<16x16xbf16>
    %cst_85 = arith.constant dense<0.000000e+00> : vector<8x16xf32>
    %126 = tpu.matmul %123, %125, %cst_85 {dimension_numbers = #tpu.dot_dimension_numbers<[1], [0], [0], [1], [0, 0, 1, 1], [], []>} : vector<8x16xbf16>, vector<16x16xbf16>, vector<8x16xf32> -> vector<8x16xf32>
    %127 = arith.addf %120, %126 : vector<8x16xf32>
    %128 = vector.extract_strided_slice %114 {offsets = [0, 2, 0], sizes = [2, 4, 16], strides = [1, 1, 1]} : vector<2x6x16xf32> to vector<2x4x16xf32>
    %129 = vector.shape_cast %128 : vector<2x4x16xf32> to vector<8x16xf32>
    %130 = arith.truncf %129 : vector<8x16xf32> to vector<8x16xbf16>
    %131 = vector.extract_strided_slice %6 {offsets = [2, 0, 0], sizes = [1, 16, 16], strides = [1, 1, 1]} : vector<3x16x16xbf16> to vector<1x16x16xbf16>
    %132 = vector.shape_cast %131 : vector<1x16x16xbf16> to vector<16x16xbf16>
    %cst_86 = arith.constant dense<0.000000e+00> : vector<8x16xf32>
    %133 = tpu.matmul %130, %132, %cst_86 {dimension_numbers = #tpu.dot_dimension_numbers<[1], [0], [0], [1], [0, 0, 1, 1], [], []>} : vector<8x16xbf16>, vector<16x16xbf16>, vector<8x16xf32> -> vector<8x16xf32>
    %134 = arith.addf %127, %133 : vector<8x16xf32>
    %135 = vector.broadcast %7 : vector<1x16xf32> to vector<8x16xf32>
    %136 = arith.addf %134, %135 : vector<8x16xf32>
    %cst_87 = arith.constant 0.000000e+00 : f32
    %137 = vector.broadcast %cst_87 : f32 to vector<8x16xf32>
    %138 = arith.maximumf %136, %137 : vector<8x16xf32>
    %139 = vector.shape_cast %138 : vector<8x16xf32> to vector<2x4x16xf32>
    %140 = vector.shape_cast %139 : vector<2x4x16xf32> to vector<8x16xf32>
    %141 = arith.truncf %140 : vector<8x16xf32> to vector<8x16xbf16>
    %142 = vector.shape_cast %8 : vector<1x16x64xbf16> to vector<16x64xbf16>
    %cst_88 = arith.constant dense<0.000000e+00> : vector<8x64xf32>
    %143 = tpu.matmul %141, %142, %cst_88 {dimension_numbers = #tpu.dot_dimension_numbers<[1], [0], [0], [1], [0, 0, 1, 1], [], []>} : vector<8x16xbf16>, vector<16x64xbf16>, vector<8x64xf32> -> vector<8x64xf32>
    %144 = vector.broadcast %9 : vector<1x64xf32> to vector<8x64xf32>
    %145 = arith.addf %143, %144 : vector<8x64xf32>
    %146 = vector.shape_cast %145 : vector<8x64xf32> to vector<2x4x64xf32>
    %147 = arith.addf %146, %103 : vector<2x4x64xf32>
    %cst_89 = arith.constant 0.000000e+00 : f32
    %148 = vector.broadcast %cst_89 : f32 to vector<2x4x64xf32>
    %149 = arith.maximumf %147, %148 : vector<2x4x64xf32>
    %150 = vector.shape_cast %149 : vector<2x4x64xf32> to vector<8x64xf32>
    %151 = arith.truncf %150 : vector<8x64xf32> to vector<8x64xbf16>
    %152 = vector.shape_cast %10 : vector<1x64x64xbf16> to vector<64x64xbf16>
    %cst_90 = arith.constant dense<0.000000e+00> : vector<8x64xf32>
    %153 = tpu.matmul %151, %152, %cst_90 {dimension_numbers = #tpu.dot_dimension_numbers<[1], [0], [0], [1], [0, 0, 1, 1], [], []>} : vector<8x64xbf16>, vector<64x64xbf16>, vector<8x64xf32> -> vector<8x64xf32>
    %154 = vector.broadcast %11 : vector<1x64xf32> to vector<8x64xf32>
    %155 = arith.addf %153, %154 : vector<8x64xf32>
    %156 = vector.shape_cast %155 : vector<8x64xf32> to vector<2x4x64xf32>
    %157 = vector.shape_cast %149 : vector<2x4x64xf32> to vector<8x64xf32>
    %158 = arith.truncf %157 : vector<8x64xf32> to vector<8x64xbf16>
    %159 = vector.shape_cast %12 : vector<1x64x16xbf16> to vector<64x16xbf16>
    %cst_91 = arith.constant dense<0.000000e+00> : vector<8x16xf32>
    %160 = tpu.matmul %158, %159, %cst_91 {dimension_numbers = #tpu.dot_dimension_numbers<[1], [0], [0], [1], [0, 0, 1, 1], [], []>} : vector<8x64xbf16>, vector<64x16xbf16>, vector<8x16xf32> -> vector<8x16xf32>
    %161 = vector.broadcast %13 : vector<1x16xf32> to vector<8x16xf32>
    %162 = arith.addf %160, %161 : vector<8x16xf32>
    %cst_92 = arith.constant 0.000000e+00 : f32
    %163 = vector.broadcast %cst_92 : f32 to vector<8x16xf32>
    %164 = arith.maximumf %162, %163 : vector<8x16xf32>
    %165 = vector.shape_cast %164 : vector<8x16xf32> to vector<2x4x16xf32>
    %cst_93 = arith.constant 0.000000e+00 : f32
    %166 = vector.broadcast %cst_93 : f32 to vector<2x1x16xf32>
    %167 = tpu.concatenate %166, %165, %166 in 1 : vector<2x1x16xf32>, vector<2x4x16xf32>, vector<2x1x16xf32> -> vector<2x6x16xf32>
    %168 = vector.extract_strided_slice %167 {offsets = [0, 0, 0], sizes = [2, 4, 16], strides = [1, 1, 1]} : vector<2x6x16xf32> to vector<2x4x16xf32>
    %169 = vector.shape_cast %168 : vector<2x4x16xf32> to vector<8x16xf32>
    %170 = arith.truncf %169 : vector<8x16xf32> to vector<8x16xbf16>
    %171 = vector.extract_strided_slice %14 {offsets = [0, 0, 0], sizes = [1, 16, 16], strides = [1, 1, 1]} : vector<3x16x16xbf16> to vector<1x16x16xbf16>
    %172 = vector.shape_cast %171 : vector<1x16x16xbf16> to vector<16x16xbf16>
    %cst_94 = arith.constant dense<0.000000e+00> : vector<8x16xf32>
    %173 = tpu.matmul %170, %172, %cst_94 {dimension_numbers = #tpu.dot_dimension_numbers<[1], [0], [0], [1], [0, 0, 1, 1], [], []>} : vector<8x16xbf16>, vector<16x16xbf16>, vector<8x16xf32> -> vector<8x16xf32>
    %174 = vector.extract_strided_slice %167 {offsets = [0, 1, 0], sizes = [2, 4, 16], strides = [1, 1, 1]} : vector<2x6x16xf32> to vector<2x4x16xf32>
    %175 = vector.shape_cast %174 : vector<2x4x16xf32> to vector<8x16xf32>
    %176 = arith.truncf %175 : vector<8x16xf32> to vector<8x16xbf16>
    %177 = vector.extract_strided_slice %14 {offsets = [1, 0, 0], sizes = [1, 16, 16], strides = [1, 1, 1]} : vector<3x16x16xbf16> to vector<1x16x16xbf16>
    %178 = vector.shape_cast %177 : vector<1x16x16xbf16> to vector<16x16xbf16>
    %cst_95 = arith.constant dense<0.000000e+00> : vector<8x16xf32>
    %179 = tpu.matmul %176, %178, %cst_95 {dimension_numbers = #tpu.dot_dimension_numbers<[1], [0], [0], [1], [0, 0, 1, 1], [], []>} : vector<8x16xbf16>, vector<16x16xbf16>, vector<8x16xf32> -> vector<8x16xf32>
    %180 = arith.addf %173, %179 : vector<8x16xf32>
    %181 = vector.extract_strided_slice %167 {offsets = [0, 2, 0], sizes = [2, 4, 16], strides = [1, 1, 1]} : vector<2x6x16xf32> to vector<2x4x16xf32>
    %182 = vector.shape_cast %181 : vector<2x4x16xf32> to vector<8x16xf32>
    %183 = arith.truncf %182 : vector<8x16xf32> to vector<8x16xbf16>
    %184 = vector.extract_strided_slice %14 {offsets = [2, 0, 0], sizes = [1, 16, 16], strides = [1, 1, 1]} : vector<3x16x16xbf16> to vector<1x16x16xbf16>
    %185 = vector.shape_cast %184 : vector<1x16x16xbf16> to vector<16x16xbf16>
    %cst_96 = arith.constant dense<0.000000e+00> : vector<8x16xf32>
    %186 = tpu.matmul %183, %185, %cst_96 {dimension_numbers = #tpu.dot_dimension_numbers<[1], [0], [0], [1], [0, 0, 1, 1], [], []>} : vector<8x16xbf16>, vector<16x16xbf16>, vector<8x16xf32> -> vector<8x16xf32>
    %187 = arith.addf %180, %186 : vector<8x16xf32>
    %188 = vector.broadcast %15 : vector<1x16xf32> to vector<8x16xf32>
    %189 = arith.addf %187, %188 : vector<8x16xf32>
    %cst_97 = arith.constant 0.000000e+00 : f32
    %190 = vector.broadcast %cst_97 : f32 to vector<8x16xf32>
    %191 = arith.maximumf %189, %190 : vector<8x16xf32>
    %192 = vector.shape_cast %191 : vector<8x16xf32> to vector<2x4x16xf32>
    %193 = vector.shape_cast %192 : vector<2x4x16xf32> to vector<8x16xf32>
    %194 = arith.truncf %193 : vector<8x16xf32> to vector<8x16xbf16>
    %195 = vector.shape_cast %16 : vector<1x16x64xbf16> to vector<16x64xbf16>
    %cst_98 = arith.constant dense<0.000000e+00> : vector<8x64xf32>
    %196 = tpu.matmul %194, %195, %cst_98 {dimension_numbers = #tpu.dot_dimension_numbers<[1], [0], [0], [1], [0, 0, 1, 1], [], []>} : vector<8x16xbf16>, vector<16x64xbf16>, vector<8x64xf32> -> vector<8x64xf32>
    %197 = vector.broadcast %17 : vector<1x64xf32> to vector<8x64xf32>
    %198 = arith.addf %196, %197 : vector<8x64xf32>
    %199 = vector.shape_cast %198 : vector<8x64xf32> to vector<2x4x64xf32>
    %200 = arith.addf %199, %156 : vector<2x4x64xf32>
    %cst_99 = arith.constant 0.000000e+00 : f32
    %201 = vector.broadcast %cst_99 : f32 to vector<2x4x64xf32>
    %202 = arith.maximumf %200, %201 : vector<2x4x64xf32>
    %203 = vector.shape_cast %202 : vector<2x4x64xf32> to vector<8x64xf32>
    %204 = arith.truncf %203 : vector<8x64xf32> to vector<8x64xbf16>
    %205 = vector.shape_cast %18 : vector<1x64x128xbf16> to vector<64x128xbf16>
    %cst_100 = arith.constant dense<0.000000e+00> : vector<8x128xf32>
    %206 = tpu.matmul %204, %205, %cst_100 {dimension_numbers = #tpu.dot_dimension_numbers<[1], [0], [0], [1], [0, 0, 1, 1], [], []>} : vector<8x64xbf16>, vector<64x128xbf16>, vector<8x128xf32> -> vector<8x128xf32>
    %207 = vector.broadcast %19 : vector<1x128xf32> to vector<8x128xf32>
    %208 = arith.addf %206, %207 : vector<8x128xf32>
    %209 = vector.shape_cast %208 : vector<8x128xf32> to vector<2x4x128xf32>
    %210 = vector.shape_cast %209 : vector<2x4x128xf32> to vector<2x2x2x128xf32>
    %211 = vector.extract_strided_slice %210 {offsets = [0, 0, 0, 0], sizes = [2, 2, 1, 128], strides = [1, 1, 1, 1]} : vector<2x2x2x128xf32> to vector<2x2x1x128xf32>
    %212 = vector.shape_cast %211 : vector<2x2x1x128xf32> to vector<2x2x128xf32>
    %213 = vector.shape_cast %202 : vector<2x4x64xf32> to vector<8x64xf32>
    %214 = arith.truncf %213 : vector<8x64xf32> to vector<8x64xbf16>
    %215 = vector.shape_cast %20 : vector<1x64x32xbf16> to vector<64x32xbf16>
    %cst_101 = arith.constant dense<0.000000e+00> : vector<8x32xf32>
    %216 = tpu.matmul %214, %215, %cst_101 {dimension_numbers = #tpu.dot_dimension_numbers<[1], [0], [0], [1], [0, 0, 1, 1], [], []>} : vector<8x64xbf16>, vector<64x32xbf16>, vector<8x32xf32> -> vector<8x32xf32>
    %217 = vector.broadcast %21 : vector<1x32xf32> to vector<8x32xf32>
    %218 = arith.addf %216, %217 : vector<8x32xf32>
    %cst_102 = arith.constant 0.000000e+00 : f32
    %219 = vector.broadcast %cst_102 : f32 to vector<8x32xf32>
    %220 = arith.maximumf %218, %219 : vector<8x32xf32>
    %221 = vector.shape_cast %220 : vector<8x32xf32> to vector<2x4x32xf32>
    %cst_103 = arith.constant 0.000000e+00 : f32
    %222 = vector.broadcast %cst_103 : f32 to vector<2x1x32xf32>
    %223 = tpu.concatenate %222, %221, %222 in 1 : vector<2x1x32xf32>, vector<2x4x32xf32>, vector<2x1x32xf32> -> vector<2x6x32xf32>
    %224 = vector.extract_strided_slice %223 {offsets = [0, 0, 0], sizes = [2, 4, 32], strides = [1, 1, 1]} : vector<2x6x32xf32> to vector<2x4x32xf32>
    %225 = vector.shape_cast %224 : vector<2x4x32xf32> to vector<8x32xf32>
    %226 = arith.truncf %225 : vector<8x32xf32> to vector<8x32xbf16>
    %227 = vector.extract_strided_slice %22 {offsets = [0, 0, 0], sizes = [1, 32, 32], strides = [1, 1, 1]} : vector<3x32x32xbf16> to vector<1x32x32xbf16>
    %228 = vector.shape_cast %227 : vector<1x32x32xbf16> to vector<32x32xbf16>
    %cst_104 = arith.constant dense<0.000000e+00> : vector<8x32xf32>
    %229 = tpu.matmul %226, %228, %cst_104 {dimension_numbers = #tpu.dot_dimension_numbers<[1], [0], [0], [1], [0, 0, 1, 1], [], []>} : vector<8x32xbf16>, vector<32x32xbf16>, vector<8x32xf32> -> vector<8x32xf32>
    %230 = vector.extract_strided_slice %223 {offsets = [0, 1, 0], sizes = [2, 4, 32], strides = [1, 1, 1]} : vector<2x6x32xf32> to vector<2x4x32xf32>
    %231 = vector.shape_cast %230 : vector<2x4x32xf32> to vector<8x32xf32>
    %232 = arith.truncf %231 : vector<8x32xf32> to vector<8x32xbf16>
    %233 = vector.extract_strided_slice %22 {offsets = [1, 0, 0], sizes = [1, 32, 32], strides = [1, 1, 1]} : vector<3x32x32xbf16> to vector<1x32x32xbf16>
    %234 = vector.shape_cast %233 : vector<1x32x32xbf16> to vector<32x32xbf16>
    %cst_105 = arith.constant dense<0.000000e+00> : vector<8x32xf32>
    %235 = tpu.matmul %232, %234, %cst_105 {dimension_numbers = #tpu.dot_dimension_numbers<[1], [0], [0], [1], [0, 0, 1, 1], [], []>} : vector<8x32xbf16>, vector<32x32xbf16>, vector<8x32xf32> -> vector<8x32xf32>
    %236 = arith.addf %229, %235 : vector<8x32xf32>
    %237 = vector.extract_strided_slice %223 {offsets = [0, 2, 0], sizes = [2, 4, 32], strides = [1, 1, 1]} : vector<2x6x32xf32> to vector<2x4x32xf32>
    %238 = vector.shape_cast %237 : vector<2x4x32xf32> to vector<8x32xf32>
    %239 = arith.truncf %238 : vector<8x32xf32> to vector<8x32xbf16>
    %240 = vector.extract_strided_slice %22 {offsets = [2, 0, 0], sizes = [1, 32, 32], strides = [1, 1, 1]} : vector<3x32x32xbf16> to vector<1x32x32xbf16>
    %241 = vector.shape_cast %240 : vector<1x32x32xbf16> to vector<32x32xbf16>
    %cst_106 = arith.constant dense<0.000000e+00> : vector<8x32xf32>
    %242 = tpu.matmul %239, %241, %cst_106 {dimension_numbers = #tpu.dot_dimension_numbers<[1], [0], [0], [1], [0, 0, 1, 1], [], []>} : vector<8x32xbf16>, vector<32x32xbf16>, vector<8x32xf32> -> vector<8x32xf32>
    %243 = arith.addf %236, %242 : vector<8x32xf32>
    %244 = vector.broadcast %23 : vector<1x32xf32> to vector<8x32xf32>
    %245 = arith.addf %243, %244 : vector<8x32xf32>
    %cst_107 = arith.constant 0.000000e+00 : f32
    %246 = vector.broadcast %cst_107 : f32 to vector<8x32xf32>
    %247 = arith.maximumf %245, %246 : vector<8x32xf32>
    %248 = vector.shape_cast %247 : vector<8x32xf32> to vector<2x4x32xf32>
    %249 = vector.shape_cast %248 : vector<2x4x32xf32> to vector<2x2x2x32xf32>
    %250 = vector.extract_strided_slice %249 {offsets = [0, 0, 0, 0], sizes = [2, 2, 1, 32], strides = [1, 1, 1, 1]} : vector<2x2x2x32xf32> to vector<2x2x1x32xf32>
    %251 = vector.shape_cast %250 : vector<2x2x1x32xf32> to vector<2x2x32xf32>
    %252 = vector.shape_cast %251 : vector<2x2x32xf32> to vector<4x32xf32>
    %253 = arith.truncf %252 : vector<4x32xf32> to vector<4x32xbf16>
    %254 = vector.shape_cast %24 : vector<1x32x128xbf16> to vector<32x128xbf16>
    %cst_108 = arith.constant dense<0.000000e+00> : vector<4x128xf32>
    %255 = tpu.matmul %253, %254, %cst_108 {dimension_numbers = #tpu.dot_dimension_numbers<[1], [0], [0], [1], [0, 0, 1, 1], [], []>} : vector<4x32xbf16>, vector<32x128xbf16>, vector<4x128xf32> -> vector<4x128xf32>
    %256 = vector.broadcast %25 : vector<1x128xf32> to vector<4x128xf32>
    %257 = arith.addf %255, %256 : vector<4x128xf32>
    %258 = vector.shape_cast %257 : vector<4x128xf32> to vector<2x2x128xf32>
    %259 = arith.addf %258, %212 : vector<2x2x128xf32>
    %cst_109 = arith.constant 0.000000e+00 : f32
    %260 = vector.broadcast %cst_109 : f32 to vector<2x2x128xf32>
    %261 = arith.maximumf %259, %260 : vector<2x2x128xf32>
    %cst_110 = arith.constant dense<0.000000e+00> : vector<2x128xf32>
    %262 = vector.multi_reduction <add>, %261, %cst_110 [1] : vector<2x2x128xf32> to vector<2x128xf32>
    %cst_111 = arith.constant 2.000000e+00 : f32
    %263 = vector.broadcast %cst_111 : f32 to vector<2x128xf32>
    %264 = arith.divf %262, %263 : vector<2x128xf32>
    %cst_112 = arith.constant dense<0.000000e+00> : vector<2x5xf32>
    %265 = tpu.matmul %264, %26, %cst_112 {dimension_numbers = #tpu.dot_dimension_numbers<[1], [0], [0], [1], [0, 0, 1, 1], [], []>} : vector<2x128xf32>, vector<128x5xf32>, vector<2x5xf32> -> vector<2x5xf32>
    %266 = vector.broadcast %27 : vector<1x5xf32> to vector<2x5xf32>
    %267 = arith.addf %265, %266 : vector<2x5xf32>
    %c0_113 = arith.constant 0 : index
    %c0_114 = arith.constant 0 : index
    %268 = vector.load %arg30[%c0_113, %c0_114] : memref<2x5xf32, #tpu.memory_space<vmem>>, vector<2x5xf32>
    tpu.vector_store %arg30[%c0_113, %c0_114], %267 {strides = array<i32>} : memref<2x5xf32, #tpu.memory_space<vmem>>, vector<2x5xf32>,
    return
  }
  func.func @transform_0(%arg0: i32) -> (i32, i32, i32) {
    %c0_i32 = arith.constant 0 : i32
    %c0_i32_0 = arith.constant 0 : i32
    %c0_i32_1 = arith.constant 0 : i32
    return %arg0, %c0_i32, %c0_i32_0 : i32, i32, i32
  }
  func.func @transform_1(%arg0: i32) -> (i32, i32, i32) {
    %c0_i32 = arith.constant 0 : i32
    %c0_i32_0 = arith.constant 0 : i32
    %c0_i32_1 = arith.constant 0 : i32
    %c0_i32_2 = arith.constant 0 : i32
    return %c0_i32, %c0_i32_0, %c0_i32_1 : i32, i32, i32
  }
  func.func @transform_2(%arg0: i32) -> (i32, i32) {
    %c0_i32 = arith.constant 0 : i32
    %c0_i32_0 = arith.constant 0 : i32
    %c0_i32_1 = arith.constant 0 : i32
    return %c0_i32, %c0_i32_0 : i32, i32
  }
  func.func @transform_3(%arg0: i32) -> (i32, i32, i32) {
    %c0_i32 = arith.constant 0 : i32
    %c0_i32_0 = arith.constant 0 : i32
    %c0_i32_1 = arith.constant 0 : i32
    %c0_i32_2 = arith.constant 0 : i32
    return %c0_i32, %c0_i32_0, %c0_i32_1 : i32, i32, i32
  }
  func.func @transform_4(%arg0: i32) -> (i32, i32) {
    %c0_i32 = arith.constant 0 : i32
    %c0_i32_0 = arith.constant 0 : i32
    %c0_i32_1 = arith.constant 0 : i32
    return %c0_i32, %c0_i32_0 : i32, i32
  }
  func.func @transform_5(%arg0: i32) -> (i32, i32, i32) {
    %c0_i32 = arith.constant 0 : i32
    %c0_i32_0 = arith.constant 0 : i32
    %c0_i32_1 = arith.constant 0 : i32
    %c0_i32_2 = arith.constant 0 : i32
    return %c0_i32, %c0_i32_0, %c0_i32_1 : i32, i32, i32
  }
  func.func @transform_6(%arg0: i32) -> (i32, i32) {
    %c0_i32 = arith.constant 0 : i32
    %c0_i32_0 = arith.constant 0 : i32
    %c0_i32_1 = arith.constant 0 : i32
    return %c0_i32, %c0_i32_0 : i32, i32
  }
  func.func @transform_7(%arg0: i32) -> (i32, i32, i32) {
    %c0_i32 = arith.constant 0 : i32
    %c0_i32_0 = arith.constant 0 : i32
    %c0_i32_1 = arith.constant 0 : i32
    %c0_i32_2 = arith.constant 0 : i32
    return %c0_i32, %c0_i32_0, %c0_i32_1 : i32, i32, i32
  }
  func.func @transform_8(%arg0: i32) -> (i32, i32) {
    %c0_i32 = arith.constant 0 : i32
    %c0_i32_0 = arith.constant 0 : i32
    %c0_i32_1 = arith.constant 0 : i32
    return %c0_i32, %c0_i32_0 : i32, i32
  }
  func.func @transform_9(%arg0: i32) -> (i32, i32, i32) {
    %c0_i32 = arith.constant 0 : i32
    %c0_i32_0 = arith.constant 0 : i32
    %c0_i32_1 = arith.constant 0 : i32
    %c0_i32_2 = arith.constant 0 : i32
    return %c0_i32, %c0_i32_0, %c0_i32_1 : i32, i32, i32
  }
  func.func @transform_10(%arg0: i32) -> (i32, i32) {
    %c0_i32 = arith.constant 0 : i32
    %c0_i32_0 = arith.constant 0 : i32
    %c0_i32_1 = arith.constant 0 : i32
    return %c0_i32, %c0_i32_0 : i32, i32
  }
  func.func @transform_11(%arg0: i32) -> (i32, i32, i32) {
    %c0_i32 = arith.constant 0 : i32
    %c0_i32_0 = arith.constant 0 : i32
    %c0_i32_1 = arith.constant 0 : i32
    %c0_i32_2 = arith.constant 0 : i32
    return %c0_i32, %c0_i32_0, %c0_i32_1 : i32, i32, i32
  }
  func.func @transform_12(%arg0: i32) -> (i32, i32) {
    %c0_i32 = arith.constant 0 : i32
    %c0_i32_0 = arith.constant 0 : i32
    %c0_i32_1 = arith.constant 0 : i32
    return %c0_i32, %c0_i32_0 : i32, i32
  }
  func.func @transform_13(%arg0: i32) -> (i32, i32, i32) {
    %c0_i32 = arith.constant 0 : i32
    %c0_i32_0 = arith.constant 0 : i32
    %c0_i32_1 = arith.constant 0 : i32
    %c0_i32_2 = arith.constant 0 : i32
    return %c0_i32, %c0_i32_0, %c0_i32_1 : i32, i32, i32
  }
  func.func @transform_14(%arg0: i32) -> (i32, i32) {
    %c0_i32 = arith.constant 0 : i32
    %c0_i32_0 = arith.constant 0 : i32
    %c0_i32_1 = arith.constant 0 : i32
    return %c0_i32, %c0_i32_0 : i32, i32
  }
  func.func @transform_15(%arg0: i32) -> (i32, i32, i32) {
    %c0_i32 = arith.constant 0 : i32
    %c0_i32_0 = arith.constant 0 : i32
    %c0_i32_1 = arith.constant 0 : i32
    %c0_i32_2 = arith.constant 0 : i32
    return %c0_i32, %c0_i32_0, %c0_i32_1 : i32, i32, i32
  }
  func.func @transform_16(%arg0: i32) -> (i32, i32) {
    %c0_i32 = arith.constant 0 : i32
    %c0_i32_0 = arith.constant 0 : i32
    %c0_i32_1 = arith.constant 0 : i32
    return %c0_i32, %c0_i32_0 : i32, i32
  }
  func.func @transform_17(%arg0: i32) -> (i32, i32, i32) {
    %c0_i32 = arith.constant 0 : i32
    %c0_i32_0 = arith.constant 0 : i32
    %c0_i32_1 = arith.constant 0 : i32
    %c0_i32_2 = arith.constant 0 : i32
    return %c0_i32, %c0_i32_0, %c0_i32_1 : i32, i32, i32
  }
  func.func @transform_18(%arg0: i32) -> (i32, i32) {
    %c0_i32 = arith.constant 0 : i32
    %c0_i32_0 = arith.constant 0 : i32
    %c0_i32_1 = arith.constant 0 : i32
    return %c0_i32, %c0_i32_0 : i32, i32
  }
  func.func @transform_19(%arg0: i32) -> (i32, i32, i32) {
    %c0_i32 = arith.constant 0 : i32
    %c0_i32_0 = arith.constant 0 : i32
    %c0_i32_1 = arith.constant 0 : i32
    %c0_i32_2 = arith.constant 0 : i32
    return %c0_i32, %c0_i32_0, %c0_i32_1 : i32, i32, i32
  }
  func.func @transform_20(%arg0: i32) -> (i32, i32) {
    %c0_i32 = arith.constant 0 : i32
    %c0_i32_0 = arith.constant 0 : i32
    %c0_i32_1 = arith.constant 0 : i32
    return %c0_i32, %c0_i32_0 : i32, i32
  }
  func.func @transform_21(%arg0: i32) -> (i32, i32, i32) {
    %c0_i32 = arith.constant 0 : i32
    %c0_i32_0 = arith.constant 0 : i32
    %c0_i32_1 = arith.constant 0 : i32
    %c0_i32_2 = arith.constant 0 : i32
    return %c0_i32, %c0_i32_0, %c0_i32_1 : i32, i32, i32
  }
  func.func @transform_22(%arg0: i32) -> (i32, i32) {
    %c0_i32 = arith.constant 0 : i32
    %c0_i32_0 = arith.constant 0 : i32
    %c0_i32_1 = arith.constant 0 : i32
    return %c0_i32, %c0_i32_0 : i32, i32
  }
  func.func @transform_23(%arg0: i32) -> (i32, i32, i32) {
    %c0_i32 = arith.constant 0 : i32
    %c0_i32_0 = arith.constant 0 : i32
    %c0_i32_1 = arith.constant 0 : i32
    %c0_i32_2 = arith.constant 0 : i32
    return %c0_i32, %c0_i32_0, %c0_i32_1 : i32, i32, i32
  }
  func.func @transform_24(%arg0: i32) -> (i32, i32) {
    %c0_i32 = arith.constant 0 : i32
    %c0_i32_0 = arith.constant 0 : i32
    %c0_i32_1 = arith.constant 0 : i32
    return %c0_i32, %c0_i32_0 : i32, i32
  }
  func.func @transform_25(%arg0: i32) -> (i32, i32, i32) {
    %c0_i32 = arith.constant 0 : i32
    %c0_i32_0 = arith.constant 0 : i32
    %c0_i32_1 = arith.constant 0 : i32
    %c0_i32_2 = arith.constant 0 : i32
    return %c0_i32, %c0_i32_0, %c0_i32_1 : i32, i32, i32
  }
  func.func @transform_26(%arg0: i32) -> (i32, i32) {
    %c0_i32 = arith.constant 0 : i32
    %c0_i32_0 = arith.constant 0 : i32
    %c0_i32_1 = arith.constant 0 : i32
    return %c0_i32, %c0_i32_0 : i32, i32
  }
  func.func @transform_27(%arg0: i32) -> (i32, i32) {
    %c0_i32 = arith.constant 0 : i32
    %c0_i32_0 = arith.constant 0 : i32
    %c0_i32_1 = arith.constant 0 : i32
    return %c0_i32, %c0_i32_0 : i32, i32
  }
  func.func @transform_28(%arg0: i32) -> (i32, i32) {
    %c0_i32 = arith.constant 0 : i32
    %c0_i32_0 = arith.constant 0 : i32
    %c0_i32_1 = arith.constant 0 : i32
    return %c0_i32, %c0_i32_0 : i32, i32
  }
  func.func @transform_29(%arg0: i32) -> (i32, i32) {
    %c0_i32 = arith.constant 0 : i32
    %c0_i32_0 = arith.constant 0 : i32
    return %arg0, %c0_i32 : i32, i32
  }
}

</mosaic_0001>

<llo_original>
// kernel: tpu_custom_call.1
$region0: #{tpu_custom_call.1}
  #allocation0 [shape = 'u32[]', space=smem, size = 0x4, offset = 0x4, fixed_abs, tag = 'smem constant byte address 0x4 - core index']
  #allocation1 [shape = 'u32[144,128]{1,0:T(1,128)}', space=vmem, size = 0x12000, scoped, tag = 'internal scratch']
  %s0 = inlined_call_operand.smem [shape: u32[30], index: -1, kind: input, shape index: {}]
  %s1 = sld [smem:[%s0]]
  %s2 = scalar_lea.smem %s0, 1
  %s3 = sld [smem:[%s2]]
  %s4 = scalar_lea.smem %s0, 2
  %s5 = sld [smem:[%s4]]
  %s6 = scalar_lea.smem %s0, 3
  %s7 = sld [smem:[%s6]]
  %s8 = scalar_lea.smem %s0, 4
  %s9 = sld [smem:[%s8]]
  %s10 = scalar_lea.smem %s0, 5
  %s11 = sld [smem:[%s10]]
  %s12 = scalar_lea.smem %s0, 6
  %s13 = sld [smem:[%s12]]
  %s14 = scalar_lea.smem %s0, 7
  %s15 = sld [smem:[%s14]]
  %s16 = scalar_lea.smem %s0, 8
  %s17 = sld [smem:[%s16]]
  %s18 = scalar_lea.smem %s0, 9
  %s19 = sld [smem:[%s18]]
  %s20 = scalar_lea.smem %s0, 10
  %s21 = sld [smem:[%s20]]
  %s22 = scalar_lea.smem %s0, 11
  %s23 = sld [smem:[%s22]]
  %s24 = scalar_lea.smem %s0, 12
  %s25 = sld [smem:[%s24]]
  %s26 = scalar_lea.smem %s0, 13
  %s27 = sld [smem:[%s26]]
  %s28 = scalar_lea.smem %s0, 14
  %s29 = sld [smem:[%s28]]
  %s30 = scalar_lea.smem %s0, 15
  %s31 = sld [smem:[%s30]]
  %s32 = scalar_lea.smem %s0, 16
  %s33 = sld [smem:[%s32]]
  %s34 = scalar_lea.smem %s0, 17
  %s35 = sld [smem:[%s34]]
  %s36 = scalar_lea.smem %s0, 18
  %s37 = sld [smem:[%s36]]
  %s38 = scalar_lea.smem %s0, 19
  %s39 = sld [smem:[%s38]]
  %s40 = scalar_lea.smem %s0, 20
  %s41 = sld [smem:[%s40]]
  %s42 = scalar_lea.smem %s0, 21
  %s43 = sld [smem:[%s42]]
  %s44 = scalar_lea.smem %s0, 22
  %s45 = sld [smem:[%s44]]
  %s46 = scalar_lea.smem %s0, 23
  %s47 = sld [smem:[%s46]]
  %s48 = scalar_lea.smem %s0, 24
  %s49 = sld [smem:[%s48]]
  %s50 = scalar_lea.smem %s0, 25
  %s51 = sld [smem:[%s50]]
  %s52 = scalar_lea.smem %s0, 26
  %s53 = sld [smem:[%s52]]
  %s54 = scalar_lea.smem %s0, 27
  %s55 = sld [smem:[%s54]]
  %s56 = scalar_lea.smem %s0, 28
  %s57 = sld [smem:[%s56]]
  %s58 = scalar_lea.smem %s0, 29
  %s59 = sld [smem:[%s58]]
  %s60 = sld [smem:[#allocation0]]
  $region182: #{tpu_custom_call.1} parent=0
    _
  %s62 = ssub.s32 1, %s60
  %s63 = scalar_select 0, %s62, %s60
  $region1: #{tpu_custom_call.1} parent=0
    #allocation2 [shape = 'u8[512]{0}', space=vmem, size = 0x400, scoped, tag = 'input window, operand 2, single buffered']
    #allocation3 [shape = 's32[1]{0}', space=sflag, size = 0x4, scoped, tag = 'scoped memory for tpu_custom_call.1']
    #allocation4 [shape = 's32[1]{0}', space=sflag, size = 0x4, scoped, tag = 'scoped memory for tpu_custom_call.1']
    #allocation5 [shape = 'u8[512]{0}', space=vmem, size = 0x400, scoped, tag = 'input window, operand 4, single buffered']
    #allocation6 [shape = 's32[1]{0}', space=sflag, size = 0x4, scoped, tag = 'scoped memory for tpu_custom_call.1']
    #allocation7 [shape = 'u8[512]{0}', space=vmem, size = 0x400, scoped, tag = 'input window, operand 6, single buffered']
    #allocation8 [shape = 'u8[512]{0}', space=vmem, size = 0x400, scoped, tag = 'input window, operand 8, single buffered']
    #allocation9 [shape = 's32[1]{0}', space=sflag, size = 0x4, scoped, tag = 'scoped memory for tpu_custom_call.1']
    #allocation10 [shape = 'u8[4096]{0}', space=vmem, size = 0x1000, scoped, tag = 'input window, operand 9, single buffered']
    #allocation11 [shape = 'u8[512]{0}', space=vmem, size = 0x400, scoped, tag = 'input window, operand 10, single buffered']
    #allocation12 [shape = 's32[1]{0}', space=sflag, size = 0x4, scoped, tag = 'scoped memory for tpu_custom_call.1']
    #allocation13 [shape = 'u8[512]{0}', space=vmem, size = 0x400, scoped, tag = 'input window, operand 12, single buffered']
    #allocation14 [shape = 'u8[512]{0}', space=vmem, size = 0x400, scoped, tag = 'input window, operand 14, single buffered']
    #allocation15 [shape = 's32[1]{0}', space=sflag, size = 0x4, scoped, tag = 'scoped memory for tpu_custom_call.1']
    #allocation16 [shape = 'u8[512]{0}', space=vmem, size = 0x400, scoped, tag = 'input window, operand 16, single buffered']
    #allocation17 [shape = 'u8[4096]{0}', space=vmem, size = 0x1000, scoped, tag = 'input window, operand 17, single buffered']
    #allocation18 [shape = 's32[1]{0}', space=sflag, size = 0x4, scoped, tag = 'scoped memory for tpu_custom_call.1']
    #allocation19 [shape = 'u8[512]{0}', space=vmem, size = 0x400, scoped, tag = 'input window, operand 18, single buffered']
    #allocation20 [shape = 'u8[512]{0}', space=vmem, size = 0x400, scoped, tag = 'input window, operand 20, single buffered']
    #allocation21 [shape = 's32[1]{0}', space=sflag, size = 0x4, scoped, tag = 'scoped memory for tpu_custom_call.1']
    #allocation22 [shape = 'u8[512]{0}', space=vmem, size = 0x400, scoped, tag = 'input window, operand 22, single buffered']
    #allocation23 [shape = 'u8[8192]{0}', space=vmem, size = 0x2000, scoped, tag = 'input window, operand 25, single buffered']
    #allocation24 [shape = 's32[1]{0}', space=sflag, size = 0x4, scoped, tag = 'scoped memory for tpu_custom_call.1']
    #allocation25 [shape = 'u8[1024]{0}', space=vmem, size = 0x400, scoped, tag = 'output window, operand 0, single buffered']
    %64 = vsyncpa [#allocation3], 0
    %65 = vsyncpa [#allocation6], 0
    %66 = vsyncpa [#allocation9], 0
    %67 = vsyncpa [#allocation12], 0
    %68 = vsyncpa [#allocation15], 0
    %69 = vsyncpa [#allocation18], 0
    %70 = vsyncpa [#allocation21], 0
    %71 = vsyncpa [#allocation24], 0
    %72 = vsyncpa [#allocation4], 0
    // Predicated region
    $region2: #{tpu_custom_call.1} parent=1 // pred_check
      _
    $region3: #{tpu_custom_call.1} parent=1 // pred_check_branch
      %74 = sbr.rel (0) target = $region5
    $region4: #{tpu_custom_call.1} parent=1 // pred_region
      _
    $region5: #{tpu_custom_call.1} parent=1 // pred_fallthru
      _
    // Predicated region
    $region6: #{tpu_custom_call.1} parent=1 // pred_check
      _
    $region7: #{tpu_custom_call.1} parent=1 // pred_check_branch
      %76 = sbr.rel (0) target = $region9
    $region8: #{tpu_custom_call.1} parent=1 // pred_region
      _
    $region9: #{tpu_custom_call.1} parent=1 // pred_fallthru
      _
    // Predicated region
    $region10: #{tpu_custom_call.1} parent=1 // pred_check
      _
    $region11: #{tpu_custom_call.1} parent=1 // pred_check_branch
      %78 = sbr.rel (0) target = $region13
    $region12: #{tpu_custom_call.1} parent=1 // pred_region
      %s80 = ssub.s32 16, 16
      %81 = vsyncadd [#allocation3], %s80
      %s83 = sshll.u32 [#allocation2], 4
      %s84 = int_to_ptr.vmem [resolvable:$true] %s83
      %86 = dma.hbm_to_vmem [thread:$0]  %s5, 16, %s84, [#allocation3]
    $region13: #{tpu_custom_call.1} parent=1 // pred_fallthru
      _
    // Predicated region
    $region14: #{tpu_custom_call.1} parent=1 // pred_check
      _
    $region15: #{tpu_custom_call.1} parent=1 // pred_check_branch
      %88 = sbr.rel (0) target = $region17
    $region16: #{tpu_custom_call.1} parent=1 // pred_region
      _
    $region17: #{tpu_custom_call.1} parent=1 // pred_fallthru
      _
    // Predicated region
    $region18: #{tpu_custom_call.1} parent=1 // pred_check
      _
    $region19: #{tpu_custom_call.1} parent=1 // pred_check_branch
      %90 = sbr.rel (0) target = $region21
    $region20: #{tpu_custom_call.1} parent=1 // pred_region
      %s92 = ssub.s32 16, 16
      %93 = vsyncadd [#allocation6], %s92
      %s95 = sshll.u32 [#allocation5], 4
      %s96 = int_to_ptr.vmem [resolvable:$true] %s95
      %98 = dma.hbm_to_vmem [thread:$0]  %s9, 16, %s96, [#allocation6]
    $region21: #{tpu_custom_call.1} parent=1 // pred_fallthru
      _
    // Predicated region
    $region22: #{tpu_custom_call.1} parent=1 // pred_check
      _
    $region23: #{tpu_custom_call.1} parent=1 // pred_check_branch
      %100 = sbr.rel (0) target = $region25
    $region24: #{tpu_custom_call.1} parent=1 // pred_region
      _
    $region25: #{tpu_custom_call.1} parent=1 // pred_fallthru
      _
    // Predicated region
    $region26: #{tpu_custom_call.1} parent=1 // pred_check
      _
    $region27: #{tpu_custom_call.1} parent=1 // pred_check_branch
      %102 = sbr.rel (0) target = $region29
    $region28: #{tpu_custom_call.1} parent=1 // pred_region
      %s104 = ssub.s32 16, 16
      %105 = vsyncadd [#allocation6], %s104
      %s107 = sshll.u32 [#allocation7], 4
      %s108 = int_to_ptr.vmem [resolvable:$true] %s107
      %110 = dma.hbm_to_vmem [thread:$0]  %s13, 16, %s108, [#allocation6]
    $region29: #{tpu_custom_call.1} parent=1 // pred_fallthru
      _
    // Predicated region
    $region30: #{tpu_custom_call.1} parent=1 // pred_check
      _
    $region31: #{tpu_custom_call.1} parent=1 // pred_check_branch
      %112 = sbr.rel (0) target = $region33
    $region32: #{tpu_custom_call.1} parent=1 // pred_region
      _
    $region33: #{tpu_custom_call.1} parent=1 // pred_fallthru
      _
    // Predicated region
    $region34: #{tpu_custom_call.1} parent=1 // pred_check
      _
    $region35: #{tpu_custom_call.1} parent=1 // pred_check_branch
      %114 = sbr.rel (0) target = $region37
    $region36: #{tpu_custom_call.1} parent=1 // pred_region
      %s116 = ssub.s32 16, 16
      %117 = vsyncadd [#allocation9], %s116
      %s119 = sshll.u32 [#allocation8], 4
      %s120 = int_to_ptr.vmem [resolvable:$true] %s119
      %122 = dma.hbm_to_vmem [thread:$0]  %s17, 16, %s120, [#allocation9]
    $region37: #{tpu_custom_call.1} parent=1 // pred_fallthru
      _
    // Predicated region
    $region38: #{tpu_custom_call.1} parent=1 // pred_check
      _
    $region39: #{tpu_custom_call.1} parent=1 // pred_check_branch
      %124 = sbr.rel (0) target = $region41
    $region40: #{tpu_custom_call.1} parent=1 // pred_region
      %s126 = ssub.s32 128, 128
      %127 = vsyncadd [#allocation9], %s126
      %s128 = sshll.u32 [#allocation10], 4
      %s129 = int_to_ptr.vmem [resolvable:$true] %s128
      %134 = dma.hbm_to_vmem [thread:$0]  %s19, 128, %s129, [#allocation9], 64, 64, 4
    $region41: #{tpu_custom_call.1} parent=1 // pred_fallthru
      _
    // Predicated region
    $region42: #{tpu_custom_call.1} parent=1 // pred_check
      _
    $region43: #{tpu_custom_call.1} parent=1 // pred_check_branch
      %136 = sbr.rel (0) target = $region45
    $region44: #{tpu_custom_call.1} parent=1 // pred_region
      %s138 = ssub.s32 16, 16
      %139 = vsyncadd [#allocation12], %s138
      %s141 = sshll.u32 [#allocation11], 4
      %s142 = int_to_ptr.vmem [resolvable:$true] %s141
      %144 = dma.hbm_to_vmem [thread:$0]  %s21, 16, %s142, [#allocation12]
    $region45: #{tpu_custom_call.1} parent=1 // pred_fallthru
      _
    // Predicated region
    $region46: #{tpu_custom_call.1} parent=1 // pred_check
      _
    $region47: #{tpu_custom_call.1} parent=1 // pred_check_branch
      %146 = sbr.rel (0) target = $region49
    $region48: #{tpu_custom_call.1} parent=1 // pred_region
      _
    $region49: #{tpu_custom_call.1} parent=1 // pred_fallthru
      _
    // Predicated region
    $region50: #{tpu_custom_call.1} parent=1 // pred_check
      _
    $region51: #{tpu_custom_call.1} parent=1 // pred_check_branch
      %148 = sbr.rel (0) target = $region53
    $region52: #{tpu_custom_call.1} parent=1 // pred_region
      %s150 = ssub.s32 16, 16
      %151 = vsyncadd [#allocation12], %s150
      %s153 = sshll.u32 [#allocation13], 4
      %s154 = int_to_ptr.vmem [resolvable:$true] %s153
      %156 = dma.hbm_to_vmem [thread:$0]  %s25, 16, %s154, [#allocation12]
    $region53: #{tpu_custom_call.1} parent=1 // pred_fallthru
      _
    // Predicated region
    $region54: #{tpu_custom_call.1} parent=1 // pred_check
      _
    $region55: #{tpu_custom_call.1} parent=1 // pred_check_branch
      %158 = sbr.rel (0) target = $region57
    $region56: #{tpu_custom_call.1} parent=1 // pred_region
      _
    $region57: #{tpu_custom_call.1} parent=1 // pred_fallthru
      _
    // Predicated region
    $region58: #{tpu_custom_call.1} parent=1 // pred_check
      _
    $region59: #{tpu_custom_call.1} parent=1 // pred_check_branch
      %160 = sbr.rel (0) target = $region61
    $region60: #{tpu_custom_call.1} parent=1 // pred_region
      %s162 = ssub.s32 16, 16
      %163 = vsyncadd [#allocation15], %s162
      %s165 = sshll.u32 [#allocation14], 4
      %s166 = int_to_ptr.vmem [resolvable:$true] %s165
      %168 = dma.hbm_to_vmem [thread:$0]  %s29, 16, %s166, [#allocation15]
    $region61: #{tpu_custom_call.1} parent=1 // pred_fallthru
      _
    // Predicated region
    $region62: #{tpu_custom_call.1} parent=1 // pred_check
      _
    $region63: #{tpu_custom_call.1} parent=1 // pred_check_branch
      %170 = sbr.rel (0) target = $region65
    $region64: #{tpu_custom_call.1} parent=1 // pred_region
      _
    $region65: #{tpu_custom_call.1} parent=1 // pred_fallthru
      _
    // Predicated region
    $region66: #{tpu_custom_call.1} parent=1 // pred_check
      _
    $region67: #{tpu_custom_call.1} parent=1 // pred_check_branch
      %172 = sbr.rel (0) target = $region69
    $region68: #{tpu_custom_call.1} parent=1 // pred_region
      %s174 = ssub.s32 16, 16
      %175 = vsyncadd [#allocation15], %s174
      %s177 = sshll.u32 [#allocation16], 4
      %s178 = int_to_ptr.vmem [resolvable:$true] %s177
      %180 = dma.hbm_to_vmem [thread:$0]  %s33, 16, %s178, [#allocation15]
    $region69: #{tpu_custom_call.1} parent=1 // pred_fallthru
      _
    // Predicated region
    $region70: #{tpu_custom_call.1} parent=1 // pred_check
      _
    $region71: #{tpu_custom_call.1} parent=1 // pred_check_branch
      %182 = sbr.rel (0) target = $region73
    $region72: #{tpu_custom_call.1} parent=1 // pred_region
      %s184 = ssub.s32 128, 128
      %185 = vsyncadd [#allocation18], %s184
      %s186 = sshll.u32 [#allocation17], 4
      %s187 = int_to_ptr.vmem [resolvable:$true] %s186
      %192 = dma.hbm_to_vmem [thread:$0]  %s35, 128, %s187, [#allocation18], 64, 64, 4
    $region73: #{tpu_custom_call.1} parent=1 // pred_fallthru
      _
    // Predicated region
    $region74: #{tpu_custom_call.1} parent=1 // pred_check
      _
    $region75: #{tpu_custom_call.1} parent=1 // pred_check_branch
      %194 = sbr.rel (0) target = $region77
    $region76: #{tpu_custom_call.1} parent=1 // pred_region
      %s196 = ssub.s32 16, 16
      %197 = vsyncadd [#allocation18], %s196
      %s199 = sshll.u32 [#allocation19], 4
      %s200 = int_to_ptr.vmem [resolvable:$true] %s199
      %202 = dma.hbm_to_vmem [thread:$0]  %s37, 16, %s200, [#allocation18]
    $region77: #{tpu_custom_call.1} parent=1 // pred_fallthru
      _
    // Predicated region
    $region78: #{tpu_custom_call.1} parent=1 // pred_check
      _
    $region79: #{tpu_custom_call.1} parent=1 // pred_check_branch
      %204 = sbr.rel (0) target = $region81
    $region80: #{tpu_custom_call.1} parent=1 // pred_region
      _
    $region81: #{tpu_custom_call.1} parent=1 // pred_fallthru
      _
    // Predicated region
    $region82: #{tpu_custom_call.1} parent=1 // pred_check
      _
    $region83: #{tpu_custom_call.1} parent=1 // pred_check_branch
      %206 = sbr.rel (0) target = $region85
    $region84: #{tpu_custom_call.1} parent=1 // pred_region
      %s208 = ssub.s32 16, 16
      %209 = vsyncadd [#allocation21], %s208
      %s211 = sshll.u32 [#allocation20], 4
      %s212 = int_to_ptr.vmem [resolvable:$true] %s211
      %214 = dma.hbm_to_vmem [thread:$0]  %s41, 16, %s212, [#allocation21]
    $region85: #{tpu_custom_call.1} parent=1 // pred_fallthru
      _
    // Predicated region
    $region86: #{tpu_custom_call.1} parent=1 // pred_check
      _
    $region87: #{tpu_custom_call.1} parent=1 // pred_check_branch
      %216 = sbr.rel (0) target = $region89
    $region88: #{tpu_custom_call.1} parent=1 // pred_region
      _
    $region89: #{tpu_custom_call.1} parent=1 // pred_fallthru
      _
    // Predicated region
    $region90: #{tpu_custom_call.1} parent=1 // pred_check
      _
    $region91: #{tpu_custom_call.1} parent=1 // pred_check_branch
      %218 = sbr.rel (0) target = $region93
    $region92: #{tpu_custom_call.1} parent=1 // pred_region
      %s220 = ssub.s32 16, 16
      %221 = vsyncadd [#allocation21], %s220
      %s223 = sshll.u32 [#allocation22], 4
      %s224 = int_to_ptr.vmem [resolvable:$true] %s223
      %226 = dma.hbm_to_vmem [thread:$0]  %s45, 16, %s224, [#allocation21]
    $region93: #{tpu_custom_call.1} parent=1 // pred_fallthru
      _
    // Predicated region
    $region94: #{tpu_custom_call.1} parent=1 // pred_check
      _
    $region95: #{tpu_custom_call.1} parent=1 // pred_check_branch
      %228 = sbr.rel (0) target = $region97
    $region96: #{tpu_custom_call.1} parent=1 // pred_region
      _
    $region97: #{tpu_custom_call.1} parent=1 // pred_fallthru
      _
    // Predicated region
    $region98: #{tpu_custom_call.1} parent=1 // pred_check
      _
    $region99: #{tpu_custom_call.1} parent=1 // pred_check_branch
      %230 = sbr.rel (0) target = $region101
    $region100: #{tpu_custom_call.1} parent=1 // pred_region
      _
    $region101: #{tpu_custom_call.1} parent=1 // pred_fallthru
      _
    // Predicated region
    $region102: #{tpu_custom_call.1} parent=1 // pred_check
      _
    $region103: #{tpu_custom_call.1} parent=1 // pred_check_branch
      %232 = sbr.rel (0) target = $region105
    $region104: #{tpu_custom_call.1} parent=1 // pred_region
      %s234 = ssub.s32 256, 256
      %235 = vsyncadd [#allocation24], %s234
      %s236 = sshll.u32 [#allocation23], 4
      %s237 = int_to_ptr.vmem [resolvable:$true] %s236
      %242 = dma.hbm_to_vmem [thread:$0]  %s51, 256, %s237, [#allocation24], 64, 64, 4
    $region105: #{tpu_custom_call.1} parent=1 // pred_fallthru
      _
    // Predicated region
    $region106: #{tpu_custom_call.1} parent=1 // pred_check
      _
    $region107: #{tpu_custom_call.1} parent=1 // pred_check_branch
      %244 = sbr.rel (0) target = $region109
    $region108: #{tpu_custom_call.1} parent=1 // pred_region
      _
    $region109: #{tpu_custom_call.1} parent=1 // pred_fallthru
      _
    // Predicated region
    $region110: #{tpu_custom_call.1} parent=1 // pred_check
      _
    $region111: #{tpu_custom_call.1} parent=1 // pred_check_branch
      %246 = sbr.rel (0) target = $region113
    $region112: #{tpu_custom_call.1} parent=1 // pred_region
      _
    $region113: #{tpu_custom_call.1} parent=1 // pred_fallthru
      _
    // Predicated region
    $region114: #{tpu_custom_call.1} parent=1 // pred_check
      _
    $region115: #{tpu_custom_call.1} parent=1 // pred_check_branch
      %248 = sbr.rel (0) target = $region117
    $region116: #{tpu_custom_call.1} parent=1 // pred_region
      _
    $region117: #{tpu_custom_call.1} parent=1 // pred_fallthru
      _
    // Predicated region
    $region118: #{tpu_custom_call.1} parent=1 // pred_check
      _
    $region119: #{tpu_custom_call.1} parent=1 // pred_check_branch
      %250 = sbr.rel (0) target = $region121
    $region120: #{tpu_custom_call.1} parent=1 // pred_region
      %251 = dma.done [#allocation3], 16
    $region121: #{tpu_custom_call.1} parent=1 // pred_fallthru
      _
    // Predicated region
    $region122: #{tpu_custom_call.1} parent=1 // pred_check
      _
    $region123: #{tpu_custom_call.1} parent=1 // pred_check_branch
      %253 = sbr.rel (0) target = $region125
    $region124: #{tpu_custom_call.1} parent=1 // pred_region
      %254 = dma.done [#allocation6], 16
    $region125: #{tpu_custom_call.1} parent=1 // pred_fallthru
      _
    // Predicated region
    $region126: #{tpu_custom_call.1} parent=1 // pred_check
      _
    $region127: #{tpu_custom_call.1} parent=1 // pred_check_branch
      %256 = sbr.rel (0) target = $region129
    $region128: #{tpu_custom_call.1} parent=1 // pred_region
      %257 = dma.done [#allocation6], 16
    $region129: #{tpu_custom_call.1} parent=1 // pred_fallthru
      _
    // Predicated region
    $region130: #{tpu_custom_call.1} parent=1 // pred_check
      _
    $region131: #{tpu_custom_call.1} parent=1 // pred_check_branch
      %259 = sbr.rel (0) target = $region133
    $region132: #{tpu_custom_call.1} parent=1 // pred_region
      %260 = dma.done [#allocation9], 16
    $region133: #{tpu_custom_call.1} parent=1 // pred_fallthru
      _
    // Predicated region
    $region134: #{tpu_custom_call.1} parent=1 // pred_check
      _
    $region135: #{tpu_custom_call.1} parent=1 // pred_check_branch
      %262 = sbr.rel (0) target = $region137
    $region136: #{tpu_custom_call.1} parent=1 // pred_region
      %263 = dma.done [#allocation9], 128
    $region137: #{tpu_custom_call.1} parent=1 // pred_fallthru
      _
    // Predicated region
    $region138: #{tpu_custom_call.1} parent=1 // pred_check
      _
    $region139: #{tpu_custom_call.1} parent=1 // pred_check_branch
      %265 = sbr.rel (0) target = $region141
    $region140: #{tpu_custom_call.1} parent=1 // pred_region
      %266 = dma.done [#allocation12], 16
    $region141: #{tpu_custom_call.1} parent=1 // pred_fallthru
      _
    // Predicated region
    $region142: #{tpu_custom_call.1} parent=1 // pred_check
      _
    $region143: #{tpu_custom_call.1} parent=1 // pred_check_branch
      %268 = sbr.rel (0) target = $region145
    $region144: #{tpu_custom_call.1} parent=1 // pred_region
      %269 = dma.done [#allocation12], 16
    $region145: #{tpu_custom_call.1} parent=1 // pred_fallthru
      _
    // Predicated region
    $region146: #{tpu_custom_call.1} parent=1 // pred_check
      _
    $region147: #{tpu_custom_call.1} parent=1 // pred_check_branch
      %271 = sbr.rel (0) target = $region149
    $region148: #{tpu_custom_call.1} parent=1 // pred_region
      %272 = dma.done [#allocation15], 16
    $region149: #{tpu_custom_call.1} parent=1 // pred_fallthru
      _
    // Predicated region
    $region150: #{tpu_custom_call.1} parent=1 // pred_check
      _
    $region151: #{tpu_custom_call.1} parent=1 // pred_check_branch
      %274 = sbr.rel (0) target = $region153
    $region152: #{tpu_custom_call.1} parent=1 // pred_region
      %275 = dma.done [#allocation15], 16
    $region153: #{tpu_custom_call.1} parent=1 // pred_fallthru
      _
    // Predicated region
    $region154: #{tpu_custom_call.1} parent=1 // pred_check
      _
    $region155: #{tpu_custom_call.1} parent=1 // pred_check_branch
      %277 = sbr.rel (0) target = $region157
    $region156: #{tpu_custom_call.1} parent=1 // pred_region
      %278 = dma.done [#allocation18], 128
    $region157: #{tpu_custom_call.1} parent=1 // pred_fallthru
      _
    // Predicated region
    $region158: #{tpu_custom_call.1} parent=1 // pred_check
      _
    $region159: #{tpu_custom_call.1} parent=1 // pred_check_branch
      %280 = sbr.rel (0) target = $region161
    $region160: #{tpu_custom_call.1} parent=1 // pred_region
      %281 = dma.done [#allocation18], 16
    $region161: #{tpu_custom_call.1} parent=1 // pred_fallthru
      _
    // Predicated region
    $region162: #{tpu_custom_call.1} parent=1 // pred_check
      _
    $region163: #{tpu_custom_call.1} parent=1 // pred_check_branch
      %283 = sbr.rel (0) target = $region165
    $region164: #{tpu_custom_call.1} parent=1 // pred_region
      %284 = dma.done [#allocation21], 16
    $region165: #{tpu_custom_call.1} parent=1 // pred_fallthru
      _
    // Predicated region
    $region166: #{tpu_custom_call.1} parent=1 // pred_check
      _
    $region167: #{tpu_custom_call.1} parent=1 // pred_check_branch
      %286 = sbr.rel (0) target = $region169
    $region168: #{tpu_custom_call.1} parent=1 // pred_region
      %287 = dma.done [#allocation21], 16
    $region169: #{tpu_custom_call.1} parent=1 // pred_fallthru
      _
    // Predicated region
    $region170: #{tpu_custom_call.1} parent=1 // pred_check
      _
    $region171: #{tpu_custom_call.1} parent=1 // pred_check_branch
      %289 = sbr.rel (0) target = $region173
    $region172: #{tpu_custom_call.1} parent=1 // pred_region
      %290 = dma.done [#allocation24], 256
    $region173: #{tpu_custom_call.1} parent=1 // pred_fallthru
      _
    %v292 = vld [vmem:[%s3] sm:$0xf]
    %v293 = vld [vmem:[%s3 + $0x4] sm:$0xf]
    %v294 = vld [vmem:[%s3 + $0x8] sm:$0xf]
    %v295 = vld [vmem:[%s3 + $0xc] sm:$0xf]
    %v296 = vld [vmem:[%s3 + $0x10] sm:$0xf]
    %v297 = vld [vmem:[%s3 + $0x14] sm:$0xf]
    %v298 = vld [vmem:[%s3 + $0x18] sm:$0xf]
    %v299 = vld [vmem:[%s3 + $0x1c] sm:$0xf]
    %v300 = vld [vmem:[%s3 + $0x20] sm:$0xf]
    %v301 = vld [vmem:[%s3 + $0x24] sm:$0xf]
    %v302 = vld [vmem:[%s3 + $0x28] sm:$0xf]
    %v303 = vld [vmem:[%s3 + $0x2c] sm:$0xf]
    %v304 = vld [vmem:[%s3 + $0x30] sm:$0xf]
    %v305 = vld [vmem:[%s3 + $0x34] sm:$0xf]
    %v306 = vld [vmem:[#allocation2] sm:$0x1]
    %v307 = vld [vmem:[%s7] sm:$0xf]
    %v308 = vld [vmem:[%s7 + $0x4] sm:$0xf]
    %v309 = vld [vmem:[%s7 + $0x8] sm:$0xf]
    %v310 = vld [vmem:[%s7 + $0xc] sm:$0xf]
    %v311 = vld [vmem:[%s7 + $0x10] sm:$0xf]
    %v312 = vld [vmem:[%s7 + $0x14] sm:$0xf]
    %v313 = vld [vmem:[%s7 + $0x18] sm:$0xf]
    %v314 = vld [vmem:[%s7 + $0x1c] sm:$0xf]
    %v315 = vld [vmem:[#allocation5] sm:$0x1]
    %v316 = vld [vmem:[%s11] sm:$0xf]
    %v317 = vld [vmem:[%s11 + $0x4] sm:$0xf]
    %v318 = vld [vmem:[%s11 + $0x8] sm:$0xf]
    %v319 = vld [vmem:[%s11 + $0xc] sm:$0xf]
    %v320 = vld [vmem:[%s11 + $0x10] sm:$0xf]
    %v321 = vld [vmem:[%s11 + $0x14] sm:$0xf]
    %v322 = vld [vmem:[%s11 + $0x18] sm:$0xf]
    %v323 = vld [vmem:[%s11 + $0x1c] sm:$0xf]
    %v324 = vld [vmem:[#allocation7] sm:$0x1]
    %v325 = vld [vmem:[%s15] sm:$0xf]
    %v326 = vld [vmem:[%s15 + $0x4] sm:$0xf]
    %v327 = vld [vmem:[%s15 + $0x8] sm:$0xf]
    %v328 = vld [vmem:[%s15 + $0xc] sm:$0xf]
    %v329 = vld [vmem:[%s15 + $0x10] sm:$0xf]
    %v330 = vld [vmem:[%s15 + $0x14] sm:$0xf]
    %v331 = vld [vmem:[#allocation8] sm:$0x1]
    %v332 = vld [vmem:[#allocation10] sm:$0xf]
    %v333 = vld [vmem:[#allocation10 + $0x4] sm:$0xf]
    %v334 = vld [vmem:[#allocation11] sm:$0x1]
    %v335 = vld [vmem:[%s23] sm:$0xf]
    %v336 = vld [vmem:[%s23 + $0x4] sm:$0xf]
    %v337 = vld [vmem:[%s23 + $0x8] sm:$0xf]
    %v338 = vld [vmem:[%s23 + $0xc] sm:$0xf]
    %v339 = vld [vmem:[%s23 + $0x10] sm:$0xf]
    %v340 = vld [vmem:[%s23 + $0x14] sm:$0xf]
    %v341 = vld [vmem:[%s23 + $0x18] sm:$0xf]
    %v342 = vld [vmem:[%s23 + $0x1c] sm:$0xf]
    %v343 = vld [vmem:[#allocation13] sm:$0x1]
    %v344 = vld [vmem:[%s27] sm:$0xf]
    %v345 = vld [vmem:[%s27 + $0x4] sm:$0xf]
    %v346 = vld [vmem:[%s27 + $0x8] sm:$0xf]
    %v347 = vld [vmem:[%s27 + $0xc] sm:$0xf]
    %v348 = vld [vmem:[%s27 + $0x10] sm:$0xf]
    %v349 = vld [vmem:[%s27 + $0x14] sm:$0xf]
    %v350 = vld [vmem:[%s27 + $0x18] sm:$0xf]
    %v351 = vld [vmem:[%s27 + $0x1c] sm:$0xf]
    %v352 = vld [vmem:[#allocation14] sm:$0x1]
    %v353 = vld [vmem:[%s31] sm:$0xf]
    %v354 = vld [vmem:[%s31 + $0x4] sm:$0xf]
    %v355 = vld [vmem:[%s31 + $0x8] sm:$0xf]
    %v356 = vld [vmem:[%s31 + $0xc] sm:$0xf]
    %v357 = vld [vmem:[%s31 + $0x10] sm:$0xf]
    %v358 = vld [vmem:[%s31 + $0x14] sm:$0xf]
    %v359 = vld [vmem:[#allocation16] sm:$0x1]
    %v360 = vld [vmem:[#allocation17] sm:$0xf]
    %v361 = vld [vmem:[#allocation17 + $0x4] sm:$0xf]
    %v362 = vld [vmem:[#allocation19] sm:$0x1]
    %v363 = vld [vmem:[%s39] sm:$0xf]
    %v364 = vld [vmem:[%s39 + $0x4] sm:$0xf]
    %v365 = vld [vmem:[%s39 + $0x8] sm:$0xf]
    %v366 = vld [vmem:[%s39 + $0xc] sm:$0xf]
    %v367 = vld [vmem:[%s39 + $0x10] sm:$0xf]
    %v368 = vld [vmem:[%s39 + $0x14] sm:$0xf]
    %v369 = vld [vmem:[%s39 + $0x18] sm:$0xf]
    %v370 = vld [vmem:[%s39 + $0x1c] sm:$0xf]
    %v371 = vld [vmem:[#allocation20] sm:$0x1]
    %v372 = vld [vmem:[%s43] sm:$0xf]
    %v373 = vld [vmem:[%s43 + $0x4] sm:$0xf]
    %v374 = vld [vmem:[%s43 + $0x8] sm:$0xf]
    %v375 = vld [vmem:[%s43 + $0xc] sm:$0xf]
    %v376 = vld [vmem:[%s43 + $0x10] sm:$0xf]
    %v377 = vld [vmem:[%s43 + $0x14] sm:$0xf]
    %v378 = vld [vmem:[%s43 + $0x18] sm:$0xf]
    %v379 = vld [vmem:[%s43 + $0x1c] sm:$0xf]
    %v380 = vld [vmem:[#allocation22] sm:$0x1]
    %v381 = vld [vmem:[%s47] sm:$0xf]
    %v382 = vld [vmem:[%s47 + $0x4] sm:$0xf]
    %v383 = vld [vmem:[%s47 + $0x8] sm:$0xf]
    %v384 = vld [vmem:[%s47 + $0xc] sm:$0xf]
    %v385 = vld [vmem:[%s47 + $0x10] sm:$0xf]
    %v386 = vld [vmem:[%s47 + $0x14] sm:$0xf]
    %v387 = vld [vmem:[%s47 + $0x18] sm:$0xf]
    %v388 = vld [vmem:[%s47 + $0x1c] sm:$0xf]
    %v389 = vld [vmem:[%s47 + $0x20] sm:$0xf]
    %v390 = vld [vmem:[%s47 + $0x24] sm:$0xf]
    %v391 = vld [vmem:[%s47 + $0x28] sm:$0xf]
    %v392 = vld [vmem:[%s47 + $0x2c] sm:$0xf]
    %v393 = vld [vmem:[%s49] sm:$0x1]
    %v394 = vld [vmem:[#allocation23] sm:$0xf]
    %v395 = vld [vmem:[#allocation23 + $0x4] sm:$0xf]
    %v396 = vld [vmem:[#allocation23 + $0x8] sm:$0xf]
    %v397 = vld [vmem:[#allocation23 + $0xc] sm:$0xf]
    %v398 = vld [vmem:[%s53] sm:$0x1]
    %v399 = vld [vmem:[%s55] sm:$0xff]
    %v400 = vld [vmem:[%s55 + $0x8] sm:$0xff]
    %v401 = vld [vmem:[%s55 + $0x10] sm:$0xff]
    %v402 = vld [vmem:[%s55 + $0x18] sm:$0xff]
    %v403 = vld [vmem:[%s55 + $0x20] sm:$0xff]
    %v404 = vld [vmem:[%s55 + $0x28] sm:$0xff]
    %v405 = vld [vmem:[%s55 + $0x30] sm:$0xff]
    %v406 = vld [vmem:[%s55 + $0x38] sm:$0xff]
    %v407 = vld [vmem:[%s55 + $0x40] sm:$0xff]
    %v408 = vld [vmem:[%s55 + $0x48] sm:$0xff]
    %v409 = vld [vmem:[%s55 + $0x50] sm:$0xff]
    %v410 = vld [vmem:[%s55 + $0x58] sm:$0xff]
    %v411 = vld [vmem:[%s55 + $0x60] sm:$0xff]
    %v412 = vld [vmem:[%s55 + $0x68] sm:$0xff]
    %v413 = vld [vmem:[%s55 + $0x70] sm:$0xff]
    %v414 = vld [vmem:[%s55 + $0x78] sm:$0xff]
    %v415 = vld [vmem:[%s57] sm:$0x1]
    %v416 = vld [vmem:[%s1] sm:$0xff]
    %v417 = vld [vmem:[%s1 + $0x8] sm:$0xff]
    %v418 = vld [vmem:[%s1 + $0x10] sm:$0xff]
    %v419 = vld [vmem:[%s1 + $0x18] sm:$0xff]
    %vm424 = vcmask 1042432
    %v425 = vrot.slane %v416, 5
    %v426 = vrot.slane %v417, 5
    %v427 = vsel %vm424, %v425, %v426
    %v428 = vrot.slane %v418, 5
    %v429 = vrot.slane %v419, 5
    %v430 = vsel %vm424, %v428, %v429
    %v437 = vsel %vm424, 0.0, %v425
    %v438 = vsel %vm424, 0.0, %v428
    %v439 = vsel %vm424, %v426, 0.0
    %v440 = vsel %vm424, %v429, 0.0
    %v441 = vpack.c.bf16 %v427, %v437
    %v442 = vpack.c.bf16 %v430, %v438
    %vm447 = vcmask 1046528
    %v448 = vrot.slane %v437, 1
    %v449 = vrot.slane %v427, 1
    %v450 = vsel %vm447, %v448, %v449
    %v451 = vrot.slane %v439, 1
    %v452 = vsel %vm447, %v449, %v451
    %v453 = vrot.slane %v438, 1
    %v454 = vrot.slane %v430, 1
    %v455 = vsel %vm447, %v453, %v454
    %v456 = vrot.slane %v440, 1
    %v457 = vsel %vm447, %v454, %v456
    %v462 = vpack.c.bf16 %v452, %v450
    %v463 = vpack.c.bf16 %v457, %v455
    %v466 = vunpack.c.l.b16 %v294
    %v467 = vunpack.c.l.b16 %v295
    %v468 = vpack.c.b16 %v467, %v466
    %vm470 = vcmask 130048
    %v472 = vsel %vm470, %v462, 0
    %v475 = vsel %vm470, %v463, 0
    %477 = vmatprep.subr.bf16.mxu0 0
    %478 = vmatpush1.bf16.msra.mxu0 0
    %479 = vmatprep.subr.bf16.mxu0 0
    %480 = vmatpush1.bf16.msra.mxu0 0
    %481 = vmatprep.subr.bf16.mxu0 0
    %482 = vmatpush1.bf16.msra.mxu0 0
    %483 = vmatprep.subr.bf16.mxu0 0
    %484 = vmatpush1.bf16.msra.mxu0 0
    %485 = vmatprep.subr.bf16.mxu0 0
    %486 = vmatpush1.bf16.msra.mxu0 0
    %487 = vmatprep.subr.bf16.mxu0 0
    %488 = vmatpush1.bf16.msra.mxu0 0
    %489 = vmatprep.subr.bf16.mxu0 0
    %490 = vmatpush1.bf16.msra.mxu0 0
    %491 = vmatprep.subr.bf16.mxu0 0
    %492 = vmatpush1.bf16.msra.mxu0 %v468
    %493 = vmatprep.subr.bf16.mxu0 0
    %494 = vmatpush2.bf16.msra.mxu0 0
    %495 = vmatprep.subr.bf16.mxu0 0
    %496 = vmatpush2.bf16.msra.mxu0 0
    %497 = vmatprep.subr.bf16.mxu0 0
    %498 = vmatpush2.bf16.msra.mxu0 0
    %499 = vmatprep.subr.bf16.mxu0 0
    %500 = vmatpush2.bf16.msra.mxu0 0
    %501 = vmatprep.subr.bf16.mxu0 0
    %502 = vmatpush2.bf16.msra.mxu0 0
    %503 = vmatprep.subr.bf16.mxu0 0
    %504 = vmatpush2.bf16.msra.mxu0 0
    %505 = vmatprep.subr.bf16.mxu0 0
    %506 = vmatpush2.bf16.msra.mxu0 0
    %507 = vmatprep.subr.bf16.mxu0 0
    %508 = vmatpush2.bf16.msra.mxu0 0
    %509 = vmatprep.mubr.bf16.mxu0 0
    %510 = vmatmul.mubr.bf16.gmra.mxu0 %v472
    %v511 = vpop.f32.mrf.mxu0
    %v512 = vadd.f32 0.0, %v511
    %v513 = vpop.f32.mrf.mxu0
    %v514 = vpop.f32.mrf.mxu0
    %v515 = vadd.f32 0.0, %v514
    %v516 = vpop.f32.mrf.mxu0
    %517 = vmatprep.mubr.bf16.mxu0 0
    %518 = vmatmul.mubr.bf16.gmra.mxu0 %v475
    %v519 = vpop.f32.mrf.mxu0
    %v520 = vadd.f32 0.0, %v519
    %v521 = vpop.f32.mrf.mxu0
    %v522 = vpop.f32.mrf.mxu0
    %v523 = vadd.f32 0.0, %v522
    %v524 = vpop.f32.mrf.mxu0
    %525 = vdwg.mxu0
    %v528 = vunpack.c.l.b16 %v292
    %v529 = vunpack.c.l.b16 %v293
    %v530 = vpack.c.b16 %v529, %v528
    %v533 = vsel %vm470, %v441, 0
    %v536 = vsel %vm470, %v442, 0
    %538 = vmatprep.subr.bf16.mxu0 0
    %539 = vmatpush1.bf16.msra.mxu0 0
    %540 = vmatprep.subr.bf16.mxu0 0
    %541 = vmatpush1.bf16.msra.mxu0 0
    %542 = vmatprep.subr.bf16.mxu0 0
    %543 = vmatpush1.bf16.msra.mxu0 0
    %544 = vmatprep.subr.bf16.mxu0 0
    %545 = vmatpush1.bf16.msra.mxu0 0
    %546 = vmatprep.subr.bf16.mxu0 0
    %547 = vmatpush1.bf16.msra.mxu0 0
    %548 = vmatprep.subr.bf16.mxu0 0
    %549 = vmatpush1.bf16.msra.mxu0 0
    %550 = vmatprep.subr.bf16.mxu0 0
    %551 = vmatpush1.bf16.msra.mxu0 0
    %552 = vmatprep.subr.bf16.mxu0 0
    %553 = vmatpush1.bf16.msra.mxu0 %v530
    %554 = vmatprep.subr.bf16.mxu0 0
    %555 = vmatpush2.bf16.msra.mxu0 0
    %556 = vmatprep.subr.bf16.mxu0 0
    %557 = vmatpush2.bf16.msra.mxu0 0
    %558 = vmatprep.subr.bf16.mxu0 0
    %559 = vmatpush2.bf16.msra.mxu0 0
    %560 = vmatprep.subr.bf16.mxu0 0
    %561 = vmatpush2.bf16.msra.mxu0 0
    %562 = vmatprep.subr.bf16.mxu0 0
    %563 = vmatpush2.bf16.msra.mxu0 0
    %564 = vmatprep.subr.bf16.mxu0 0
    %565 = vmatpush2.bf16.msra.mxu0 0
    %566 = vmatprep.subr.bf16.mxu0 0
    %567 = vmatpush2.bf16.msra.mxu0 0
    %568 = vmatprep.subr.bf16.mxu0 0
    %569 = vmatpush2.bf16.msra.mxu0 0
    %570 = vmatprep.mubr.bf16.mxu0 0
    %571 = vmatmul.mubr.bf16.gmra.mxu0 %v533
    %v572 = vpop.f32.mrf.mxu0
    %v573 = vadd.f32 %v512, %v572
    %v574 = vpop.f32.mrf.mxu0
    %v575 = vpop.f32.mrf.mxu0
    %v576 = vadd.f32 %v515, %v575
    %v577 = vpop.f32.mrf.mxu0
    %578 = vmatprep.mubr.bf16.mxu0 0
    %579 = vmatmul.mubr.bf16.gmra.mxu0 %v536
    %v580 = vpop.f32.mrf.mxu0
    %v581 = vadd.f32 %v520, %v580
    %v582 = vpop.f32.mrf.mxu0
    %v583 = vpop.f32.mrf.mxu0
    %v584 = vadd.f32 %v523, %v583
    %v585 = vpop.f32.mrf.mxu0
    %586 = vdwg.mxu0
    %vm587 = vcmask 1045504
    %v588 = vrot.slane %v437, 2
    %v589 = vrot.slane %v427, 2
    %v590 = vsel %vm587, %v588, %v589
    %v591 = vrot.slane %v439, 2
    %v592 = vsel %vm587, %v589, %v591
    %v593 = vrot.slane %v438, 2
    %v594 = vrot.slane %v430, 2
    %v595 = vsel %vm587, %v593, %v594
    %v596 = vrot.slane %v440, 2
    %v597 = vsel %vm587, %v594, %v596
    %v602 = vpack.c.bf16 %v592, %v590
    %v603 = vpack.c.bf16 %v597, %v595
    %v606 = vunpack.c.l.b16 %v296
    %v607 = vunpack.c.l.b16 %v297
    %v608 = vpack.c.b16 %v607, %v606
    %v611 = vsel %vm470, %v602, 0
    %v614 = vsel %vm470, %v603, 0
    %616 = vmatprep.subr.bf16.mxu0 0
    %617 = vmatpush1.bf16.msra.mxu0 0
    %618 = vmatprep.subr.bf16.mxu0 0
    %619 = vmatpush1.bf16.msra.mxu0 0
    %620 = vmatprep.subr.bf16.mxu0 0
    %621 = vmatpush1.bf16.msra.mxu0 0
    %622 = vmatprep.subr.bf16.mxu0 0
    %623 = vmatpush1.bf16.msra.mxu0 0
    %624 = vmatprep.subr.bf16.mxu0 0
    %625 = vmatpush1.bf16.msra.mxu0 0
    %626 = vmatprep.subr.bf16.mxu0 0
    %627 = vmatpush1.bf16.msra.mxu0 0
    %628 = vmatprep.subr.bf16.mxu0 0
    %629 = vmatpush1.bf16.msra.mxu0 0
    %630 = vmatprep.subr.bf16.mxu0 0
    %631 = vmatpush1.bf16.msra.mxu0 %v608
    %632 = vmatprep.subr.bf16.mxu0 0
    %633 = vmatpush2.bf16.msra.mxu0 0
    %634 = vmatprep.subr.bf16.mxu0 0
    %635 = vmatpush2.bf16.msra.mxu0 0
    %636 = vmatprep.subr.bf16.mxu0 0
    %637 = vmatpush2.bf16.msra.mxu0 0
    %638 = vmatprep.subr.bf16.mxu0 0
    %639 = vmatpush2.bf16.msra.mxu0 0
    %640 = vmatprep.subr.bf16.mxu0 0
    %641 = vmatpush2.bf16.msra.mxu0 0
    %642 = vmatprep.subr.bf16.mxu0 0
    %643 = vmatpush2.bf16.msra.mxu0 0
    %644 = vmatprep.subr.bf16.mxu0 0
    %645 = vmatpush2.bf16.msra.mxu0 0
    %646 = vmatprep.subr.bf16.mxu0 0
    %647 = vmatpush2.bf16.msra.mxu0 0
    %648 = vmatprep.mubr.bf16.mxu0 0
    %649 = vmatmul.mubr.bf16.gmra.mxu0 %v611
    %v650 = vpop.f32.mrf.mxu0
    %v651 = vadd.f32 0.0, %v650
    %v652 = vpop.f32.mrf.mxu0
    %v653 = vpop.f32.mrf.mxu0
    %v654 = vadd.f32 0.0, %v653
    %v655 = vpop.f32.mrf.mxu0
    %656 = vmatprep.mubr.bf16.mxu0 0
    %657 = vmatmul.mubr.bf16.gmra.mxu0 %v614
    %v658 = vpop.f32.mrf.mxu0
    %v659 = vadd.f32 0.0, %v658
    %v660 = vpop.f32.mrf.mxu0
    %v661 = vpop.f32.mrf.mxu0
    %v662 = vadd.f32 0.0, %v661
    %v663 = vpop.f32.mrf.mxu0
    %664 = vdwg.mxu0
    %v665 = vadd.f32 %v573, %v651
    %v666 = vadd.f32 %v576, %v654
    %v667 = vadd.f32 %v581, %v659
    %v668 = vadd.f32 %v584, %v662
    %vm669 = vcmask 1044480
    %v670 = vrot.slane %v437, 3
    %v671 = vrot.slane %v427, 3
    %v672 = vsel %vm669, %v670, %v671
    %v673 = vrot.slane %v439, 3
    %v674 = vsel %vm669, %v671, %v673
    %v675 = vrot.slane %v438, 3
    %v676 = vrot.slane %v430, 3
    %v677 = vsel %vm669, %v675, %v676
    %v678 = vrot.slane %v440, 3
    %v679 = vsel %vm669, %v676, %v678
    %v684 = vpack.c.bf16 %v674, %v672
    %v685 = vpack.c.bf16 %v679, %v677
    %v688 = vunpack.c.l.b16 %v298
    %v689 = vunpack.c.l.b16 %v299
    %v690 = vpack.c.b16 %v689, %v688
    %v693 = vsel %vm470, %v684, 0
    %v696 = vsel %vm470, %v685, 0
    %698 = vmatprep.subr.bf16.mxu0 0
    %699 = vmatpush1.bf16.msra.mxu0 0
    %700 = vmatprep.subr.bf16.mxu0 0
    %701 = vmatpush1.bf16.msra.mxu0 0
    %702 = vmatprep.subr.bf16.mxu0 0
    %703 = vmatpush1.bf16.msra.mxu0 0
    %704 = vmatprep.subr.bf16.mxu0 0
    %705 = vmatpush1.bf16.msra.mxu0 0
    %706 = vmatprep.subr.bf16.mxu0 0
    %707 = vmatpush1.bf16.msra.mxu0 0
    %708 = vmatprep.subr.bf16.mxu0 0
    %709 = vmatpush1.bf16.msra.mxu0 0
    %710 = vmatprep.subr.bf16.mxu0 0
    %711 = vmatpush1.bf16.msra.mxu0 0
    %712 = vmatprep.subr.bf16.mxu0 0
    %713 = vmatpush1.bf16.msra.mxu0 %v690
    %714 = vmatprep.subr.bf16.mxu0 0
    %715 = vmatpush2.bf16.msra.mxu0 0
    %716 = vmatprep.subr.bf16.mxu0 0
    %717 = vmatpush2.bf16.msra.mxu0 0
    %718 = vmatprep.subr.bf16.mxu0 0
    %719 = vmatpush2.bf16.msra.mxu0 0
    %720 = vmatprep.subr.bf16.mxu0 0
    %721 = vmatpush2.bf16.msra.mxu0 0
    %722 = vmatprep.subr.bf16.mxu0 0
    %723 = vmatpush2.bf16.msra.mxu0 0
    %724 = vmatprep.subr.bf16.mxu0 0
    %725 = vmatpush2.bf16.msra.mxu0 0
    %726 = vmatprep.subr.bf16.mxu0 0
    %727 = vmatpush2.bf16.msra.mxu0 0
    %728 = vmatprep.subr.bf16.mxu0 0
    %729 = vmatpush2.bf16.msra.mxu0 0
    %730 = vmatprep.mubr.bf16.mxu0 0
    %731 = vmatmul.mubr.bf16.gmra.mxu0 %v693
    %v732 = vpop.f32.mrf.mxu0
    %v733 = vadd.f32 0.0, %v732
    %v734 = vpop.f32.mrf.mxu0
    %v735 = vpop.f32.mrf.mxu0
    %v736 = vadd.f32 0.0, %v735
    %v737 = vpop.f32.mrf.mxu0
    %738 = vmatprep.mubr.bf16.mxu0 0
    %739 = vmatmul.mubr.bf16.gmra.mxu0 %v696
    %v740 = vpop.f32.mrf.mxu0
    %v741 = vadd.f32 0.0, %v740
    %v742 = vpop.f32.mrf.mxu0
    %v743 = vpop.f32.mrf.mxu0
    %v744 = vadd.f32 0.0, %v743
    %v745 = vpop.f32.mrf.mxu0
    %746 = vdwg.mxu0
    %v747 = vadd.f32 %v665, %v733
    %v748 = vadd.f32 %v666, %v736
    %v749 = vadd.f32 %v667, %v741
    %v750 = vadd.f32 %v668, %v744
    %vm751 = vcmask 1043456
    %v752 = vrot.slane %v437, 4
    %v753 = vrot.slane %v427, 4
    %v754 = vsel %vm751, %v752, %v753
    %v755 = vrot.slane %v439, 4
    %v756 = vsel %vm751, %v753, %v755
    %v757 = vrot.slane %v438, 4
    %v758 = vrot.slane %v430, 4
    %v759 = vsel %vm751, %v757, %v758
    %v760 = vrot.slane %v440, 4
    %v761 = vsel %vm751, %v758, %v760
    %v766 = vpack.c.bf16 %v756, %v754
    %v767 = vpack.c.bf16 %v761, %v759
    %v770 = vunpack.c.l.b16 %v300
    %v771 = vunpack.c.l.b16 %v301
    %v772 = vpack.c.b16 %v771, %v770
    %v775 = vsel %vm470, %v766, 0
    %v778 = vsel %vm470, %v767, 0
    %780 = vmatprep.subr.bf16.mxu0 0
    %781 = vmatpush1.bf16.msra.mxu0 0
    %782 = vmatprep.subr.bf16.mxu0 0
    %783 = vmatpush1.bf16.msra.mxu0 0
    %784 = vmatprep.subr.bf16.mxu0 0
    %785 = vmatpush1.bf16.msra.mxu0 0
    %786 = vmatprep.subr.bf16.mxu0 0
    %787 = vmatpush1.bf16.msra.mxu0 0
    %788 = vmatprep.subr.bf16.mxu0 0
    %789 = vmatpush1.bf16.msra.mxu0 0
    %790 = vmatprep.subr.bf16.mxu0 0
    %791 = vmatpush1.bf16.msra.mxu0 0
    %792 = vmatprep.subr.bf16.mxu0 0
    %793 = vmatpush1.bf16.msra.mxu0 0
    %794 = vmatprep.subr.bf16.mxu0 0
    %795 = vmatpush1.bf16.msra.mxu0 %v772
    %796 = vmatprep.subr.bf16.mxu0 0
    %797 = vmatpush2.bf16.msra.mxu0 0
    %798 = vmatprep.subr.bf16.mxu0 0
    %799 = vmatpush2.bf16.msra.mxu0 0
    %800 = vmatprep.subr.bf16.mxu0 0
    %801 = vmatpush2.bf16.msra.mxu0 0
    %802 = vmatprep.subr.bf16.mxu0 0
    %803 = vmatpush2.bf16.msra.mxu0 0
    %804 = vmatprep.subr.bf16.mxu0 0
    %805 = vmatpush2.bf16.msra.mxu0 0
    %806 = vmatprep.subr.bf16.mxu0 0
    %807 = vmatpush2.bf16.msra.mxu0 0
    %808 = vmatprep.subr.bf16.mxu0 0
    %809 = vmatpush2.bf16.msra.mxu0 0
    %810 = vmatprep.subr.bf16.mxu0 0
    %811 = vmatpush2.bf16.msra.mxu0 0
    %812 = vmatprep.mubr.bf16.mxu0 0
    %813 = vmatmul.mubr.bf16.gmra.mxu0 %v775
    %v814 = vpop.f32.mrf.mxu0
    %v815 = vadd.f32 0.0, %v814
    %v816 = vpop.f32.mrf.mxu0
    %v817 = vpop.f32.mrf.mxu0
    %v818 = vadd.f32 0.0, %v817
    %v819 = vpop.f32.mrf.mxu0
    %820 = vmatprep.mubr.bf16.mxu0 0
    %821 = vmatmul.mubr.bf16.gmra.mxu0 %v778
    %v822 = vpop.f32.mrf.mxu0
    %v823 = vadd.f32 0.0, %v822
    %v824 = vpop.f32.mrf.mxu0
    %v825 = vpop.f32.mrf.mxu0
    %v826 = vadd.f32 0.0, %v825
    %v827 = vpop.f32.mrf.mxu0
    %828 = vdwg.mxu0
    %v829 = vadd.f32 %v747, %v815
    %v830 = vadd.f32 %v748, %v818
    %v831 = vadd.f32 %v749, %v823
    %v832 = vadd.f32 %v750, %v826
    %v833 = vrot.slane %v437, 5
    %v834 = vrot.slane %v427, 5
    %v835 = vsel %vm424, %v833, %v834
    %v836 = vrot.slane %v439, 5
    %v837 = vsel %vm424, %v834, %v836
    %v838 = vrot.slane %v438, 5
    %v839 = vrot.slane %v430, 5
    %v840 = vsel %vm424, %v838, %v839
    %v841 = vrot.slane %v440, 5
    %v842 = vsel %vm424, %v839, %v841
    %v847 = vpack.c.bf16 %v837, %v835
    %v848 = vpack.c.bf16 %v842, %v840
    %v851 = vunpack.c.l.b16 %v302
    %v852 = vunpack.c.l.b16 %v303
    %v853 = vpack.c.b16 %v852, %v851
    %v856 = vsel %vm470, %v847, 0
    %v859 = vsel %vm470, %v848, 0
    %861 = vmatprep.subr.bf16.mxu0 0
    %862 = vmatpush1.bf16.msra.mxu0 0
    %863 = vmatprep.subr.bf16.mxu0 0
    %864 = vmatpush1.bf16.msra.mxu0 0
    %865 = vmatprep.subr.bf16.mxu0 0
    %866 = vmatpush1.bf16.msra.mxu0 0
    %867 = vmatprep.subr.bf16.mxu0 0
    %868 = vmatpush1.bf16.msra.mxu0 0
    %869 = vmatprep.subr.bf16.mxu0 0
    %870 = vmatpush1.bf16.msra.mxu0 0
    %871 = vmatprep.subr.bf16.mxu0 0
    %872 = vmatpush1.bf16.msra.mxu0 0
    %873 = vmatprep.subr.bf16.mxu0 0
    %874 = vmatpush1.bf16.msra.mxu0 0
    %875 = vmatprep.subr.bf16.mxu0 0
    %876 = vmatpush1.bf16.msra.mxu0 %v853
    %877 = vmatprep.subr.bf16.mxu0 0
    %878 = vmatpush2.bf16.msra.mxu0 0
    %879 = vmatprep.subr.bf16.mxu0 0
    %880 = vmatpush2.bf16.msra.mxu0 0
    %881 = vmatprep.subr.bf16.mxu0 0
    %882 = vmatpush2.bf16.msra.mxu0 0
    %883 = vmatprep.subr.bf16.mxu0 0
    %884 = vmatpush2.bf16.msra.mxu0 0
    %885 = vmatprep.subr.bf16.mxu0 0
    %886 = vmatpush2.bf16.msra.mxu0 0
    %887 = vmatprep.subr.bf16.mxu0 0
    %888 = vmatpush2.bf16.msra.mxu0 0
    %889 = vmatprep.subr.bf16.mxu0 0
    %890 = vmatpush2.bf16.msra.mxu0 0
    %891 = vmatprep.subr.bf16.mxu0 0
    %892 = vmatpush2.bf16.msra.mxu0 0
    %893 = vmatprep.mubr.bf16.mxu0 0
    %894 = vmatmul.mubr.bf16.gmra.mxu0 %v856
    %v895 = vpop.f32.mrf.mxu0
    %v896 = vadd.f32 0.0, %v895
    %v897 = vpop.f32.mrf.mxu0
    %v898 = vpop.f32.mrf.mxu0
    %v899 = vadd.f32 0.0, %v898
    %v900 = vpop.f32.mrf.mxu0
    %901 = vmatprep.mubr.bf16.mxu0 0
    %902 = vmatmul.mubr.bf16.gmra.mxu0 %v859
    %v903 = vpop.f32.mrf.mxu0
    %v904 = vadd.f32 0.0, %v903
    %v905 = vpop.f32.mrf.mxu0
    %v906 = vpop.f32.mrf.mxu0
    %v907 = vadd.f32 0.0, %v906
    %v908 = vpop.f32.mrf.mxu0
    %909 = vdwg.mxu0
    %v910 = vadd.f32 %v829, %v896
    %v911 = vadd.f32 %v830, %v899
    %v912 = vadd.f32 %v831, %v904
    %v913 = vadd.f32 %v832, %v907
    %vm914 = vcmask 1041408
    %v915 = vrot.slane %v437, 6
    %v916 = vrot.slane %v427, 6
    %v917 = vsel %vm914, %v915, %v916
    %v918 = vrot.slane %v439, 6
    %v919 = vsel %vm914, %v916, %v918
    %v920 = vrot.slane %v438, 6
    %v921 = vrot.slane %v430, 6
    %v922 = vsel %vm914, %v920, %v921
    %v923 = vrot.slane %v440, 6
    %v924 = vsel %vm914, %v921, %v923
    %v929 = vpack.c.bf16 %v919, %v917
    %v930 = vpack.c.bf16 %v924, %v922
    %v933 = vunpack.c.l.b16 %v304
    %v934 = vunpack.c.l.b16 %v305
    %v935 = vpack.c.b16 %v934, %v933
    %v938 = vsel %vm470, %v929, 0
    %v941 = vsel %vm470, %v930, 0
    %943 = vmatprep.subr.bf16.mxu0 0
    %944 = vmatpush1.bf16.msra.mxu0 0
    %945 = vmatprep.subr.bf16.mxu0 0
    %946 = vmatpush1.bf16.msra.mxu0 0
    %947 = vmatprep.subr.bf16.mxu0 0
    %948 = vmatpush1.bf16.msra.mxu0 0
    %949 = vmatprep.subr.bf16.mxu0 0
    %950 = vmatpush1.bf16.msra.mxu0 0
    %951 = vmatprep.subr.bf16.mxu0 0
    %952 = vmatpush1.bf16.msra.mxu0 0
    %953 = vmatprep.subr.bf16.mxu0 0
    %954 = vmatpush1.bf16.msra.mxu0 0
    %955 = vmatprep.subr.bf16.mxu0 0
    %956 = vmatpush1.bf16.msra.mxu0 0
    %957 = vmatprep.subr.bf16.mxu0 0
    %958 = vmatpush1.bf16.msra.mxu0 %v935
    %959 = vmatprep.subr.bf16.mxu0 0
    %960 = vmatpush2.bf16.msra.mxu0 0
    %961 = vmatprep.subr.bf16.mxu0 0
    %962 = vmatpush2.bf16.msra.mxu0 0
    %963 = vmatprep.subr.bf16.mxu0 0
    %964 = vmatpush2.bf16.msra.mxu0 0
    %965 = vmatprep.subr.bf16.mxu0 0
    %966 = vmatpush2.bf16.msra.mxu0 0
    %967 = vmatprep.subr.bf16.mxu0 0
    %968 = vmatpush2.bf16.msra.mxu0 0
    %969 = vmatprep.subr.bf16.mxu0 0
    %970 = vmatpush2.bf16.msra.mxu0 0
    %971 = vmatprep.subr.bf16.mxu0 0
    %972 = vmatpush2.bf16.msra.mxu0 0
    %973 = vmatprep.subr.bf16.mxu0 0
    %974 = vmatpush2.bf16.msra.mxu0 0
    %975 = vmatprep.mubr.bf16.mxu0 0
    %976 = vmatmul.mubr.bf16.gmra.mxu0 %v938
    %v977 = vpop.f32.mrf.mxu0
    %v978 = vadd.f32 0.0, %v977
    %v979 = vpop.f32.mrf.mxu0
    %v980 = vpop.f32.mrf.mxu0
    %v981 = vadd.f32 0.0, %v980
    %v982 = vpop.f32.mrf.mxu0
    %983 = vmatprep.mubr.bf16.mxu0 0
    %984 = vmatmul.mubr.bf16.gmra.mxu0 %v941
    %v985 = vpop.f32.mrf.mxu0
    %v986 = vadd.f32 0.0, %v985
    %v987 = vpop.f32.mrf.mxu0
    %v988 = vpop.f32.mrf.mxu0
    %v989 = vadd.f32 0.0, %v988
    %v990 = vpop.f32.mrf.mxu0
    %991 = vdwg.mxu0
    %v992 = vadd.f32 %v910, %v978
    %v993 = vadd.f32 %v911, %v981
    %v994 = vadd.f32 %v912, %v986
    %v995 = vadd.f32 %v913, %v989
    %v997 = vlaneseq
    %v998 = vshrl.u32 %v997, 7
    %v999 = vsub.s32 0, %v998
    %v1000 = vrot.slane %v306, %v999
    %v1002 = vadd.f32 %v992, %v1000
    %v1003 = vadd.f32 %v993, %v1000
    %v1004 = vadd.f32 %v994, %v1000
    %v1005 = vadd.f32 %v995, %v1000
    %v1006 = vmax.f32 %v1002, 0.0
    %v1007 = vmax.f32 %v1003, 0.0
    %v1008 = vmax.f32 %v1004, 0.0
    %v1009 = vmax.f32 %v1005, 0.0
    %v1014 = vcombine.high %v1006, %v1006
    %v1016 = vunpack.c.l.s4 1983009808
    %v1017 = vunpack.c.0.s8 %v1016
    %v1018 = vlaneseq
    %v1019 = vshrl.u32 %v1018, 7
    %v1020 = vsub.s32 %v1017, %v1019
    %v1021 = vrot.slane %v1006, %v1020
    %v1023 = vunpack.c.l.s4 1983009808
    %v1024 = vunpack.c.0.s8 %v1023
    %v1025 = vlaneseq
    %v1026 = vshrl.u32 %v1025, 7
    %v1027 = vsub.s32 %v1024, %v1026
    %v1028 = vrot.slane %v1014, %v1027
    %v1029 = vcombine.high %v1021, %v1021
    %v1030 = vcombine.high %v1028, %v1028
    %v1031 = vcombine.high %v1007, %v1007
    %v1033 = vunpack.c.l.s4 1983009808
    %v1034 = vunpack.c.0.s8 %v1033
    %v1035 = vlaneseq
    %v1036 = vshrl.u32 %v1035, 7
    %v1037 = vsub.s32 %v1034, %v1036
    %v1038 = vrot.slane %v1007, %v1037
    %v1040 = vunpack.c.l.s4 1983009808
    %v1041 = vunpack.c.0.s8 %v1040
    %v1042 = vlaneseq
    %v1043 = vshrl.u32 %v1042, 7
    %v1044 = vsub.s32 %v1041, %v1043
    %v1045 = vrot.slane %v1031, %v1044
    %v1046 = vcombine.high %v1038, %v1038
    %v1047 = vcombine.high %v1045, %v1045
    %v1048 = vcombine.high %v1008, %v1008
    %v1050 = vunpack.c.l.s4 1983009808
    %v1051 = vunpack.c.0.s8 %v1050
    %v1052 = vlaneseq
    %v1053 = vshrl.u32 %v1052, 7
    %v1054 = vsub.s32 %v1051, %v1053
    %v1055 = vrot.slane %v1008, %v1054
    %v1057 = vunpack.c.l.s4 1983009808
    %v1058 = vunpack.c.0.s8 %v1057
    %v1059 = vlaneseq
    %v1060 = vshrl.u32 %v1059, 7
    %v1061 = vsub.s32 %v1058, %v1060
    %v1062 = vrot.slane %v1048, %v1061
    %v1063 = vcombine.high %v1055, %v1055
    %v1064 = vcombine.high %v1062, %v1062
    %v1065 = vcombine.high %v1009, %v1009
    %v1067 = vunpack.c.l.s4 1983009808
    %v1068 = vunpack.c.0.s8 %v1067
    %v1069 = vlaneseq
    %v1070 = vshrl.u32 %v1069, 7
    %v1071 = vsub.s32 %v1068, %v1070
    %v1072 = vrot.slane %v1009, %v1071
    %v1074 = vunpack.c.l.s4 1983009808
    %v1075 = vunpack.c.0.s8 %v1074
    %v1076 = vlaneseq
    %v1077 = vshrl.u32 %v1076, 7
    %v1078 = vsub.s32 %v1075, %v1077
    %v1079 = vrot.slane %v1065, %v1078
    %v1080 = vcombine.high %v1072, %v1072
    %v1081 = vcombine.high %v1079, %v1079
    %v1082 = vlaneseq
    %v1083 = vshrl.u32 %v1082, 7
    %v1084 = vsub.s32 0, %v1083
    %v1085 = vrot.slane %v1021, %v1084
    %v1086 = vlaneseq
    %v1087 = vshrl.u32 %v1086, 7
    %v1088 = vsub.s32 0, %v1087
    %v1089 = vrot.slane %v1029, %v1088
    %v1090 = vlaneseq
    %v1091 = vshrl.u32 %v1090, 7
    %v1092 = vsub.s32 0, %v1091
    %v1093 = vrot.slane %v1028, %v1092
    %v1094 = vlaneseq
    %v1095 = vshrl.u32 %v1094, 7
    %v1096 = vsub.s32 0, %v1095
    %v1097 = vrot.slane %v1030, %v1096
    %v1098 = vlaneseq
    %v1099 = vshrl.u32 %v1098, 7
    %v1100 = vsub.s32 0, %v1099
    %v1101 = vrot.slane %v1038, %v1100
    %v1102 = vlaneseq
    %v1103 = vshrl.u32 %v1102, 7
    %v1104 = vsub.s32 0, %v1103
    %v1105 = vrot.slane %v1046, %v1104
    %v1106 = vlaneseq
    %v1107 = vshrl.u32 %v1106, 7
    %v1108 = vsub.s32 0, %v1107
    %v1109 = vrot.slane %v1045, %v1108
    %v1110 = vlaneseq
    %v1111 = vshrl.u32 %v1110, 7
    %v1112 = vsub.s32 0, %v1111
    %v1113 = vrot.slane %v1047, %v1112
    %v1114 = vlaneseq
    %v1115 = vshrl.u32 %v1114, 7
    %v1116 = vsub.s32 0, %v1115
    %v1117 = vrot.slane %v1055, %v1116
    %v1118 = vlaneseq
    %v1119 = vshrl.u32 %v1118, 7
    %v1120 = vsub.s32 0, %v1119
    %v1121 = vrot.slane %v1063, %v1120
    %v1122 = vlaneseq
    %v1123 = vshrl.u32 %v1122, 7
    %v1124 = vsub.s32 0, %v1123
    %v1125 = vrot.slane %v1062, %v1124
    %v1126 = vlaneseq
    %v1127 = vshrl.u32 %v1126, 7
    %v1128 = vsub.s32 0, %v1127
    %v1129 = vrot.slane %v1064, %v1128
    %v1130 = vlaneseq
    %v1131 = vshrl.u32 %v1130, 7
    %v1132 = vsub.s32 0, %v1131
    %v1133 = vrot.slane %v1072, %v1132
    %v1134 = vlaneseq
    %v1135 = vshrl.u32 %v1134, 7
    %v1136 = vsub.s32 0, %v1135
    %v1137 = vrot.slane %v1080, %v1136
    %v1138 = vlaneseq
    %v1139 = vshrl.u32 %v1138, 7
    %v1140 = vsub.s32 0, %v1139
    %v1141 = vrot.slane %v1079, %v1140
    %v1142 = vlaneseq
    %v1143 = vshrl.u32 %v1142, 7
    %v1144 = vsub.s32 0, %v1143
    %v1145 = vrot.slane %v1081, %v1144
    %vm1146 = vcmask 1042434
    %v1147 = vsel %vm1146, %v1089, %v1085
    %vm1148 = vcmask 1043459
    %v1149 = vsel %vm1148, %v1093, %v1147
    %vm1150 = vcmask 1044484
    %v1151 = vsel %vm1150, %v1097, %v1149
    %vm1152 = vcmask 1045509
    %v1153 = vsel %vm1152, %v1101, %v1151
    %vm1154 = vcmask 1046534
    %v1155 = vsel %vm1154, %v1105, %v1153
    %vm1156 = vcmask 1047559
    %v1157 = vsel %vm1156, %v1109, %v1155
    %v1158 = vsel %vm1146, %v1121, %v1117
    %v1159 = vsel %vm1148, %v1125, %v1158
    %v1160 = vsel %vm1150, %v1129, %v1159
    %v1161 = vsel %vm1152, %v1133, %v1160
    %v1162 = vsel %vm1154, %v1137, %v1161
    %v1163 = vsel %vm1156, %v1141, %v1162
    %vm1168 = vcmask 1040384
    %v1169 = vsel %vm1168, -1e+30, %v1157
    %v1170 = vsel %vm1168, -1e+30, %v1163
    %v1171 = vsel %vm1168, %v1113, -1e+30
    %v1172 = vsel %vm1168, %v1145, -1e+30
    %v1177 = vrot.slane %v1169, 1
    %v1178 = vrot.slane %v1171, 1
    %v1179 = vsel %vm447, %v1177, %v1178
    %v1180 = vrot.slane %v1170, 1
    %v1181 = vrot.slane %v1172, 1
    %v1182 = vsel %vm447, %v1180, %v1181
    %v1185 = vmax.f32 %v1169, %v1179
    %v1186 = vmax.f32 %v1170, %v1182
    %v1187 = vrot.slane %v1169, 2
    %v1188 = vrot.slane %v1171, 2
    %v1189 = vsel %vm587, %v1187, %v1188
    %v1190 = vrot.slane %v1170, 2
    %v1191 = vrot.slane %v1172, 2
    %v1192 = vsel %vm587, %v1190, %v1191
    %v1195 = vmax.f32 %v1185, %v1189
    %v1196 = vmax.f32 %v1186, %v1192
    %v1199 = vcombine.high %v1195, %v1195
    %v1201 = vunpack.c.l.s4 1983009808
    %v1202 = vunpack.c.0.s8 %v1201
    %v1203 = vlaneseq
    %v1204 = vshrl.u32 %v1203, 7
    %v1205 = vsub.s32 %v1202, %v1204
    %v1206 = vrot.slane %v1195, %v1205
    %v1208 = vunpack.c.l.s4 1983009808
    %v1209 = vunpack.c.0.s8 %v1208
    %v1210 = vlaneseq
    %v1211 = vshrl.u32 %v1210, 7
    %v1212 = vsub.s32 %v1209, %v1211
    %v1213 = vrot.slane %v1199, %v1212
    %v1214 = vcombine.high %v1206, %v1206
    %v1215 = vcombine.high %v1213, %v1213
    %v1216 = vcombine.high %v1196, %v1196
    %v1218 = vunpack.c.l.s4 1983009808
    %v1219 = vunpack.c.0.s8 %v1218
    %v1220 = vlaneseq
    %v1221 = vshrl.u32 %v1220, 7
    %v1222 = vsub.s32 %v1219, %v1221
    %v1223 = vrot.slane %v1196, %v1222
    %v1225 = vunpack.c.l.s4 1983009808
    %v1226 = vunpack.c.0.s8 %v1225
    %v1227 = vlaneseq
    %v1228 = vshrl.u32 %v1227, 7
    %v1229 = vsub.s32 %v1226, %v1228
    %v1230 = vrot.slane %v1216, %v1229
    %v1231 = vcombine.high %v1223, %v1223
    %v1232 = vcombine.high %v1230, %v1230
    %v1241 = vpack.c.bf16 %v1206, %v1206
    %v1242 = vpack.c.bf16 %v1214, %v1214
    %v1243 = vpack.c.bf16 %v1213, %v1213
    %v1244 = vpack.c.bf16 %v1215, %v1215
    %v1245 = vpack.c.bf16 %v1223, %v1223
    %v1246 = vpack.c.bf16 %v1231, %v1231
    %v1247 = vpack.c.bf16 %v1230, %v1230
    %v1248 = vpack.c.bf16 %v1232, %v1232
    %v1250 = vlaneseq
    %v1251 = vshrl.u32 %v1250, 7
    %v1252 = vsub.s32 0, %v1251
    %v1253 = vrot.slane %v315, %v1252
    %v1263 = vunpack.c.l.b16 %v1241
    %v1264 = vunpack.c.l.b16 %v1242
    %v1265 = vunpack.c.l.b16 %v1243
    %v1266 = vunpack.c.l.b16 %v1244
    %v1267 = vunpack.c.l.b16 %v1245
    %v1268 = vunpack.c.l.b16 %v1246
    %v1269 = vunpack.c.l.b16 %v1247
    %v1270 = vunpack.c.l.b16 %v1248
    %v1271 = vrot.slane %v1264, 7
    %vm1272 = vcmask 1041409
    %v1273 = vsel %vm1272, %v1271, %v1263
    %v1274 = vrot.slane %v1265, 6
    %v1275 = vsel %vm1146, %v1274, %v1273
    %v1276 = vrot.slane %v1266, 5
    %v1277 = vsel %vm1148, %v1276, %v1275
    %v1278 = vrot.slane %v1267, 4
    %v1279 = vsel %vm1150, %v1278, %v1277
    %v1280 = vrot.slane %v1268, 3
    %v1281 = vsel %vm1152, %v1280, %v1279
    %v1282 = vrot.slane %v1269, 2
    %v1283 = vsel %vm1154, %v1282, %v1281
    %v1284 = vrot.slane %v1270, 1
    %v1285 = vsel %vm1156, %v1284, %v1283
    %v1286 = vpack.c.b16 %v1285, %v1285
    %v1295 = vunpack.c.l.b16 %v307
    %v1296 = vunpack.c.l.b16 %v308
    %v1297 = vunpack.c.l.b16 %v309
    %v1298 = vunpack.c.l.b16 %v310
    %v1299 = vunpack.c.l.b16 %v311
    %v1300 = vunpack.c.l.b16 %v312
    %v1301 = vunpack.c.l.b16 %v313
    %v1302 = vunpack.c.l.b16 %v314
    %v1303 = vpack.c.b16 %v1296, %v1295
    %v1304 = vpack.c.b16 %v1298, %v1297
    %v1305 = vpack.c.b16 %v1300, %v1299
    %v1306 = vpack.c.b16 %v1302, %v1301
    %vm1311 = vcmask 523264
    %v1313 = vsel %vm1311, %v1286, 0
    %1315 = vmatprep.subr.bf16.mxu0 0
    %1316 = vmatpush1.bf16.msra.mxu0 0
    %1317 = vmatprep.subr.bf16.mxu0 0
    %1318 = vmatpush1.bf16.msra.mxu0 0
    %1319 = vmatprep.subr.bf16.mxu0 0
    %1320 = vmatpush1.bf16.msra.mxu0 0
    %1321 = vmatprep.subr.bf16.mxu0 0
    %1322 = vmatpush1.bf16.msra.mxu0 0
    %1323 = vmatprep.subr.bf16.mxu0 0
    %1324 = vmatpush1.bf16.msra.mxu0 %v1306
    %1325 = vmatprep.subr.bf16.mxu0 0
    %1326 = vmatpush1.bf16.msra.mxu0 %v1305
    %1327 = vmatprep.subr.bf16.mxu0 0
    %1328 = vmatpush1.bf16.msra.mxu0 %v1304
    %1329 = vmatprep.subr.bf16.mxu0 0
    %1330 = vmatpush1.bf16.msra.mxu0 %v1303
    %1331 = vmatprep.subr.bf16.mxu0 0
    %1332 = vmatpush2.bf16.msra.mxu0 0
    %1333 = vmatprep.subr.bf16.mxu0 0
    %1334 = vmatpush2.bf16.msra.mxu0 0
    %1335 = vmatprep.subr.bf16.mxu0 0
    %1336 = vmatpush2.bf16.msra.mxu0 0
    %1337 = vmatprep.subr.bf16.mxu0 0
    %1338 = vmatpush2.bf16.msra.mxu0 0
    %1339 = vmatprep.subr.bf16.mxu0 0
    %1340 = vmatpush2.bf16.msra.mxu0 0
    %1341 = vmatprep.subr.bf16.mxu0 0
    %1342 = vmatpush2.bf16.msra.mxu0 0
    %1343 = vmatprep.subr.bf16.mxu0 0
    %1344 = vmatpush2.bf16.msra.mxu0 0
    %1345 = vmatprep.subr.bf16.mxu0 0
    %1346 = vmatpush2.bf16.msra.mxu0 0
    %1347 = vmatprep.mubr.bf16.mxu0 0
    %1348 = vmatmul.mubr.bf16.gmra.mxu0 %v1313
    %v1349 = vpop.f32.mrf.mxu0
    %v1350 = vadd.f32 %v1253, %v1349
    %v1351 = vpop.f32.mrf.mxu0
    %v1352 = vpop.f32.mrf.mxu0
    %v1353 = vpop.f32.mrf.mxu0
    %1354 = vdwg.mxu0
    %v1356 = vcombine.high %v1350, %v1350
    %v1359 = vlaneseq
    %v1360 = vshrl.u32 %v1359, 7
    %v1361 = vsub.s32 0, %v1360
    %v1362 = vrot.slane %v324, %v1361
    %v1372 = vunpack.c.l.b16 %v316
    %v1373 = vunpack.c.l.b16 %v317
    %v1374 = vunpack.c.l.b16 %v318
    %v1375 = vunpack.c.l.b16 %v319
    %v1376 = vunpack.c.l.b16 %v320
    %v1377 = vunpack.c.l.b16 %v321
    %v1378 = vunpack.c.l.b16 %v322
    %v1379 = vunpack.c.l.b16 %v323
    %v1380 = vpack.c.b16 %v1373, %v1372
    %v1381 = vpack.c.b16 %v1375, %v1374
    %v1382 = vpack.c.b16 %v1377, %v1376
    %v1383 = vpack.c.b16 %v1379, %v1378
    %1388 = vmatprep.subr.bf16.mxu0 0
    %1389 = vmatpush1.bf16.msra.mxu0 0
    %1390 = vmatprep.subr.bf16.mxu0 0
    %1391 = vmatpush1.bf16.msra.mxu0 0
    %1392 = vmatprep.subr.bf16.mxu0 0
    %1393 = vmatpush1.bf16.msra.mxu0 0
    %1394 = vmatprep.subr.bf16.mxu0 0
    %1395 = vmatpush1.bf16.msra.mxu0 0
    %1396 = vmatprep.subr.bf16.mxu0 0
    %1397 = vmatpush1.bf16.msra.mxu0 %v1383
    %1398 = vmatprep.subr.bf16.mxu0 0
    %1399 = vmatpush1.bf16.msra.mxu0 %v1382
    %1400 = vmatprep.subr.bf16.mxu0 0
    %1401 = vmatpush1.bf16.msra.mxu0 %v1381
    %1402 = vmatprep.subr.bf16.mxu0 0
    %1403 = vmatpush1.bf16.msra.mxu0 %v1380
    %1404 = vmatprep.subr.bf16.mxu0 0
    %1405 = vmatpush2.bf16.msra.mxu0 0
    %1406 = vmatprep.subr.bf16.mxu0 0
    %1407 = vmatpush2.bf16.msra.mxu0 0
    %1408 = vmatprep.subr.bf16.mxu0 0
    %1409 = vmatpush2.bf16.msra.mxu0 0
    %1410 = vmatprep.subr.bf16.mxu0 0
    %1411 = vmatpush2.bf16.msra.mxu0 0
    %1412 = vmatprep.subr.bf16.mxu0 0
    %1413 = vmatpush2.bf16.msra.mxu0 0
    %1414 = vmatprep.subr.bf16.mxu0 0
    %1415 = vmatpush2.bf16.msra.mxu0 0
    %1416 = vmatprep.subr.bf16.mxu0 0
    %1417 = vmatpush2.bf16.msra.mxu0 0
    %1418 = vmatprep.subr.bf16.mxu0 0
    %1419 = vmatpush2.bf16.msra.mxu0 0
    %1420 = vmatprep.mubr.bf16.mxu0 0
    %1421 = vmatmul.mubr.bf16.gmra.mxu0 %v1313
    %v1422 = vpop.f32.mrf.mxu0
    %v1423 = vadd.f32 %v1362, %v1422
    %v1424 = vpop.f32.mrf.mxu0
    %v1425 = vpop.f32.mrf.mxu0
    %v1426 = vpop.f32.mrf.mxu0
    %1427 = vdwg.mxu0
    %v1428 = vmax.f32 %v1423, 0.0
    %v1430 = vcombine.high %v1428, %v1428
    %v1431 = vrot.slane %v1428, 7
    %v1432 = vrot.slane %v1430, 7
    %v1435 = vsel %vm1168, 0.0, %v1431
    %v1436 = vsel %vm1168, 0.0, %v1432
    %v1437 = vsel %vm669, %v1435, 0.0
    %v1438 = vsel %vm669, %v1436, 0.0
    %v1441 = vcombine.low %v1437, %v1438
    %v1443 = vpack.c.bf16 %v1441, %v1441
    %v1444 = vcombine.high %v1437, %v1437
    %v1445 = vcombine.high %v1438, %v1438
    %vm1446 = vcmask 1046532
    %vm1447 = vmor %vm424, %vm1446
    %v1448 = vrot.slane %v1437, 5
    %v1449 = vrot.slane %v1448, 4
    %v1450 = vrot.slane %v1444, 5
    %v1451 = vsel %vm1447, %v1449, %v1450
    %v1452 = vrot.slane %v1438, 5
    %v1453 = vrot.slane %v1452, 4
    %v1454 = vrot.slane %v1445, 5
    %v1455 = vsel %vm1447, %v1453, %v1454
    %v1456 = vcombine.low %v1451, %v1455
    %v1458 = vpack.c.bf16 %v1456, %v1456
    %v1461 = vunpack.c.l.b16 %v327
    %v1462 = vunpack.c.l.b16 %v328
    %v1463 = vpack.c.b16 %v1462, %v1461
    %v1466 = vsel %vm470, %v1458, 0
    %1468 = vmatprep.subr.bf16.mxu0 0
    %1469 = vmatpush1.bf16.msra.mxu0 0
    %1470 = vmatprep.subr.bf16.mxu0 0
    %1471 = vmatpush1.bf16.msra.mxu0 0
    %1472 = vmatprep.subr.bf16.mxu0 0
    %1473 = vmatpush1.bf16.msra.mxu0 0
    %1474 = vmatprep.subr.bf16.mxu0 0
    %1475 = vmatpush1.bf16.msra.mxu0 0
    %1476 = vmatprep.subr.bf16.mxu0 0
    %1477 = vmatpush1.bf16.msra.mxu0 0
    %1478 = vmatprep.subr.bf16.mxu0 0
    %1479 = vmatpush1.bf16.msra.mxu0 0
    %1480 = vmatprep.subr.bf16.mxu0 0
    %1481 = vmatpush1.bf16.msra.mxu0 0
    %1482 = vmatprep.subr.bf16.mxu0 0
    %1483 = vmatpush1.bf16.msra.mxu0 %v1463
    %1484 = vmatprep.subr.bf16.mxu0 0
    %1485 = vmatpush2.bf16.msra.mxu0 0
    %1486 = vmatprep.subr.bf16.mxu0 0
    %1487 = vmatpush2.bf16.msra.mxu0 0
    %1488 = vmatprep.subr.bf16.mxu0 0
    %1489 = vmatpush2.bf16.msra.mxu0 0
    %1490 = vmatprep.subr.bf16.mxu0 0
    %1491 = vmatpush2.bf16.msra.mxu0 0
    %1492 = vmatprep.subr.bf16.mxu0 0
    %1493 = vmatpush2.bf16.msra.mxu0 0
    %1494 = vmatprep.subr.bf16.mxu0 0
    %1495 = vmatpush2.bf16.msra.mxu0 0
    %1496 = vmatprep.subr.bf16.mxu0 0
    %1497 = vmatpush2.bf16.msra.mxu0 0
    %1498 = vmatprep.subr.bf16.mxu0 0
    %1499 = vmatpush2.bf16.msra.mxu0 0
    %1500 = vmatprep.mubr.bf16.mxu0 0
    %1501 = vmatmul.mubr.bf16.gmra.mxu0 %v1466
    %v1502 = vpop.f32.mrf.mxu0
    %v1503 = vadd.f32 0.0, %v1502
    %v1504 = vpop.f32.mrf.mxu0
    %v1505 = vpop.f32.mrf.mxu0
    %v1506 = vpop.f32.mrf.mxu0
    %1507 = vdwg.mxu0
    %v1510 = vunpack.c.l.b16 %v325
    %v1511 = vunpack.c.l.b16 %v326
    %v1512 = vpack.c.b16 %v1511, %v1510
    %v1515 = vsel %vm470, %v1443, 0
    %1517 = vmatprep.subr.bf16.mxu0 0
    %1518 = vmatpush1.bf16.msra.mxu0 0
    %1519 = vmatprep.subr.bf16.mxu0 0
    %1520 = vmatpush1.bf16.msra.mxu0 0
    %1521 = vmatprep.subr.bf16.mxu0 0
    %1522 = vmatpush1.bf16.msra.mxu0 0
    %1523 = vmatprep.subr.bf16.mxu0 0
    %1524 = vmatpush1.bf16.msra.mxu0 0
    %1525 = vmatprep.subr.bf16.mxu0 0
    %1526 = vmatpush1.bf16.msra.mxu0 0
    %1527 = vmatprep.subr.bf16.mxu0 0
    %1528 = vmatpush1.bf16.msra.mxu0 0
    %1529 = vmatprep.subr.bf16.mxu0 0
    %1530 = vmatpush1.bf16.msra.mxu0 0
    %1531 = vmatprep.subr.bf16.mxu0 0
    %1532 = vmatpush1.bf16.msra.mxu0 %v1512
    %1533 = vmatprep.subr.bf16.mxu0 0
    %1534 = vmatpush2.bf16.msra.mxu0 0
    %1535 = vmatprep.subr.bf16.mxu0 0
    %1536 = vmatpush2.bf16.msra.mxu0 0
    %1537 = vmatprep.subr.bf16.mxu0 0
    %1538 = vmatpush2.bf16.msra.mxu0 0
    %1539 = vmatprep.subr.bf16.mxu0 0
    %1540 = vmatpush2.bf16.msra.mxu0 0
    %1541 = vmatprep.subr.bf16.mxu0 0
    %1542 = vmatpush2.bf16.msra.mxu0 0
    %1543 = vmatprep.subr.bf16.mxu0 0
    %1544 = vmatpush2.bf16.msra.mxu0 0
    %1545 = vmatprep.subr.bf16.mxu0 0
    %1546 = vmatpush2.bf16.msra.mxu0 0
    %1547 = vmatprep.subr.bf16.mxu0 0
    %1548 = vmatpush2.bf16.msra.mxu0 0
    %1549 = vmatprep.mubr.bf16.mxu0 0
    %1550 = vmatmul.mubr.bf16.gmra.mxu0 %v1515
    %v1551 = vpop.f32.mrf.mxu0
    %v1552 = vadd.f32 %v1503, %v1551
    %v1553 = vpop.f32.mrf.mxu0
    %v1554 = vpop.f32.mrf.mxu0
    %v1555 = vpop.f32.mrf.mxu0
    %1556 = vdwg.mxu0
    %vm1557 = vcmask 1045508
    %vm1558 = vmor %vm914, %vm1557
    %v1559 = vrot.slane %v1437, 6
    %v1560 = vrot.slane %v1559, 4
    %v1561 = vrot.slane %v1444, 6
    %v1562 = vsel %vm1558, %v1560, %v1561
    %v1563 = vrot.slane %v1438, 6
    %v1564 = vrot.slane %v1563, 4
    %v1565 = vrot.slane %v1445, 6
    %v1566 = vsel %vm1558, %v1564, %v1565
    %v1567 = vcombine.low %v1562, %v1566
    %v1569 = vpack.c.bf16 %v1567, %v1567
    %v1572 = vunpack.c.l.b16 %v329
    %v1573 = vunpack.c.l.b16 %v330
    %v1574 = vpack.c.b16 %v1573, %v1572
    %v1577 = vsel %vm470, %v1569, 0
    %1579 = vmatprep.subr.bf16.mxu0 0
    %1580 = vmatpush1.bf16.msra.mxu0 0
    %1581 = vmatprep.subr.bf16.mxu0 0
    %1582 = vmatpush1.bf16.msra.mxu0 0
    %1583 = vmatprep.subr.bf16.mxu0 0
    %1584 = vmatpush1.bf16.msra.mxu0 0
    %1585 = vmatprep.subr.bf16.mxu0 0
    %1586 = vmatpush1.bf16.msra.mxu0 0
    %1587 = vmatprep.subr.bf16.mxu0 0
    %1588 = vmatpush1.bf16.msra.mxu0 0
    %1589 = vmatprep.subr.bf16.mxu0 0
    %1590 = vmatpush1.bf16.msra.mxu0 0
    %1591 = vmatprep.subr.bf16.mxu0 0
    %1592 = vmatpush1.bf16.msra.mxu0 0
    %1593 = vmatprep.subr.bf16.mxu0 0
    %1594 = vmatpush1.bf16.msra.mxu0 %v1574
    %1595 = vmatprep.subr.bf16.mxu0 0
    %1596 = vmatpush2.bf16.msra.mxu0 0
    %1597 = vmatprep.subr.bf16.mxu0 0
    %1598 = vmatpush2.bf16.msra.mxu0 0
    %1599 = vmatprep.subr.bf16.mxu0 0
    %1600 = vmatpush2.bf16.msra.mxu0 0
    %1601 = vmatprep.subr.bf16.mxu0 0
    %1602 = vmatpush2.bf16.msra.mxu0 0
    %1603 = vmatprep.subr.bf16.mxu0 0
    %1604 = vmatpush2.bf16.msra.mxu0 0
    %1605 = vmatprep.subr.bf16.mxu0 0
    %1606 = vmatpush2.bf16.msra.mxu0 0
    %1607 = vmatprep.subr.bf16.mxu0 0
    %1608 = vmatpush2.bf16.msra.mxu0 0
    %1609 = vmatprep.subr.bf16.mxu0 0
    %1610 = vmatpush2.bf16.msra.mxu0 0
    %1611 = vmatprep.mubr.bf16.mxu0 0
    %1612 = vmatmul.mubr.bf16.gmra.mxu0 %v1577
    %v1613 = vpop.f32.mrf.mxu0
    %v1614 = vadd.f32 0.0, %v1613
    %v1615 = vpop.f32.mrf.mxu0
    %v1616 = vpop.f32.mrf.mxu0
    %v1617 = vpop.f32.mrf.mxu0
    %1618 = vdwg.mxu0
    %v1619 = vadd.f32 %v1552, %v1614
    %v1621 = vlaneseq
    %v1622 = vshrl.u32 %v1621, 7
    %v1623 = vsub.s32 0, %v1622
    %v1624 = vrot.slane %v331, %v1623
    %v1626 = vadd.f32 %v1619, %v1624
    %v1627 = vmax.f32 %v1626, 0.0
    %v1628 = vpack.c.bf16 %v1627, %v1627
    %v1630 = vlaneseq
    %v1631 = vshrl.u32 %v1630, 7
    %v1632 = vsub.s32 0, %v1631
    %v1633 = vrot.slane %v334, %v1632
    %v1637 = vunpack.c.l.b16 %v332
    %v1638 = vunpack.c.l.b16 %v333
    %v1639 = vpack.c.b16 %v1638, %v1637
    %v1642 = vsel %vm470, %v1628, 0
    %1644 = vmatprep.subr.bf16.mxu0 0
    %1645 = vmatpush1.bf16.msra.mxu0 0
    %1646 = vmatprep.subr.bf16.mxu0 0
    %1647 = vmatpush1.bf16.msra.mxu0 0
    %1648 = vmatprep.subr.bf16.mxu0 0
    %1649 = vmatpush1.bf16.msra.mxu0 0
    %1650 = vmatprep.subr.bf16.mxu0 0
    %1651 = vmatpush1.bf16.msra.mxu0 0
    %1652 = vmatprep.subr.bf16.mxu0 0
    %1653 = vmatpush1.bf16.msra.mxu0 0
    %1654 = vmatprep.subr.bf16.mxu0 0
    %1655 = vmatpush1.bf16.msra.mxu0 0
    %1656 = vmatprep.subr.bf16.mxu0 0
    %1657 = vmatpush1.bf16.msra.mxu0 0
    %1658 = vmatprep.subr.bf16.mxu0 0
    %1659 = vmatpush1.bf16.msra.mxu0 %v1639
    %1660 = vmatprep.subr.bf16.mxu0 0
    %1661 = vmatpush2.bf16.msra.mxu0 0
    %1662 = vmatprep.subr.bf16.mxu0 0
    %1663 = vmatpush2.bf16.msra.mxu0 0
    %1664 = vmatprep.subr.bf16.mxu0 0
    %1665 = vmatpush2.bf16.msra.mxu0 0
    %1666 = vmatprep.subr.bf16.mxu0 0
    %1667 = vmatpush2.bf16.msra.mxu0 0
    %1668 = vmatprep.subr.bf16.mxu0 0
    %1669 = vmatpush2.bf16.msra.mxu0 0
    %1670 = vmatprep.subr.bf16.mxu0 0
    %1671 = vmatpush2.bf16.msra.mxu0 0
    %1672 = vmatprep.subr.bf16.mxu0 0
    %1673 = vmatpush2.bf16.msra.mxu0 0
    %1674 = vmatprep.subr.bf16.mxu0 0
    %1675 = vmatpush2.bf16.msra.mxu0 0
    %1676 = vmatprep.mubr.bf16.mxu0 0
    %1677 = vmatmul.mubr.bf16.gmra.mxu0 %v1642
    %v1678 = vpop.f32.mrf.mxu0
    %v1679 = vadd.f32 %v1633, %v1678
    %v1680 = vpop.f32.mrf.mxu0
    %v1681 = vpop.f32.mrf.mxu0
    %v1682 = vpop.f32.mrf.mxu0
    %1683 = vdwg.mxu0
    %v1685 = vcombine.high %v1679, %v1679
    %v1687 = vadd.f32 %v1679, %v1350
    %v1688 = vadd.f32 %v1685, %v1356
    %v1689 = vmax.f32 %v1687, 0.0
    %v1690 = vmax.f32 %v1688, 0.0
    %v1693 = vcombine.low %v1689, %v1690
    %v1695 = vpack.c.bf16 %v1693, %v1693
    %v1697 = vlaneseq
    %v1698 = vshrl.u32 %v1697, 7
    %v1699 = vsub.s32 0, %v1698
    %v1700 = vrot.slane %v343, %v1699
    %v1710 = vunpack.c.l.b16 %v335
    %v1711 = vunpack.c.l.b16 %v336
    %v1712 = vunpack.c.l.b16 %v337
    %v1713 = vunpack.c.l.b16 %v338
    %v1714 = vunpack.c.l.b16 %v339
    %v1715 = vunpack.c.l.b16 %v340
    %v1716 = vunpack.c.l.b16 %v341
    %v1717 = vunpack.c.l.b16 %v342
    %v1718 = vpack.c.b16 %v1711, %v1710
    %v1719 = vpack.c.b16 %v1713, %v1712
    %v1720 = vpack.c.b16 %v1715, %v1714
    %v1721 = vpack.c.b16 %v1717, %v1716
    %v1727 = vsel %vm1311, %v1695, 0
    %1729 = vmatprep.subr.bf16.mxu0 0
    %1730 = vmatpush1.bf16.msra.mxu0 0
    %1731 = vmatprep.subr.bf16.mxu0 0
    %1732 = vmatpush1.bf16.msra.mxu0 0
    %1733 = vmatprep.subr.bf16.mxu0 0
    %1734 = vmatpush1.bf16.msra.mxu0 0
    %1735 = vmatprep.subr.bf16.mxu0 0
    %1736 = vmatpush1.bf16.msra.mxu0 0
    %1737 = vmatprep.subr.bf16.mxu0 0
    %1738 = vmatpush1.bf16.msra.mxu0 %v1721
    %1739 = vmatprep.subr.bf16.mxu0 0
    %1740 = vmatpush1.bf16.msra.mxu0 %v1720
    %1741 = vmatprep.subr.bf16.mxu0 0
    %1742 = vmatpush1.bf16.msra.mxu0 %v1719
    %1743 = vmatprep.subr.bf16.mxu0 0
    %1744 = vmatpush1.bf16.msra.mxu0 %v1718
    %1745 = vmatprep.subr.bf16.mxu0 0
    %1746 = vmatpush2.bf16.msra.mxu0 0
    %1747 = vmatprep.subr.bf16.mxu0 0
    %1748 = vmatpush2.bf16.msra.mxu0 0
    %1749 = vmatprep.subr.bf16.mxu0 0
    %1750 = vmatpush2.bf16.msra.mxu0 0
    %1751 = vmatprep.subr.bf16.mxu0 0
    %1752 = vmatpush2.bf16.msra.mxu0 0
    %1753 = vmatprep.subr.bf16.mxu0 0
    %1754 = vmatpush2.bf16.msra.mxu0 0
    %1755 = vmatprep.subr.bf16.mxu0 0
    %1756 = vmatpush2.bf16.msra.mxu0 0
    %1757 = vmatprep.subr.bf16.mxu0 0
    %1758 = vmatpush2.bf16.msra.mxu0 0
    %1759 = vmatprep.subr.bf16.mxu0 0
    %1760 = vmatpush2.bf16.msra.mxu0 0
    %1761 = vmatprep.mubr.bf16.mxu0 0
    %1762 = vmatmul.mubr.bf16.gmra.mxu0 %v1727
    %v1763 = vpop.f32.mrf.mxu0
    %v1764 = vadd.f32 %v1700, %v1763
    %v1765 = vpop.f32.mrf.mxu0
    %v1766 = vpop.f32.mrf.mxu0
    %v1767 = vpop.f32.mrf.mxu0
    %1768 = vdwg.mxu0
    %v1770 = vcombine.high %v1764, %v1764
    %v1773 = vlaneseq
    %v1774 = vshrl.u32 %v1773, 7
    %v1775 = vsub.s32 0, %v1774
    %v1776 = vrot.slane %v352, %v1775
    %v1786 = vunpack.c.l.b16 %v344
    %v1787 = vunpack.c.l.b16 %v345
    %v1788 = vunpack.c.l.b16 %v346
    %v1789 = vunpack.c.l.b16 %v347
    %v1790 = vunpack.c.l.b16 %v348
    %v1791 = vunpack.c.l.b16 %v349
    %v1792 = vunpack.c.l.b16 %v350
    %v1793 = vunpack.c.l.b16 %v351
    %v1794 = vpack.c.b16 %v1787, %v1786
    %v1795 = vpack.c.b16 %v1789, %v1788
    %v1796 = vpack.c.b16 %v1791, %v1790
    %v1797 = vpack.c.b16 %v1793, %v1792
    %1802 = vmatprep.subr.bf16.mxu0 0
    %1803 = vmatpush1.bf16.msra.mxu0 0
    %1804 = vmatprep.subr.bf16.mxu0 0
    %1805 = vmatpush1.bf16.msra.mxu0 0
    %1806 = vmatprep.subr.bf16.mxu0 0
    %1807 = vmatpush1.bf16.msra.mxu0 0
    %1808 = vmatprep.subr.bf16.mxu0 0
    %1809 = vmatpush1.bf16.msra.mxu0 0
    %1810 = vmatprep.subr.bf16.mxu0 0
    %1811 = vmatpush1.bf16.msra.mxu0 %v1797
    %1812 = vmatprep.subr.bf16.mxu0 0
    %1813 = vmatpush1.bf16.msra.mxu0 %v1796
    %1814 = vmatprep.subr.bf16.mxu0 0
    %1815 = vmatpush1.bf16.msra.mxu0 %v1795
    %1816 = vmatprep.subr.bf16.mxu0 0
    %1817 = vmatpush1.bf16.msra.mxu0 %v1794
    %1818 = vmatprep.subr.bf16.mxu0 0
    %1819 = vmatpush2.bf16.msra.mxu0 0
    %1820 = vmatprep.subr.bf16.mxu0 0
    %1821 = vmatpush2.bf16.msra.mxu0 0
    %1822 = vmatprep.subr.bf16.mxu0 0
    %1823 = vmatpush2.bf16.msra.mxu0 0
    %1824 = vmatprep.subr.bf16.mxu0 0
    %1825 = vmatpush2.bf16.msra.mxu0 0
    %1826 = vmatprep.subr.bf16.mxu0 0
    %1827 = vmatpush2.bf16.msra.mxu0 0
    %1828 = vmatprep.subr.bf16.mxu0 0
    %1829 = vmatpush2.bf16.msra.mxu0 0
    %1830 = vmatprep.subr.bf16.mxu0 0
    %1831 = vmatpush2.bf16.msra.mxu0 0
    %1832 = vmatprep.subr.bf16.mxu0 0
    %1833 = vmatpush2.bf16.msra.mxu0 0
    %1834 = vmatprep.mubr.bf16.mxu0 0
    %1835 = vmatmul.mubr.bf16.gmra.mxu0 %v1727
    %v1836 = vpop.f32.mrf.mxu0
    %v1837 = vadd.f32 %v1776, %v1836
    %v1838 = vpop.f32.mrf.mxu0
    %v1839 = vpop.f32.mrf.mxu0
    %v1840 = vpop.f32.mrf.mxu0
    %1841 = vdwg.mxu0
    %v1842 = vmax.f32 %v1837, 0.0
    %v1844 = vcombine.high %v1842, %v1842
    %v1845 = vrot.slane %v1842, 7
    %v1846 = vrot.slane %v1844, 7
    %v1849 = vsel %vm1168, 0.0, %v1845
    %v1850 = vsel %vm1168, 0.0, %v1846
    %v1851 = vsel %vm669, %v1849, 0.0
    %v1852 = vsel %vm669, %v1850, 0.0
    %v1855 = vcombine.low %v1851, %v1852
    %v1857 = vpack.c.bf16 %v1855, %v1855
    %v1858 = vcombine.high %v1851, %v1851
    %v1859 = vcombine.high %v1852, %v1852
    %v1860 = vrot.slane %v1851, 5
    %v1861 = vrot.slane %v1860, 4
    %v1862 = vrot.slane %v1858, 5
    %v1863 = vsel %vm1447, %v1861, %v1862
    %v1864 = vrot.slane %v1852, 5
    %v1865 = vrot.slane %v1864, 4
    %v1866 = vrot.slane %v1859, 5
    %v1867 = vsel %vm1447, %v1865, %v1866
    %v1868 = vcombine.low %v1863, %v1867
    %v1870 = vpack.c.bf16 %v1868, %v1868
    %v1873 = vunpack.c.l.b16 %v355
    %v1874 = vunpack.c.l.b16 %v356
    %v1875 = vpack.c.b16 %v1874, %v1873
    %v1878 = vsel %vm470, %v1870, 0
    %1880 = vmatprep.subr.bf16.mxu0 0
    %1881 = vmatpush1.bf16.msra.mxu0 0
    %1882 = vmatprep.subr.bf16.mxu0 0
    %1883 = vmatpush1.bf16.msra.mxu0 0
    %1884 = vmatprep.subr.bf16.mxu0 0
    %1885 = vmatpush1.bf16.msra.mxu0 0
    %1886 = vmatprep.subr.bf16.mxu0 0
    %1887 = vmatpush1.bf16.msra.mxu0 0
    %1888 = vmatprep.subr.bf16.mxu0 0
    %1889 = vmatpush1.bf16.msra.mxu0 0
    %1890 = vmatprep.subr.bf16.mxu0 0
    %1891 = vmatpush1.bf16.msra.mxu0 0
    %1892 = vmatprep.subr.bf16.mxu0 0
    %1893 = vmatpush1.bf16.msra.mxu0 0
    %1894 = vmatprep.subr.bf16.mxu0 0
    %1895 = vmatpush1.bf16.msra.mxu0 %v1875
    %1896 = vmatprep.subr.bf16.mxu0 0
    %1897 = vmatpush2.bf16.msra.mxu0 0
    %1898 = vmatprep.subr.bf16.mxu0 0
    %1899 = vmatpush2.bf16.msra.mxu0 0
    %1900 = vmatprep.subr.bf16.mxu0 0
    %1901 = vmatpush2.bf16.msra.mxu0 0
    %1902 = vmatprep.subr.bf16.mxu0 0
    %1903 = vmatpush2.bf16.msra.mxu0 0
    %1904 = vmatprep.subr.bf16.mxu0 0
    %1905 = vmatpush2.bf16.msra.mxu0 0
    %1906 = vmatprep.subr.bf16.mxu0 0
    %1907 = vmatpush2.bf16.msra.mxu0 0
    %1908 = vmatprep.subr.bf16.mxu0 0
    %1909 = vmatpush2.bf16.msra.mxu0 0
    %1910 = vmatprep.subr.bf16.mxu0 0
    %1911 = vmatpush2.bf16.msra.mxu0 0
    %1912 = vmatprep.mubr.bf16.mxu0 0
    %1913 = vmatmul.mubr.bf16.gmra.mxu0 %v1878
    %v1914 = vpop.f32.mrf.mxu0
    %v1915 = vadd.f32 0.0, %v1914
    %v1916 = vpop.f32.mrf.mxu0
    %v1917 = vpop.f32.mrf.mxu0
    %v1918 = vpop.f32.mrf.mxu0
    %1919 = vdwg.mxu0
    %v1922 = vunpack.c.l.b16 %v353
    %v1923 = vunpack.c.l.b16 %v354
    %v1924 = vpack.c.b16 %v1923, %v1922
    %v1927 = vsel %vm470, %v1857, 0
    %1929 = vmatprep.subr.bf16.mxu0 0
    %1930 = vmatpush1.bf16.msra.mxu0 0
    %1931 = vmatprep.subr.bf16.mxu0 0
    %1932 = vmatpush1.bf16.msra.mxu0 0
    %1933 = vmatprep.subr.bf16.mxu0 0
    %1934 = vmatpush1.bf16.msra.mxu0 0
    %1935 = vmatprep.subr.bf16.mxu0 0
    %1936 = vmatpush1.bf16.msra.mxu0 0
    %1937 = vmatprep.subr.bf16.mxu0 0
    %1938 = vmatpush1.bf16.msra.mxu0 0
    %1939 = vmatprep.subr.bf16.mxu0 0
    %1940 = vmatpush1.bf16.msra.mxu0 0
    %1941 = vmatprep.subr.bf16.mxu0 0
    %1942 = vmatpush1.bf16.msra.mxu0 0
    %1943 = vmatprep.subr.bf16.mxu0 0
    %1944 = vmatpush1.bf16.msra.mxu0 %v1924
    %1945 = vmatprep.subr.bf16.mxu0 0
    %1946 = vmatpush2.bf16.msra.mxu0 0
    %1947 = vmatprep.subr.bf16.mxu0 0
    %1948 = vmatpush2.bf16.msra.mxu0 0
    %1949 = vmatprep.subr.bf16.mxu0 0
    %1950 = vmatpush2.bf16.msra.mxu0 0
    %1951 = vmatprep.subr.bf16.mxu0 0
    %1952 = vmatpush2.bf16.msra.mxu0 0
    %1953 = vmatprep.subr.bf16.mxu0 0
    %1954 = vmatpush2.bf16.msra.mxu0 0
    %1955 = vmatprep.subr.bf16.mxu0 0
    %1956 = vmatpush2.bf16.msra.mxu0 0
    %1957 = vmatprep.subr.bf16.mxu0 0
    %1958 = vmatpush2.bf16.msra.mxu0 0
    %1959 = vmatprep.subr.bf16.mxu0 0
    %1960 = vmatpush2.bf16.msra.mxu0 0
    %1961 = vmatprep.mubr.bf16.mxu0 0
    %1962 = vmatmul.mubr.bf16.gmra.mxu0 %v1927
    %v1963 = vpop.f32.mrf.mxu0
    %v1964 = vadd.f32 %v1915, %v1963
    %v1965 = vpop.f32.mrf.mxu0
    %v1966 = vpop.f32.mrf.mxu0
    %v1967 = vpop.f32.mrf.mxu0
    %1968 = vdwg.mxu0
    %v1969 = vrot.slane %v1851, 6
    %v1970 = vrot.slane %v1969, 4
    %v1971 = vrot.slane %v1858, 6
    %v1972 = vsel %vm1558, %v1970, %v1971
    %v1973 = vrot.slane %v1852, 6
    %v1974 = vrot.slane %v1973, 4
    %v1975 = vrot.slane %v1859, 6
    %v1976 = vsel %vm1558, %v1974, %v1975
    %v1977 = vcombine.low %v1972, %v1976
    %v1979 = vpack.c.bf16 %v1977, %v1977
    %v1982 = vunpack.c.l.b16 %v357
    %v1983 = vunpack.c.l.b16 %v358
    %v1984 = vpack.c.b16 %v1983, %v1982
    %v1987 = vsel %vm470, %v1979, 0
    %1989 = vmatprep.subr.bf16.mxu0 0
    %1990 = vmatpush1.bf16.msra.mxu0 0
    %1991 = vmatprep.subr.bf16.mxu0 0
    %1992 = vmatpush1.bf16.msra.mxu0 0
    %1993 = vmatprep.subr.bf16.mxu0 0
    %1994 = vmatpush1.bf16.msra.mxu0 0
    %1995 = vmatprep.subr.bf16.mxu0 0
    %1996 = vmatpush1.bf16.msra.mxu0 0
    %1997 = vmatprep.subr.bf16.mxu0 0
    %1998 = vmatpush1.bf16.msra.mxu0 0
    %1999 = vmatprep.subr.bf16.mxu0 0
    %2000 = vmatpush1.bf16.msra.mxu0 0
    %2001 = vmatprep.subr.bf16.mxu0 0
    %2002 = vmatpush1.bf16.msra.mxu0 0
    %2003 = vmatprep.subr.bf16.mxu0 0
    %2004 = vmatpush1.bf16.msra.mxu0 %v1984
    %2005 = vmatprep.subr.bf16.mxu0 0
    %2006 = vmatpush2.bf16.msra.mxu0 0
    %2007 = vmatprep.subr.bf16.mxu0 0
    %2008 = vmatpush2.bf16.msra.mxu0 0
    %2009 = vmatprep.subr.bf16.mxu0 0
    %2010 = vmatpush2.bf16.msra.mxu0 0
    %2011 = vmatprep.subr.bf16.mxu0 0
    %2012 = vmatpush2.bf16.msra.mxu0 0
    %2013 = vmatprep.subr.bf16.mxu0 0
    %2014 = vmatpush2.bf16.msra.mxu0 0
    %2015 = vmatprep.subr.bf16.mxu0 0
    %2016 = vmatpush2.bf16.msra.mxu0 0
    %2017 = vmatprep.subr.bf16.mxu0 0
    %2018 = vmatpush2.bf16.msra.mxu0 0
    %2019 = vmatprep.subr.bf16.mxu0 0
    %2020 = vmatpush2.bf16.msra.mxu0 0
    %2021 = vmatprep.mubr.bf16.mxu0 0
    %2022 = vmatmul.mubr.bf16.gmra.mxu0 %v1987
    %v2023 = vpop.f32.mrf.mxu0
    %v2024 = vadd.f32 0.0, %v2023
    %v2025 = vpop.f32.mrf.mxu0
    %v2026 = vpop.f32.mrf.mxu0
    %v2027 = vpop.f32.mrf.mxu0
    %2028 = vdwg.mxu0
    %v2029 = vadd.f32 %v1964, %v2024
    %v2031 = vlaneseq
    %v2032 = vshrl.u32 %v2031, 7
    %v2033 = vsub.s32 0, %v2032
    %v2034 = vrot.slane %v359, %v2033
    %v2036 = vadd.f32 %v2029, %v2034
    %v2037 = vmax.f32 %v2036, 0.0
    %v2038 = vpack.c.bf16 %v2037, %v2037
    %v2040 = vlaneseq
    %v2041 = vshrl.u32 %v2040, 7
    %v2042 = vsub.s32 0, %v2041
    %v2043 = vrot.slane %v362, %v2042
    %v2047 = vunpack.c.l.b16 %v360
    %v2048 = vunpack.c.l.b16 %v361
    %v2049 = vpack.c.b16 %v2048, %v2047
    %v2052 = vsel %vm470, %v2038, 0
    %2054 = vmatprep.subr.bf16.mxu0 0
    %2055 = vmatpush1.bf16.msra.mxu0 0
    %2056 = vmatprep.subr.bf16.mxu0 0
    %2057 = vmatpush1.bf16.msra.mxu0 0
    %2058 = vmatprep.subr.bf16.mxu0 0
    %2059 = vmatpush1.bf16.msra.mxu0 0
    %2060 = vmatprep.subr.bf16.mxu0 0
    %2061 = vmatpush1.bf16.msra.mxu0 0
    %2062 = vmatprep.subr.bf16.mxu0 0
    %2063 = vmatpush1.bf16.msra.mxu0 0
    %2064 = vmatprep.subr.bf16.mxu0 0
    %2065 = vmatpush1.bf16.msra.mxu0 0
    %2066 = vmatprep.subr.bf16.mxu0 0
    %2067 = vmatpush1.bf16.msra.mxu0 0
    %2068 = vmatprep.subr.bf16.mxu0 0
    %2069 = vmatpush1.bf16.msra.mxu0 %v2049
    %2070 = vmatprep.subr.bf16.mxu0 0
    %2071 = vmatpush2.bf16.msra.mxu0 0
    %2072 = vmatprep.subr.bf16.mxu0 0
    %2073 = vmatpush2.bf16.msra.mxu0 0
    %2074 = vmatprep.subr.bf16.mxu0 0
    %2075 = vmatpush2.bf16.msra.mxu0 0
    %2076 = vmatprep.subr.bf16.mxu0 0
    %2077 = vmatpush2.bf16.msra.mxu0 0
    %2078 = vmatprep.subr.bf16.mxu0 0
    %2079 = vmatpush2.bf16.msra.mxu0 0
    %2080 = vmatprep.subr.bf16.mxu0 0
    %2081 = vmatpush2.bf16.msra.mxu0 0
    %2082 = vmatprep.subr.bf16.mxu0 0
    %2083 = vmatpush2.bf16.msra.mxu0 0
    %2084 = vmatprep.subr.bf16.mxu0 0
    %2085 = vmatpush2.bf16.msra.mxu0 0
    %2086 = vmatprep.mubr.bf16.mxu0 0
    %2087 = vmatmul.mubr.bf16.gmra.mxu0 %v2052
    %v2088 = vpop.f32.mrf.mxu0
    %v2089 = vadd.f32 %v2043, %v2088
    %v2090 = vpop.f32.mrf.mxu0
    %v2091 = vpop.f32.mrf.mxu0
    %v2092 = vpop.f32.mrf.mxu0
    %2093 = vdwg.mxu0
    %v2095 = vcombine.high %v2089, %v2089
    %v2097 = vadd.f32 %v2089, %v1764
    %v2098 = vadd.f32 %v2095, %v1770
    %v2099 = vmax.f32 %v2097, 0.0
    %v2100 = vmax.f32 %v2098, 0.0
    %v2103 = vcombine.low %v2099, %v2100
    %v2105 = vpack.c.bf16 %v2103, %v2103
    %v2107 = vlaneseq
    %v2108 = vshrl.u32 %v2107, 7
    %v2109 = vsub.s32 0, %v2108
    %v2110 = vrot.slane %v371, %v2109
    %v2120 = vunpack.c.l.b16 %v363
    %v2121 = vunpack.c.l.b16 %v364
    %v2122 = vunpack.c.l.b16 %v365
    %v2123 = vunpack.c.l.b16 %v366
    %v2124 = vunpack.c.l.b16 %v367
    %v2125 = vunpack.c.l.b16 %v368
    %v2126 = vunpack.c.l.b16 %v369
    %v2127 = vunpack.c.l.b16 %v370
    %v2128 = vpack.c.b16 %v2121, %v2120
    %v2129 = vpack.c.b16 %v2123, %v2122
    %v2130 = vpack.c.b16 %v2125, %v2124
    %v2131 = vpack.c.b16 %v2127, %v2126
    %v2137 = vsel %vm1311, %v2105, 0
    %2139 = vmatprep.subr.bf16.mxu0 0
    %2140 = vmatpush1.bf16.msra.mxu0 0
    %2141 = vmatprep.subr.bf16.mxu0 0
    %2142 = vmatpush1.bf16.msra.mxu0 0
    %2143 = vmatprep.subr.bf16.mxu0 0
    %2144 = vmatpush1.bf16.msra.mxu0 0
    %2145 = vmatprep.subr.bf16.mxu0 0
    %2146 = vmatpush1.bf16.msra.mxu0 0
    %2147 = vmatprep.subr.bf16.mxu0 0
    %2148 = vmatpush1.bf16.msra.mxu0 %v2131
    %2149 = vmatprep.subr.bf16.mxu0 0
    %2150 = vmatpush1.bf16.msra.mxu0 %v2130
    %2151 = vmatprep.subr.bf16.mxu0 0
    %2152 = vmatpush1.bf16.msra.mxu0 %v2129
    %2153 = vmatprep.subr.bf16.mxu0 0
    %2154 = vmatpush1.bf16.msra.mxu0 %v2128
    %2155 = vmatprep.subr.bf16.mxu0 0
    %2156 = vmatpush2.bf16.msra.mxu0 0
    %2157 = vmatprep.subr.bf16.mxu0 0
    %2158 = vmatpush2.bf16.msra.mxu0 0
    %2159 = vmatprep.subr.bf16.mxu0 0
    %2160 = vmatpush2.bf16.msra.mxu0 0
    %2161 = vmatprep.subr.bf16.mxu0 0
    %2162 = vmatpush2.bf16.msra.mxu0 0
    %2163 = vmatprep.subr.bf16.mxu0 0
    %2164 = vmatpush2.bf16.msra.mxu0 0
    %2165 = vmatprep.subr.bf16.mxu0 0
    %2166 = vmatpush2.bf16.msra.mxu0 0
    %2167 = vmatprep.subr.bf16.mxu0 0
    %2168 = vmatpush2.bf16.msra.mxu0 0
    %2169 = vmatprep.subr.bf16.mxu0 0
    %2170 = vmatpush2.bf16.msra.mxu0 0
    %2171 = vmatprep.mubr.bf16.mxu0 0
    %2172 = vmatmul.mubr.bf16.gmra.mxu0 %v2137
    %v2173 = vpop.f32.mrf.mxu0
    %v2174 = vadd.f32 %v2110, %v2173
    %v2175 = vpop.f32.mrf.mxu0
    %v2176 = vpop.f32.mrf.mxu0
    %v2177 = vpop.f32.mrf.mxu0
    %2178 = vdwg.mxu0
    %v2180 = vcombine.high %v2174, %v2174
    %v2182 = vunpack.c.l.s4 1983009808
    %v2183 = vunpack.c.0.s8 %v2182
    %v2184 = vlaneseq
    %v2185 = vshrl.u32 %v2184, 7
    %v2186 = vsub.s32 %v2183, %v2185
    %v2187 = vrot.slane %v2174, %v2186
    %v2189 = vunpack.c.l.s4 1983009808
    %v2190 = vunpack.c.0.s8 %v2189
    %v2191 = vlaneseq
    %v2192 = vshrl.u32 %v2191, 7
    %v2193 = vsub.s32 %v2190, %v2192
    %v2194 = vrot.slane %v2180, %v2193
    %v2195 = vcombine.high %v2187, %v2187
    %v2196 = vcombine.high %v2194, %v2194
    %v2198 = vlaneseq
    %v2199 = vshrl.u32 %v2198, 7
    %v2200 = vsub.s32 0, %v2199
    %v2201 = vrot.slane %v380, %v2200
    %v2211 = vunpack.c.l.b16 %v372
    %v2212 = vunpack.c.l.b16 %v373
    %v2213 = vunpack.c.l.b16 %v374
    %v2214 = vunpack.c.l.b16 %v375
    %v2215 = vunpack.c.l.b16 %v376
    %v2216 = vunpack.c.l.b16 %v377
    %v2217 = vunpack.c.l.b16 %v378
    %v2218 = vunpack.c.l.b16 %v379
    %v2219 = vpack.c.b16 %v2212, %v2211
    %v2220 = vpack.c.b16 %v2214, %v2213
    %v2221 = vpack.c.b16 %v2216, %v2215
    %v2222 = vpack.c.b16 %v2218, %v2217
    %2227 = vmatprep.subr.bf16.mxu0 0
    %2228 = vmatpush1.bf16.msra.mxu0 0
    %2229 = vmatprep.subr.bf16.mxu0 0
    %2230 = vmatpush1.bf16.msra.mxu0 0
    %2231 = vmatprep.subr.bf16.mxu0 0
    %2232 = vmatpush1.bf16.msra.mxu0 0
    %2233 = vmatprep.subr.bf16.mxu0 0
    %2234 = vmatpush1.bf16.msra.mxu0 0
    %2235 = vmatprep.subr.bf16.mxu0 0
    %2236 = vmatpush1.bf16.msra.mxu0 %v2222
    %2237 = vmatprep.subr.bf16.mxu0 0
    %2238 = vmatpush1.bf16.msra.mxu0 %v2221
    %2239 = vmatprep.subr.bf16.mxu0 0
    %2240 = vmatpush1.bf16.msra.mxu0 %v2220
    %2241 = vmatprep.subr.bf16.mxu0 0
    %2242 = vmatpush1.bf16.msra.mxu0 %v2219
    %2243 = vmatprep.subr.bf16.mxu0 0
    %2244 = vmatpush2.bf16.msra.mxu0 0
    %2245 = vmatprep.subr.bf16.mxu0 0
    %2246 = vmatpush2.bf16.msra.mxu0 0
    %2247 = vmatprep.subr.bf16.mxu0 0
    %2248 = vmatpush2.bf16.msra.mxu0 0
    %2249 = vmatprep.subr.bf16.mxu0 0
    %2250 = vmatpush2.bf16.msra.mxu0 0
    %2251 = vmatprep.subr.bf16.mxu0 0
    %2252 = vmatpush2.bf16.msra.mxu0 0
    %2253 = vmatprep.subr.bf16.mxu0 0
    %2254 = vmatpush2.bf16.msra.mxu0 0
    %2255 = vmatprep.subr.bf16.mxu0 0
    %2256 = vmatpush2.bf16.msra.mxu0 0
    %2257 = vmatprep.subr.bf16.mxu0 0
    %2258 = vmatpush2.bf16.msra.mxu0 0
    %2259 = vmatprep.mubr.bf16.mxu0 0
    %2260 = vmatmul.mubr.bf16.gmra.mxu0 %v2137
    %v2261 = vpop.f32.mrf.mxu0
    %v2262 = vadd.f32 %v2201, %v2261
    %v2263 = vpop.f32.mrf.mxu0
    %v2264 = vpop.f32.mrf.mxu0
    %v2265 = vpop.f32.mrf.mxu0
    %2266 = vdwg.mxu0
    %v2267 = vmax.f32 %v2262, 0.0
    %v2269 = vcombine.high %v2267, %v2267
    %v2270 = vrot.slane %v2267, 7
    %v2271 = vrot.slane %v2269, 7
    %v2274 = vsel %vm1168, 0.0, %v2270
    %v2275 = vsel %vm1168, 0.0, %v2271
    %v2276 = vsel %vm669, %v2274, 0.0
    %v2277 = vsel %vm669, %v2275, 0.0
    %v2280 = vcombine.low %v2276, %v2277
    %v2282 = vpack.c.bf16 %v2280, %v2280
    %v2283 = vcombine.high %v2276, %v2276
    %v2284 = vcombine.high %v2277, %v2277
    %v2285 = vrot.slane %v2276, 5
    %v2286 = vrot.slane %v2285, 4
    %v2287 = vrot.slane %v2283, 5
    %v2288 = vsel %vm1447, %v2286, %v2287
    %v2289 = vrot.slane %v2277, 5
    %v2290 = vrot.slane %v2289, 4
    %v2291 = vrot.slane %v2284, 5
    %v2292 = vsel %vm1447, %v2290, %v2291
    %v2293 = vcombine.low %v2288, %v2292
    %v2295 = vpack.c.bf16 %v2293, %v2293
    %v2300 = vunpack.c.l.b16 %v385
    %v2301 = vunpack.c.l.b16 %v386
    %v2302 = vunpack.c.l.b16 %v387
    %v2303 = vunpack.c.l.b16 %v388
    %v2304 = vpack.c.b16 %v2301, %v2300
    %v2305 = vpack.c.b16 %v2303, %v2302
    %vm2308 = vcmask 261120
    %v2310 = vsel %vm2308, %v2295, 0
    %2312 = vmatprep.subr.bf16.mxu0 0
    %2313 = vmatpush1.bf16.msra.mxu0 0
    %2314 = vmatprep.subr.bf16.mxu0 0
    %2315 = vmatpush1.bf16.msra.mxu0 0
    %2316 = vmatprep.subr.bf16.mxu0 0
    %2317 = vmatpush1.bf16.msra.mxu0 0
    %2318 = vmatprep.subr.bf16.mxu0 0
    %2319 = vmatpush1.bf16.msra.mxu0 0
    %2320 = vmatprep.subr.bf16.mxu0 0
    %2321 = vmatpush1.bf16.msra.mxu0 0
    %2322 = vmatprep.subr.bf16.mxu0 0
    %2323 = vmatpush1.bf16.msra.mxu0 0
    %2324 = vmatprep.subr.bf16.mxu0 0
    %2325 = vmatpush1.bf16.msra.mxu0 %v2305
    %2326 = vmatprep.subr.bf16.mxu0 0
    %2327 = vmatpush1.bf16.msra.mxu0 %v2304
    %2328 = vmatprep.subr.bf16.mxu0 0
    %2329 = vmatpush2.bf16.msra.mxu0 0
    %2330 = vmatprep.subr.bf16.mxu0 0
    %2331 = vmatpush2.bf16.msra.mxu0 0
    %2332 = vmatprep.subr.bf16.mxu0 0
    %2333 = vmatpush2.bf16.msra.mxu0 0
    %2334 = vmatprep.subr.bf16.mxu0 0
    %2335 = vmatpush2.bf16.msra.mxu0 0
    %2336 = vmatprep.subr.bf16.mxu0 0
    %2337 = vmatpush2.bf16.msra.mxu0 0
    %2338 = vmatprep.subr.bf16.mxu0 0
    %2339 = vmatpush2.bf16.msra.mxu0 0
    %2340 = vmatprep.subr.bf16.mxu0 0
    %2341 = vmatpush2.bf16.msra.mxu0 0
    %2342 = vmatprep.subr.bf16.mxu0 0
    %2343 = vmatpush2.bf16.msra.mxu0 0
    %2344 = vmatprep.mubr.bf16.mxu0 0
    %2345 = vmatmul.mubr.bf16.gmra.mxu0 %v2310
    %v2346 = vpop.f32.mrf.mxu0
    %v2347 = vadd.f32 0.0, %v2346
    %v2348 = vpop.f32.mrf.mxu0
    %v2349 = vpop.f32.mrf.mxu0
    %v2350 = vpop.f32.mrf.mxu0
    %2351 = vdwg.mxu0
    %v2356 = vunpack.c.l.b16 %v381
    %v2357 = vunpack.c.l.b16 %v382
    %v2358 = vunpack.c.l.b16 %v383
    %v2359 = vunpack.c.l.b16 %v384
    %v2360 = vpack.c.b16 %v2357, %v2356
    %v2361 = vpack.c.b16 %v2359, %v2358
    %v2365 = vsel %vm2308, %v2282, 0
    %2367 = vmatprep.subr.bf16.mxu0 0
    %2368 = vmatpush1.bf16.msra.mxu0 0
    %2369 = vmatprep.subr.bf16.mxu0 0
    %2370 = vmatpush1.bf16.msra.mxu0 0
    %2371 = vmatprep.subr.bf16.mxu0 0
    %2372 = vmatpush1.bf16.msra.mxu0 0
    %2373 = vmatprep.subr.bf16.mxu0 0
    %2374 = vmatpush1.bf16.msra.mxu0 0
    %2375 = vmatprep.subr.bf16.mxu0 0
    %2376 = vmatpush1.bf16.msra.mxu0 0
    %2377 = vmatprep.subr.bf16.mxu0 0
    %2378 = vmatpush1.bf16.msra.mxu0 0
    %2379 = vmatprep.subr.bf16.mxu0 0
    %2380 = vmatpush1.bf16.msra.mxu0 %v2361
    %2381 = vmatprep.subr.bf16.mxu0 0
    %2382 = vmatpush1.bf16.msra.mxu0 %v2360
    %2383 = vmatprep.subr.bf16.mxu0 0
    %2384 = vmatpush2.bf16.msra.mxu0 0
    %2385 = vmatprep.subr.bf16.mxu0 0
    %2386 = vmatpush2.bf16.msra.mxu0 0
    %2387 = vmatprep.subr.bf16.mxu0 0
    %2388 = vmatpush2.bf16.msra.mxu0 0
    %2389 = vmatprep.subr.bf16.mxu0 0
    %2390 = vmatpush2.bf16.msra.mxu0 0
    %2391 = vmatprep.subr.bf16.mxu0 0
    %2392 = vmatpush2.bf16.msra.mxu0 0
    %2393 = vmatprep.subr.bf16.mxu0 0
    %2394 = vmatpush2.bf16.msra.mxu0 0
    %2395 = vmatprep.subr.bf16.mxu0 0
    %2396 = vmatpush2.bf16.msra.mxu0 0
    %2397 = vmatprep.subr.bf16.mxu0 0
    %2398 = vmatpush2.bf16.msra.mxu0 0
    %2399 = vmatprep.mubr.bf16.mxu0 0
    %2400 = vmatmul.mubr.bf16.gmra.mxu0 %v2365
    %v2401 = vpop.f32.mrf.mxu0
    %v2402 = vadd.f32 %v2347, %v2401
    %v2403 = vpop.f32.mrf.mxu0
    %v2404 = vpop.f32.mrf.mxu0
    %v2405 = vpop.f32.mrf.mxu0
    %2406 = vdwg.mxu0
    %v2407 = vrot.slane %v2276, 6
    %v2408 = vrot.slane %v2407, 4
    %v2409 = vrot.slane %v2283, 6
    %v2410 = vsel %vm1558, %v2408, %v2409
    %v2411 = vrot.slane %v2277, 6
    %v2412 = vrot.slane %v2411, 4
    %v2413 = vrot.slane %v2284, 6
    %v2414 = vsel %vm1558, %v2412, %v2413
    %v2415 = vcombine.low %v2410, %v2414
    %v2417 = vpack.c.bf16 %v2415, %v2415
    %v2422 = vunpack.c.l.b16 %v389
    %v2423 = vunpack.c.l.b16 %v390
    %v2424 = vunpack.c.l.b16 %v391
    %v2425 = vunpack.c.l.b16 %v392
    %v2426 = vpack.c.b16 %v2423, %v2422
    %v2427 = vpack.c.b16 %v2425, %v2424
    %v2431 = vsel %vm2308, %v2417, 0
    %2433 = vmatprep.subr.bf16.mxu0 0
    %2434 = vmatpush1.bf16.msra.mxu0 0
    %2435 = vmatprep.subr.bf16.mxu0 0
    %2436 = vmatpush1.bf16.msra.mxu0 0
    %2437 = vmatprep.subr.bf16.mxu0 0
    %2438 = vmatpush1.bf16.msra.mxu0 0
    %2439 = vmatprep.subr.bf16.mxu0 0
    %2440 = vmatpush1.bf16.msra.mxu0 0
    %2441 = vmatprep.subr.bf16.mxu0 0
    %2442 = vmatpush1.bf16.msra.mxu0 0
    %2443 = vmatprep.subr.bf16.mxu0 0
    %2444 = vmatpush1.bf16.msra.mxu0 0
    %2445 = vmatprep.subr.bf16.mxu0 0
    %2446 = vmatpush1.bf16.msra.mxu0 %v2427
    %2447 = vmatprep.subr.bf16.mxu0 0
    %2448 = vmatpush1.bf16.msra.mxu0 %v2426
    %2449 = vmatprep.subr.bf16.mxu0 0
    %2450 = vmatpush2.bf16.msra.mxu0 0
    %2451 = vmatprep.subr.bf16.mxu0 0
    %2452 = vmatpush2.bf16.msra.mxu0 0
    %2453 = vmatprep.subr.bf16.mxu0 0
    %2454 = vmatpush2.bf16.msra.mxu0 0
    %2455 = vmatprep.subr.bf16.mxu0 0
    %2456 = vmatpush2.bf16.msra.mxu0 0
    %2457 = vmatprep.subr.bf16.mxu0 0
    %2458 = vmatpush2.bf16.msra.mxu0 0
    %2459 = vmatprep.subr.bf16.mxu0 0
    %2460 = vmatpush2.bf16.msra.mxu0 0
    %2461 = vmatprep.subr.bf16.mxu0 0
    %2462 = vmatpush2.bf16.msra.mxu0 0
    %2463 = vmatprep.subr.bf16.mxu0 0
    %2464 = vmatpush2.bf16.msra.mxu0 0
    %2465 = vmatprep.mubr.bf16.mxu0 0
    %2466 = vmatmul.mubr.bf16.gmra.mxu0 %v2431
    %v2467 = vpop.f32.mrf.mxu0
    %v2468 = vadd.f32 0.0, %v2467
    %v2469 = vpop.f32.mrf.mxu0
    %v2470 = vpop.f32.mrf.mxu0
    %v2471 = vpop.f32.mrf.mxu0
    %2472 = vdwg.mxu0
    %v2473 = vadd.f32 %v2402, %v2468
    %v2475 = vlaneseq
    %v2476 = vshrl.u32 %v2475, 7
    %v2477 = vsub.s32 0, %v2476
    %v2478 = vrot.slane %v393, %v2477
    %v2480 = vadd.f32 %v2473, %v2478
    %v2481 = vmax.f32 %v2480, 0.0
    %v2483 = vcombine.high %v2481, %v2481
    %v2485 = vunpack.c.l.s4 1983009808
    %v2486 = vunpack.c.0.s8 %v2485
    %v2487 = vlaneseq
    %v2488 = vshrl.u32 %v2487, 7
    %v2489 = vsub.s32 %v2486, %v2488
    %v2490 = vrot.slane %v2481, %v2489
    %v2492 = vunpack.c.l.s4 1983009808
    %v2493 = vunpack.c.0.s8 %v2492
    %v2494 = vlaneseq
    %v2495 = vshrl.u32 %v2494, 7
    %v2496 = vsub.s32 %v2493, %v2495
    %v2497 = vrot.slane %v2483, %v2496
    %v2498 = vcombine.high %v2490, %v2490
    %v2499 = vcombine.high %v2497, %v2497
    %v2504 = vpack.c.bf16 %v2490, %v2490
    %v2505 = vpack.c.bf16 %v2498, %v2498
    %v2506 = vpack.c.bf16 %v2497, %v2497
    %v2507 = vpack.c.bf16 %v2499, %v2499
    %v2509 = vlaneseq
    %v2510 = vshrl.u32 %v2509, 7
    %v2511 = vsub.s32 0, %v2510
    %v2512 = vrot.slane %v398, %v2511
    %v2518 = vunpack.c.l.b16 %v2504
    %v2519 = vunpack.c.l.b16 %v2505
    %v2520 = vunpack.c.l.b16 %v2506
    %v2521 = vunpack.c.l.b16 %v2507
    %v2522 = vrot.slane %v2519, 7
    %v2523 = vsel %vm1272, %v2522, %v2518
    %v2524 = vrot.slane %v2520, 6
    %v2525 = vsel %vm1146, %v2524, %v2523
    %v2526 = vrot.slane %v2521, 5
    %v2527 = vsel %vm1148, %v2526, %v2525
    %v2528 = vpack.c.b16 %v2527, %v2527
    %v2533 = vunpack.c.l.b16 %v394
    %v2534 = vunpack.c.l.b16 %v395
    %v2535 = vunpack.c.l.b16 %v396
    %v2536 = vunpack.c.l.b16 %v397
    %v2537 = vpack.c.b16 %v2534, %v2533
    %v2538 = vpack.c.b16 %v2536, %v2535
    %v2542 = vsel %vm2308, %v2528, 0
    %2544 = vmatprep.subr.bf16.mxu0 0
    %2545 = vmatpush1.bf16.msra.mxu0 0
    %2546 = vmatprep.subr.bf16.mxu0 0
    %2547 = vmatpush1.bf16.msra.mxu0 0
    %2548 = vmatprep.subr.bf16.mxu0 0
    %2549 = vmatpush1.bf16.msra.mxu0 0
    %2550 = vmatprep.subr.bf16.mxu0 0
    %2551 = vmatpush1.bf16.msra.mxu0 0
    %2552 = vmatprep.subr.bf16.mxu0 0
    %2553 = vmatpush1.bf16.msra.mxu0 0
    %2554 = vmatprep.subr.bf16.mxu0 0
    %2555 = vmatpush1.bf16.msra.mxu0 0
    %2556 = vmatprep.subr.bf16.mxu0 0
    %2557 = vmatpush1.bf16.msra.mxu0 %v2538
    %2558 = vmatprep.subr.bf16.mxu0 0
    %2559 = vmatpush1.bf16.msra.mxu0 %v2537
    %2560 = vmatprep.subr.bf16.mxu0 0
    %2561 = vmatpush2.bf16.msra.mxu0 0
    %2562 = vmatprep.subr.bf16.mxu0 0
    %2563 = vmatpush2.bf16.msra.mxu0 0
    %2564 = vmatprep.subr.bf16.mxu0 0
    %2565 = vmatpush2.bf16.msra.mxu0 0
    %2566 = vmatprep.subr.bf16.mxu0 0
    %2567 = vmatpush2.bf16.msra.mxu0 0
    %2568 = vmatprep.subr.bf16.mxu0 0
    %2569 = vmatpush2.bf16.msra.mxu0 0
    %2570 = vmatprep.subr.bf16.mxu0 0
    %2571 = vmatpush2.bf16.msra.mxu0 0
    %2572 = vmatprep.subr.bf16.mxu0 0
    %2573 = vmatpush2.bf16.msra.mxu0 0
    %2574 = vmatprep.subr.bf16.mxu0 0
    %2575 = vmatpush2.bf16.msra.mxu0 0
    %2576 = vmatprep.mubr.bf16.mxu0 0
    %2577 = vmatmul.mubr.bf16.gmra.mxu0 %v2542
    %v2578 = vpop.f32.mrf.mxu0
    %v2579 = vadd.f32 %v2512, %v2578
    %v2580 = vpop.f32.mrf.mxu0
    %v2581 = vpop.f32.mrf.mxu0
    %v2582 = vpop.f32.mrf.mxu0
    %2583 = vdwg.mxu0
    %v2586 = vunpack.c.l.s4 1983009808
    %v2587 = vunpack.c.0.s8 %v2586
    %v2588 = vlaneseq
    %v2589 = vshrl.u32 %v2588, 7
    %v2590 = vsub.s32 %v2587, %v2589
    %v2591 = vrot.slane %v2579, %v2590
    %v2592 = vcombine.high %v2591, %v2591
    %v2595 = vsel %vm1150, %v2187, %v2187
    %v2596 = vsel %vm1154, %v2187, %v2595
    %v2597 = vrot.slane %v2195, 7
    %v2598 = vsel %vm1272, %v2597, %v2596
    %v2599 = vsel %vm1148, %v2597, %v2598
    %v2600 = vsel %vm1152, %v2597, %v2599
    %v2601 = vsel %vm1156, %v2597, %v2600
    %v2602 = vsel %vm1150, %v2194, %v2194
    %v2603 = vsel %vm1154, %v2194, %v2602
    %v2604 = vrot.slane %v2196, 7
    %v2605 = vsel %vm1272, %v2604, %v2603
    %v2606 = vsel %vm1148, %v2604, %v2605
    %v2607 = vsel %vm1152, %v2604, %v2606
    %v2608 = vsel %vm1156, %v2604, %v2607
    %v2611 = vadd.f32 %v2591, %v2601
    %v2612 = vadd.f32 %v2592, %v2608
    %v2613 = vmax.f32 %v2611, 0.0
    %v2614 = vmax.f32 %v2612, 0.0
    %v2615 = vsel %vm914, %v2613, 0.0
    %v2616 = vrot.slane %v2615, 4
    %v2617 = vadd.f32 %v2615, %v2616
    %v2618 = vrot.slane %v2617, 2
    %v2619 = vadd.f32 %v2617, %v2618
    %v2620 = vrot.slane %v2619, 1
    %v2621 = vadd.f32 %v2619, %v2620
    %v2622 = vsel %vm914, %v2614, 0.0
    %v2623 = vrot.slane %v2622, 4
    %v2624 = vadd.f32 %v2622, %v2623
    %v2625 = vrot.slane %v2624, 2
    %v2626 = vadd.f32 %v2624, %v2625
    %v2627 = vrot.slane %v2626, 1
    %v2628 = vadd.f32 %v2626, %v2627
    %v2629 = vrcp.pop 2.0
    %v2630 = vmul.f32 %v2621, %v2629
    %v2631 = vmul.f32 %v2628, %v2629
    %v2633 = vlaneseq
    %v2634 = vshrl.u32 %v2633, 7
    %v2635 = vsub.s32 0, %v2634
    %v2636 = vrot.slane %v415, %v2635
    %v2640 = vsel %vm1272, %v2631, %v2630
    %2642 = vmatprep.subr.mxu0 0.0
    %2643 = vmatpush1.msra.mxu0 %v414
    %2644 = vmatprep.subr.mxu0 0.0
    %2645 = vmatpush1.msra.mxu0 %v413
    %2646 = vmatprep.subr.mxu0 0.0
    %2647 = vmatpush1.msra.mxu0 %v412
    %2648 = vmatprep.subr.mxu0 0.0
    %2649 = vmatpush1.msra.mxu0 %v411
    %2650 = vmatprep.subr.mxu0 0.0
    %2651 = vmatpush1.msra.mxu0 %v410
    %2652 = vmatprep.subr.mxu0 0.0
    %2653 = vmatpush1.msra.mxu0 %v409
    %2654 = vmatprep.subr.mxu0 0.0
    %2655 = vmatpush1.msra.mxu0 %v408
    %2656 = vmatprep.subr.mxu0 0.0
    %2657 = vmatpush1.msra.mxu0 %v407
    %2658 = vmatprep.subr.mxu0 0.0
    %2659 = vmatpush1.msra.mxu0 %v406
    %2660 = vmatprep.subr.mxu0 0.0
    %2661 = vmatpush1.msra.mxu0 %v405
    %2662 = vmatprep.subr.mxu0 0.0
    %2663 = vmatpush1.msra.mxu0 %v404
    %2664 = vmatprep.subr.mxu0 0.0
    %2665 = vmatpush1.msra.mxu0 %v403
    %2666 = vmatprep.subr.mxu0 0.0
    %2667 = vmatpush1.msra.mxu0 %v402
    %2668 = vmatprep.subr.mxu0 0.0
    %2669 = vmatpush1.msra.mxu0 %v401
    %2670 = vmatprep.subr.mxu0 0.0
    %2671 = vmatpush1.msra.mxu0 %v400
    %2672 = vmatprep.subr.mxu0 0.0
    %2673 = vmatpush1.msra.mxu0 %v399
    %2674 = vmatprep.subr.mxu0 0.0
    %2675 = vmatpush2.msra.mxu0 0.0
    %2676 = vmatprep.subr.mxu0 0.0
    %2677 = vmatpush2.msra.mxu0 0.0
    %2678 = vmatprep.subr.mxu0 0.0
    %2679 = vmatpush2.msra.mxu0 0.0
    %2680 = vmatprep.subr.mxu0 0.0
    %2681 = vmatpush2.msra.mxu0 0.0
    %2682 = vmatprep.subr.mxu0 0.0
    %2683 = vmatpush2.msra.mxu0 0.0
    %2684 = vmatprep.subr.mxu0 0.0
    %2685 = vmatpush2.msra.mxu0 0.0
    %2686 = vmatprep.subr.mxu0 0.0
    %2687 = vmatpush2.msra.mxu0 0.0
    %2688 = vmatprep.subr.mxu0 0.0
    %2689 = vmatpush2.msra.mxu0 0.0
    %2690 = vmatprep.subr.mxu0 0.0
    %2691 = vmatpush2.msra.mxu0 0.0
    %2692 = vmatprep.subr.mxu0 0.0
    %2693 = vmatpush2.msra.mxu0 0.0
    %2694 = vmatprep.subr.mxu0 0.0
    %2695 = vmatpush2.msra.mxu0 0.0
    %2696 = vmatprep.subr.mxu0 0.0
    %2697 = vmatpush2.msra.mxu0 0.0
    %2698 = vmatprep.subr.mxu0 0.0
    %2699 = vmatpush2.msra.mxu0 0.0
    %2700 = vmatprep.subr.mxu0 0.0
    %2701 = vmatpush2.msra.mxu0 0.0
    %2702 = vmatprep.subr.mxu0 0.0
    %2703 = vmatpush2.msra.mxu0 0.0
    %2704 = vmatprep.subr.mxu0 0.0
    %2705 = vmatpush2.msra.mxu0 0.0
    %2706 = vmatprep.mubr.f32.mxu0 0.0
    %2707 = vmatmul.mubr.f32.gmra.mxu0 %v2640
    %v2708 = vpop.f32.mrf.mxu0
    %v2709 = vadd.f32 %v2636, %v2708
    %v2710 = vpop.f32.mrf.mxu0
    %2711 = vdwg.mxu0
    %vm2712 = vcmask 33792
    %2713 = vst.msk [vmem:[#allocation25] sm:$0x3] %vm2712, %v2709
    // Predicated region
    $region174: #{tpu_custom_call.1} parent=1 // pred_check
      _
    $region175: #{tpu_custom_call.1} parent=1 // pred_check_branch
      %2715 = sbr.rel (0) target = $region177
    $region176: #{tpu_custom_call.1} parent=1 // pred_region
      %s2717 = ssub.s32 32, 32
      %2718 = vsyncadd [#allocation4], %s2717
      %s2720 = sshll.u32 [#allocation25], 4
      %s2721 = int_to_ptr.vmem [resolvable:$true] %s2720
      %2723 = dma.vmem_to_hbm [thread:$0]  %s2721, 32, %s59, [#allocation4]
    $region177: #{tpu_custom_call.1} parent=1 // pred_fallthru
      _
    // Predicated region
    $region178: #{tpu_custom_call.1} parent=1 // pred_check
      _
    $region179: #{tpu_custom_call.1} parent=1 // pred_check_branch
      %2725 = sbr.rel (0) target = $region181
    $region180: #{tpu_custom_call.1} parent=1 // pred_region
      %2726 = dma.done [#allocation4], 32
    $region181: #{tpu_custom_call.1} parent=1 // pred_fallthru
      _
    %2727 = vsyncpa [#allocation3], 1
    %2728 = vsyncpa [#allocation6], 1
    %2729 = vsyncpa [#allocation9], 1
    %2730 = vsyncpa [#allocation12], 1
    %2731 = vsyncpa [#allocation15], 1
    %2732 = vsyncpa [#allocation18], 1
    %2733 = vsyncpa [#allocation21], 1
    %2734 = vsyncpa [#allocation24], 1
    %2735 = vsyncpa [#allocation4], 1

</llo_original>
